<compile_context>
chip_gen: v7x
topology: tpu7x:2x2x1
jax: 0.10.0
libtpu: 0.0.40
codegen_flags: <defaults>
</compile_context>

<pallas_src>
import functools
import math

import jax
import jax.numpy as jnp
from jax.experimental import pallas as pl
from jax.experimental.pallas import tpu as pltpu


# ----------------------------------------------------------------------------
# Block-size helper
# ----------------------------------------------------------------------------
def _pick_block(n, cap=128):
    """Largest divisor of n that is a multiple of 8, <= cap, and (preferably) leaves
    >= 2 grid blocks so both v7x TensorCores get work; else fall back to a full block."""
    single = None
    for d in range(min(cap, n), 7, -1):
        if n % d == 0 and d % 8 == 0:
            if n // d >= 2:
                return d
            if single is None:
                single = d
    return single if single is not None else n


# ----------------------------------------------------------------------------
# Kernel 1: fused section encoder (filterbank + 2-layer bi-LSTM + soft attention)
# ----------------------------------------------------------------------------
def _section_encoder_kernel(x_ref, w0m_ref, w0l_ref, b0_ref, whh0_ref,
                            w1_ref, b1_ref, whh1_ref,
                            attw_ref, attb_ref, attu_ref, o_ref, *, T):
    f32, bf16 = jnp.float32, jnp.bfloat16
    SB, TF = x_ref.shape
    F = TF // T
    H2 = whh0_ref.shape[0]          # 2 * hidden (lane-packed [fw | bw] state)
    H = H2 // 2
    G = 4 * H2                      # packed gate width: [i | f | o | g], each 2H wide

    # Lane masks: within every 2H block, lanes [0,H) belong to the forward direction.
    col_g = jax.lax.broadcasted_iota(jnp.int32, (SB, G), 1)
    fw_g = (col_g % H2) < H                                   # (SB, G)  bool
    col_h = jax.lax.broadcasted_iota(jnp.int32, (SB, H2), 1)
    fw_h = col_h < H                                          # (SB, H2) bool

    x = x_ref[...]                                            # (SB, T*F) f32
    w0m = w0m_ref[...]                                        # (128, G) bf16
    w0l = w0l_ref[...]                                        # (1, G)   f32
    b0 = b0_ref[...]                                          # (1, G)   f32
    whh0 = whh0_ref[...]                                      # (H2, G)  bf16
    w1 = w1_ref[...]                                          # (H2, G)  bf16
    b1 = b1_ref[...]                                          # (1, G)   f32
    whh1 = whh1_ref[...]                                      # (H2, G)  bf16

    # ---- layer-0 input projections per time step (K=129 split: 128-wide MXU + rank-1) ----
    KM = min(128, F)
    xp0 = []
    for s in range(T):
        xs = x[:, s * F:(s + 1) * F]                          # (SB, F)
        p = jnp.dot(xs[:, :KM].astype(bf16), w0m, preferred_element_type=f32)
        if F > KM:                                            # rank-1 update for bin 128
            p = p + xs[:, KM:KM + 1] * w0l
        xp0.append(p + b0)                                    # (SB, G) f32

    # ---- fused fw/bw bi-LSTM layer (statically unrolled; T is tiny) ----
    def bilstm(xp, whh):
        h = jnp.zeros((SB, H2), f32)
        c = jnp.zeros((SB, H2), f32)
        hs = [None] * T
        for s in range(T):
            # fw lanes read time s, bw lanes read time T-1-s (no per-step concatenates)
            gx = jnp.where(fw_g, xp[s], xp[T - 1 - s])        # (SB, G)
            if s > 0:
                gx = gx + jnp.dot(h.astype(bf16), whh, preferred_element_type=f32)
            sig = jax.nn.sigmoid(gx[:, :3 * H2])              # i | f | o  (one 6H-wide slab)
            g_t = jnp.tanh(gx[:, 3 * H2:])                    # g          (one 2H-wide slab)
            c = sig[:, H2:2 * H2] * c + sig[:, :H2] * g_t
            h = sig[:, 2 * H2:3 * H2] * jnp.tanh(c)
            hs[s] = h                                         # [h_fw(s) | h_bw(T-1-s)]
        # recombine to per-time outputs [h_fw(t) | h_bw(t)] with a single lane select
        return [jnp.where(fw_h, hs[t], hs[T - 1 - t]) for t in range(T)]

    out0 = bilstm(xp0, whh0)
    # layer-1 input projection (inter-layer dropout is identity at inference time)
    xp1 = [jnp.dot(o.astype(bf16), w1, preferred_element_type=f32) + b1 for o in out0]
    out1 = bilstm(xp1, whh1)

    # ---- soft attention pooled over time ----
    # TODO(synk): AttentionLayer source not provided; standard tanh-projection additive
    #             attention used as a placeholder.
    attw = attw_ref[...]                                      # (H2, 128) bf16
    attb = attb_ref[...]                                      # (1, 128)  f32
    attu = attu_ref[...]                                      # (1, 128)  f32
    scores = []
    for t in range(T):
        v = jnp.tanh(jnp.dot(out1[t].astype(bf16), attw, preferred_element_type=f32) + attb)
        scores.append(jnp.sum(v * attu, axis=-1, keepdims=True))   # (SB, 1)
    m = scores[0]
    for t in range(1, T):
        m = jnp.maximum(m, scores[t])
    num = jnp.zeros((SB, H2), f32)
    den = jnp.zeros((SB, 1), f32)
    for t in range(T):
        e = jnp.exp(scores[t] - m)
        den = den + e
        num = num + e * out1[t]
    o_ref[...] = num * pl.reciprocal(den, approx=True)        # (SB, 2H)


def section_encoder_fused(x2d, T, w0m, w0l, b0, whh0, w1, b1, whh1, attw, attb, attu):
    """x2d: (B_sections, T*F) batch-major (contiguous).  Returns (B_sections, 2H)."""
    B, TF = x2d.shape
    H2 = whh0.shape[0]
    SB = _pick_block(B, cap=128)        # >=2 blocks when possible (v7x), small for vreg pressure
    grid = (B // SB,)

    def rep(a):                         # replicated (weight) operand: fetched once
        nd = a.ndim
        return pl.BlockSpec(a.shape, lambda i, _nd=nd: (0,) * _nd)

    kernel = functools.partial(_section_encoder_kernel, T=T)
    return pl.pallas_call(
        kernel,
        grid=grid,
        in_specs=[
            pl.BlockSpec((SB, TF), lambda i: (i, 0)),
            rep(w0m), rep(w0l), rep(b0), rep(whh0),
            rep(w1), rep(b1), rep(whh1),
            rep(attw), rep(attb), rep(attu),
        ],
        out_specs=pl.BlockSpec((SB, H2), lambda i: (i, 0)),
        out_shape=jax.ShapeDtypeStruct((B, H2), jnp.float32),
        compiler_params=pltpu.CompilerParams(
            dimension_semantics=("parallel",),
            vmem_limit_bytes=32 * 1024 * 1024),
    )(x2d, w0m, w0l, b0, whh0, w1, b1, whh1, attw, attb, attu)


# ----------------------------------------------------------------------------
# Kernel 2: fused hard attention selection + prototype argmin
# ----------------------------------------------------------------------------
def _hard_attn_proto_kernel(x_ref, pe_ref, wq_ref, wk_ref, g_ref, pt_ref, p2_ref,
                            sel_ref, idx_ref, pidx_ref, *, temperature):
    f32, bf16 = jnp.float32, jnp.bfloat16
    BSB, S, Hh = x_ref.shape
    N = g_ref.shape[0]
    NA = wq_ref.shape[1]
    A = NA // N
    P = pt_ref.shape[1]

    x = x_ref[...]                                            # (BSB, S, H) f32 (pre-PE; selection uses this)
    x_pe = x + pe_ref[...][None]                              # positional encoding (Q/K only)

    # Q projection for every section; K collapsed: sum_t K_t = (sum_t x_pe_t) @ Wk
    q = jnp.dot(x_pe.reshape(BSB * S, Hh).astype(bf16), wq_ref[...],
                preferred_element_type=f32).reshape(BSB, S, NA)
    ksum = jnp.dot(jnp.sum(x_pe, axis=1).astype(bf16), wk_ref[...],
                   preferred_element_type=f32)                # (BSB, NA)
    prod = q * ksum[:, None, :]                               # (BSB, S, NA)

    # Reference: att = QK^T / sqrt(hidden); logits = sum(att, -1) / section_num
    #          == q . (sum_t k_t) / (sqrt(hidden) * section_num)
    scale = 1.0 / (math.sqrt(Hh) * S)
    inv_t = 1.0 / temperature
    iota_s = jax.lax.broadcasted_iota(jnp.int32, (BSB, S), 1)
    iota_p = jax.lax.broadcasted_iota(jnp.int32, (BSB, P), 1)

    sel_cols, idx_cols, pidx_cols = [], [], []
    for n in range(N):                                        # N is tiny and static
        logits = jnp.sum(prod[:, :, n * A:(n + 1) * A], axis=-1) * scale   # (BSB, S)
        noisy = (logits + g_ref[n]) * inv_t
        m = jnp.max(noisy, axis=-1, keepdims=True)
        idx_n = jnp.min(jnp.where(noisy >= m, iota_s, S),
                        axis=-1, keepdims=True)               # first argmax (hard gumbel)
        one_hot = (iota_s == idx_n).astype(f32)               # (BSB, S)
        sel_n = jnp.sum(one_hot[:, :, None] * x, axis=1)      # (BSB, H) == einsum('bs,bsh->bh')

        # Prototype matching: argmin_p (|p|^2 - 2 x.p); |x|^2 is constant per row.
        d = p2_ref[...] - 2.0 * jnp.dot(sel_n.astype(bf16), pt_ref[...],
                                        preferred_element_type=f32)        # (BSB, P)
        dm = jnp.min(d, axis=-1, keepdims=True)
        pidx_n = jnp.min(jnp.where(d <= dm, iota_p, P), axis=-1, keepdims=True)

        sel_cols.append(sel_n[:, None, :])
        idx_cols.append(idx_n)
        pidx_cols.append(pidx_n)

    sel_ref[...] = jnp.concatenate(sel_cols, axis=1)                      # (BSB, N, H)
    idx_ref[...] = jnp.concatenate(idx_cols, axis=1).astype(jnp.int32)    # (BSB, N)
    pidx_ref[...] = jnp.concatenate(pidx_cols, axis=1).astype(jnp.int32)  # (BSB, N)


def hard_attn_proto_fused(x, pe, wq, wk, gumbel, protos_t, p2, *, temperature):
    BS, S, Hh = x.shape
    N = gumbel.shape[0]
    BSB = _pick_block(BS, cap=256)
    grid = (BS // BSB,)

    def rep(a):
        nd = a.ndim
        return pl.BlockSpec(a.shape, lambda i, _nd=nd: (0,) * _nd)

    kernel = functools.partial(_hard_attn_proto_kernel, temperature=float(temperature))
    return pl.pallas_call(
        kernel,
        grid=grid,
        in_specs=[
            pl.BlockSpec((BSB, S, Hh), lambda i: (i, 0, 0)),
            rep(pe), rep(wq), rep(wk),
            pl.BlockSpec((N, BSB, S), lambda i: (0, i, 0)),
            rep(protos_t), rep(p2),
        ],
        out_specs=(
            pl.BlockSpec((BSB, N, Hh), lambda i: (i, 0, 0)),
            pl.BlockSpec((BSB, N), lambda i: (i, 0)),
            pl.BlockSpec((BSB, N), lambda i: (i, 0)),
        ),
        out_shape=(
            jax.ShapeDtypeStruct((BS, N, Hh), jnp.float32),
            jax.ShapeDtypeStruct((BS, N), jnp.int32),
            jax.ShapeDtypeStruct((BS, N), jnp.int32),
        ),
        compiler_params=pltpu.CompilerParams(
            dimension_semantics=("parallel",),
            vmem_limit_bytes=32 * 1024 * 1024),
    )(x, pe, wq, wk, gumbel, protos_t, p2)


# ----------------------------------------------------------------------------
# Plain-JAX glue (weight repacking, PE table, gather, loss) — constant-folded / tiny
# ----------------------------------------------------------------------------
def positional_encoding(max_len, hidden):
    position = jnp.arange(max_len, dtype=jnp.float32)[:, None]
    div_term = jnp.exp(
        jnp.arange(0, hidden, 2, dtype=jnp.float32) * (-math.log(10000.0) / hidden)
    )
    pe = jnp.zeros((max_len, hidden), dtype=jnp.float32)
    pe = pe.at[:, 0::2].set(jnp.sin(position * div_term))
    pe = pe.at[:, 1::2].set(jnp.cos(position * div_term))
    return pe[None]  # (1, max_len, hidden)


def _pack_gate_cols(fw, bw, H):
    """(.., 4H) per-direction weights/biases with PyTorch gate cols [i,f,g,o] ->
    (.., 8H) lane-packed [i_f,i_b | f_f,f_b | o_f,o_b | g_f,g_b]."""
    def g(w, k):
        return w[..., k * H:(k + 1) * H]
    return jnp.concatenate([g(fw, 0), g(bw, 0), g(fw, 1), g(bw, 1),
                            g(fw, 3), g(bw, 3), g(fw, 2), g(bw, 2)], axis=-1)


def _pack_whh(fw, bw, H):
    """Block-diagonal recurrence matrix (2H, 8H) in the packed gate layout."""
    z = jnp.zeros((H, H), jnp.float32)
    def g(w, k):
        return w[:, k * H:(k + 1) * H]
    top = jnp.concatenate([g(fw, 0), z, g(fw, 1), z, g(fw, 3), z, g(fw, 2), z], axis=1)
    bot = jnp.concatenate([z, g(bw, 0), z, g(bw, 1), z, g(bw, 3), z, g(bw, 2)], axis=1)
    return jnp.concatenate([top, bot], axis=0)


def epoch_encoder_forward(params, x, gumbel_key, N, temperature=1.0, commitment_cost=0.25):
    batch, seq, n_chan, tot_sections, section_length, n_fbins = x.shape
    B_sec = batch * seq * n_chan * tot_sections
    T = section_length
    H = params["lstm"][0]["fw"]["w_hh"].shape[0]
    bf16 = jnp.bfloat16

    # ---- fuse / repack weights once (constant-folded under jit) ----
    # TODO(synk): LearnableFilterbank internals not in the reference; implemented as a
    #             sigmoid-constrained linear filterbank 129 -> 32, folded into layer-0 w_ih.
    fb = jax.nn.sigmoid(params["fb_w"])                                         # (129, 32)
    l0, l1 = params["lstm"]
    w0_full = _pack_gate_cols(fb @ l0["fw"]["w_ih"], fb @ l0["bw"]["w_ih"], H)  # (129, 8H)
    w0m = w0_full[:128].astype(bf16)                                            # (128, 8H)
    w0l = w0_full[128:]                                                         # (1, 8H) f32
    b0 = _pack_gate_cols((l0["fw"]["b_ih"] + l0["fw"]["b_hh"])[None, :],
                         (l0["bw"]["b_ih"] + l0["bw"]["b_hh"])[None, :], H)
    whh0 = _pack_whh(l0["fw"]["w_hh"], l0["bw"]["w_hh"], H).astype(bf16)
    w1 = _pack_gate_cols(l1["fw"]["w_ih"], l1["bw"]["w_ih"], H).astype(bf16)
    b1 = _pack_gate_cols((l1["fw"]["b_ih"] + l1["fw"]["b_hh"])[None, :],
                         (l1["bw"]["b_ih"] + l1["bw"]["b_hh"])[None, :], H)
    whh1 = _pack_whh(l1["fw"]["w_hh"], l1["bw"]["w_hh"], H).astype(bf16)
    attw = params["att_W"].astype(bf16)
    attb = params["att_b"][None, :]
    attu = params["att_u"][None, :]

    # ---- kernel 1: fused section encoder (batch-major, free reshape, no HBM transpose) ----
    x2d = x.reshape(B_sec, T * n_fbins)
    feats = section_encoder_fused(x2d, T, w0m, w0l, b0, whh0, w1, b1, whh1,
                                  attw, attb, attu)                             # (B_sec, 64)
    out_size = feats.shape[-1]

    # ---- kernel 2: hard attention selection + prototype argmin ----
    BS = batch * seq
    S = tot_sections * n_chan
    feats3 = feats.reshape(BS, S, out_size)
    pe = positional_encoding(100, out_size)[0, :S]                              # (S, 64)
    wq = params["hq"].astype(bf16)
    wk = params["hk"].astype(bf16)
    gumbel = jax.random.gumbel(gumbel_key, (N, BS, S), dtype=jnp.float32)
    protos = params["prototypes"]                                               # (P, 64)
    protos_t = protos.T.astype(bf16)                                            # (64, P)
    p2 = jnp.sum(protos * protos, axis=1)[None, :]                              # (1, P)

    sel, indexes, pidx = hard_attn_proto_fused(
        feats3, pe, wq, wk, gumbel, protos_t, p2, temperature=temperature)

    # ---- prototype lookup as a gather + straight-through + loss (tiny, plain JAX) ----
    xN = sel.reshape(batch, seq, N, out_size)
    proto = jnp.take(protos, pidx.reshape(-1), axis=0).reshape(batch, seq, N, out_size)
    e_latent = jnp.mean((jax.lax.stop_gradient(proto) - xN) ** 2)
    q_latent = jnp.mean((proto - jax.lax.stop_gradient(xN)) ** 2)
    loss = q_latent + commitment_cost * e_latent
    proto_st = xN + jax.lax.stop_gradient(proto - xN)    # forward value == proto
    residual = xN - proto_st
    return proto_st, residual, loss, indexes


# ----------------------------------------------------------------------------
# Deterministic parameter initialization (synthetic; shapes from the module __init__)
# ----------------------------------------------------------------------------
def init_params(key, attention_size=16, N=2, n_prototypes=8):
    keys = jax.random.split(key, 24)

    def nrm(k, shape, scale=0.1):
        return scale * jax.random.normal(k, shape, dtype=jnp.float32)

    H = 32
    p = {"fb_w": nrm(keys[0], (129, 32))}

    lstm = []
    ki = 1
    in_sizes = [32, 64]
    for layer_idx in range(2):
        layer = {}
        for d in ("fw", "bw"):
            layer[d] = dict(
                w_ih=nrm(keys[ki], (in_sizes[layer_idx], 4 * H)),   # cols [i, f, g, o]
                w_hh=nrm(keys[ki + 1], (H, 4 * H)),
                b_ih=nrm(keys[ki + 2], (4 * H,)),
                b_hh=nrm(keys[ki + 3], (4 * H,)),
            )
            ki += 4
        lstm.append(layer)
    p["lstm"] = lstm

    p["att_W"] = nrm(keys[ki], (64, 128))
    p["att_b"] = nrm(keys[ki + 1], (128,))
    p["att_u"] = nrm(keys[ki + 2], (128,))
    ki += 3

    p["hq"] = nrm(keys[ki], (64, attention_size * N))
    p["hk"] = nrm(keys[ki + 1], (64, attention_size * N))
    ki += 2

    p["prototypes"] = nrm(keys[ki], (n_prototypes, 64), scale=1.0)
    return p


# ----------------------------------------------------------------------------
if __name__ == "__main__":
    N = 2
    temperature = 1.0

    key = jax.random.PRNGKey(0)
    kx, kg = jax.random.split(key)

    # (batch, seq_len, n_chan, tot_sections, section_length, n_fbins) — n_fbins fixed at 129.
    # Sizes chosen so both kernels get a >=2-block "parallel" grid (v7x 2-TC path exercised).
    x = jax.random.normal(kx, (2, 8, 2, 4, 2, 129), dtype=jnp.float32)
    params = init_params(jax.random.PRNGKey(42), attention_size=16, N=N, n_prototypes=8)

    fwd = jax.jit(functools.partial(epoch_encoder_forward, params, N=N, temperature=temperature))
    proto, residual, loss, indexes = fwd(x, kg)
    jax.block_until_ready((proto, residual, loss, indexes))

    assert proto.shape == (2, 8, N, 64)
    assert residual.shape == (2, 8, N, 64)
    assert loss.shape == ()
    assert indexes.shape == (2 * 8, N)
    print("KERNEL_OK")
</pallas_src>

<mosaic_0001>
module attributes {stable_mosaic.version = 11 : i64} {
  func.func @_section_encoder_kernel(%arg0: i32, %arg1: memref<64x258xf32, #tpu.memory_space<vmem>>, %arg2: memref<128x256xbf16, #tpu.memory_space<vmem>>, %arg3: memref<1x256xf32, #tpu.memory_space<vmem>>, %arg4: memref<1x256xf32, #tpu.memory_space<vmem>>, %arg5: memref<64x256xbf16, #tpu.memory_space<vmem>>, %arg6: memref<64x256xbf16, #tpu.memory_space<vmem>>, %arg7: memref<1x256xf32, #tpu.memory_space<vmem>>, %arg8: memref<64x256xbf16, #tpu.memory_space<vmem>>, %arg9: memref<64x128xbf16, #tpu.memory_space<vmem>>, %arg10: memref<1x128xf32, #tpu.memory_space<vmem>>, %arg11: memref<1x128xf32, #tpu.memory_space<vmem>>, %arg12: memref<64x64xf32, #tpu.memory_space<vmem>>) attributes {dimension_semantics = [#tpu.dimension_semantics<parallel>], iteration_bounds = array<i64: 2>, scalar_prefetch = 0 : i64, scratch_operands = 0 : i64, tpu.core_type = #tpu.core_type<tc>, window_params = [{transform_indices = @transform_0, window_bounds = array<i64: 64, 258>}, {pipeline_mode = #tpu.pipeline_mode<synchronous>, transform_indices = @transform_1, window_bounds = array<i64: 128, 256>}, {pipeline_mode = #tpu.pipeline_mode<synchronous>, transform_indices = @transform_2, window_bounds = array<i64: 1, 256>}, {pipeline_mode = #tpu.pipeline_mode<synchronous>, transform_indices = @transform_3, window_bounds = array<i64: 1, 256>}, {pipeline_mode = #tpu.pipeline_mode<synchronous>, transform_indices = @transform_4, window_bounds = array<i64: 64, 256>}, {pipeline_mode = #tpu.pipeline_mode<synchronous>, transform_indices = @transform_5, window_bounds = array<i64: 64, 256>}, {pipeline_mode = #tpu.pipeline_mode<synchronous>, transform_indices = @transform_6, window_bounds = array<i64: 1, 256>}, {pipeline_mode = #tpu.pipeline_mode<synchronous>, transform_indices = @transform_7, window_bounds = array<i64: 64, 256>}, {pipeline_mode = #tpu.pipeline_mode<synchronous>, transform_indices = @transform_8, window_bounds = array<i64: 64, 128>}, {pipeline_mode = #tpu.pipeline_mode<synchronous>, transform_indices = @transform_9, window_bounds = array<i64: 1, 128>}, {pipeline_mode = #tpu.pipeline_mode<synchronous>, transform_indices = @transform_10, window_bounds = array<i64: 1, 128>}, {transform_indices = @transform_11, window_bounds = array<i64: 64, 64>}]} {
    %0 = tpu.iota {dimensions = array<i32: 1>} : vector<64x256xi32>
    %c64_i32 = arith.constant 64 : i32
    %c0_i32 = arith.constant 0 : i32
    %1 = arith.cmpi eq, %c64_i32, %c0_i32 : i32
    %c1_i32 = arith.constant 1 : i32
    %2 = arith.select %1, %c1_i32, %c64_i32 : i32
    %3 = vector.broadcast %2 : i32 to vector<64x256xi32>
    %4 = arith.remsi %0, %3 : vector<64x256xi32>
    %c0_i32_0 = arith.constant 0 : i32
    %5 = vector.broadcast %c0_i32_0 : i32 to vector<64x256xi32>
    %6 = arith.cmpi ne, %4, %5 : vector<64x256xi32>
    %c0_i32_1 = arith.constant 0 : i32
    %7 = vector.broadcast %c0_i32_1 : i32 to vector<64x256xi32>
    %8 = arith.cmpi slt, %4, %7 : vector<64x256xi32>
    %c0_i32_2 = arith.constant 0 : i32
    %9 = arith.cmpi slt, %2, %c0_i32_2 : i32
    %10 = vector.broadcast %9 : i1 to vector<64x256xi1>
    %11 = vector.broadcast %10 : vector<64x256xi1> to vector<64x256xi1>
    %12 = arith.xori %8, %11 : vector<64x256xi1>
    %13 = arith.andi %12, %6 : vector<64x256xi1>
    %14 = vector.broadcast %2 : i32 to vector<64x256xi32>
    %15 = arith.addi %4, %14 : vector<64x256xi32>
    %16 = arith.select %13, %15, %4 : vector<64x256xi1>, vector<64x256xi32>
    %c32_i32 = arith.constant 32 : i32
    %17 = vector.broadcast %c32_i32 : i32 to vector<64x256xi32>
    %18 = arith.cmpi slt, %16, %17 : vector<64x256xi32>
    %19 = tpu.iota {dimensions = array<i32: 1>} : vector<64x64xi32>
    %c32_i32_3 = arith.constant 32 : i32
    %20 = vector.broadcast %c32_i32_3 : i32 to vector<64x64xi32>
    %21 = arith.cmpi slt, %19, %20 : vector<64x64xi32>
    %c0 = arith.constant 0 : index
    %c0_4 = arith.constant 0 : index
    %22 = vector.load %arg1[%c0, %c0_4] : memref<64x258xf32, #tpu.memory_space<vmem>>, vector<64x258xf32>
    %c0_5 = arith.constant 0 : index
    %c0_6 = arith.constant 0 : index
    %23 = vector.load %arg2[%c0_5, %c0_6] : memref<128x256xbf16, #tpu.memory_space<vmem>>, vector<128x256xbf16>
    %c0_7 = arith.constant 0 : index
    %c0_8 = arith.constant 0 : index
    %24 = vector.load %arg3[%c0_7, %c0_8] : memref<1x256xf32, #tpu.memory_space<vmem>>, vector<1x256xf32>
    %c0_9 = arith.constant 0 : index
    %c0_10 = arith.constant 0 : index
    %25 = vector.load %arg4[%c0_9, %c0_10] : memref<1x256xf32, #tpu.memory_space<vmem>>, vector<1x256xf32>
    %c0_11 = arith.constant 0 : index
    %c0_12 = arith.constant 0 : index
    %26 = vector.load %arg5[%c0_11, %c0_12] : memref<64x256xbf16, #tpu.memory_space<vmem>>, vector<64x256xbf16>
    %c0_13 = arith.constant 0 : index
    %c0_14 = arith.constant 0 : index
    %27 = vector.load %arg6[%c0_13, %c0_14] : memref<64x256xbf16, #tpu.memory_space<vmem>>, vector<64x256xbf16>
    %c0_15 = arith.constant 0 : index
    %c0_16 = arith.constant 0 : index
    %28 = vector.load %arg7[%c0_15, %c0_16] : memref<1x256xf32, #tpu.memory_space<vmem>>, vector<1x256xf32>
    %c0_17 = arith.constant 0 : index
    %c0_18 = arith.constant 0 : index
    %29 = vector.load %arg8[%c0_17, %c0_18] : memref<64x256xbf16, #tpu.memory_space<vmem>>, vector<64x256xbf16>
    %30 = vector.extract_strided_slice %22 {offsets = [0, 0], sizes = [64, 129], strides = [1, 1]} : vector<64x258xf32> to vector<64x129xf32>
    %31 = vector.extract_strided_slice %30 {offsets = [0, 0], sizes = [64, 128], strides = [1, 1]} : vector<64x129xf32> to vector<64x128xf32>
    %32 = arith.truncf %31 : vector<64x128xf32> to vector<64x128xbf16>
    %cst = arith.constant dense<0.000000e+00> : vector<64x256xf32>
    %33 = tpu.matmul %32, %23, %cst {dimension_numbers = #tpu.dot_dimension_numbers<[1], [0], [0], [1], [0, 0, 1, 1], [], []>} : vector<64x128xbf16>, vector<128x256xbf16>, vector<64x256xf32> -> vector<64x256xf32>
    %34 = vector.extract_strided_slice %30 {offsets = [0, 128], sizes = [64, 1], strides = [1, 1]} : vector<64x129xf32> to vector<64x1xf32>
    %35 = vector.broadcast %34 : vector<64x1xf32> to vector<64x256xf32>
    %36 = vector.broadcast %24 : vector<1x256xf32> to vector<64x256xf32>
    %37 = arith.mulf %35, %36 : vector<64x256xf32>
    %38 = arith.addf %33, %37 : vector<64x256xf32>
    %39 = vector.broadcast %25 : vector<1x256xf32> to vector<64x256xf32>
    %40 = arith.addf %38, %39 : vector<64x256xf32>
    %41 = vector.extract_strided_slice %22 {offsets = [0, 129], sizes = [64, 129], strides = [1, 1]} : vector<64x258xf32> to vector<64x129xf32>
    %42 = vector.extract_strided_slice %41 {offsets = [0, 0], sizes = [64, 128], strides = [1, 1]} : vector<64x129xf32> to vector<64x128xf32>
    %43 = arith.truncf %42 : vector<64x128xf32> to vector<64x128xbf16>
    %cst_19 = arith.constant dense<0.000000e+00> : vector<64x256xf32>
    %44 = tpu.matmul %43, %23, %cst_19 {dimension_numbers = #tpu.dot_dimension_numbers<[1], [0], [0], [1], [0, 0, 1, 1], [], []>} : vector<64x128xbf16>, vector<128x256xbf16>, vector<64x256xf32> -> vector<64x256xf32>
    %45 = vector.extract_strided_slice %41 {offsets = [0, 128], sizes = [64, 1], strides = [1, 1]} : vector<64x129xf32> to vector<64x1xf32>
    %46 = vector.broadcast %45 : vector<64x1xf32> to vector<64x256xf32>
    %47 = vector.broadcast %24 : vector<1x256xf32> to vector<64x256xf32>
    %48 = arith.mulf %46, %47 : vector<64x256xf32>
    %49 = arith.addf %44, %48 : vector<64x256xf32>
    %50 = vector.broadcast %25 : vector<1x256xf32> to vector<64x256xf32>
    %51 = arith.addf %49, %50 : vector<64x256xf32>
    %cst_20 = arith.constant 0.000000e+00 : f32
    %52 = vector.broadcast %cst_20 : f32 to vector<64x64xf32>
    %53 = arith.select %18, %40, %51 : vector<64x256xi1>, vector<64x256xf32>
    %54 = vector.extract_strided_slice %53 {offsets = [0, 0], sizes = [64, 192], strides = [1, 1]} : vector<64x256xf32> to vector<64x192xf32>
    %55 = arith.negf %54 : vector<64x192xf32>
    %56 = math.exp %55 : vector<64x192xf32>
    %cst_21 = arith.constant 1.000000e+00 : f32
    %57 = vector.broadcast %cst_21 : f32 to vector<64x192xf32>
    %58 = arith.addf %57, %56 : vector<64x192xf32>
    %59 = arith.divf %57, %58 : vector<64x192xf32>
    %60 = vector.extract_strided_slice %53 {offsets = [0, 192], sizes = [64, 64], strides = [1, 1]} : vector<64x256xf32> to vector<64x64xf32>
    %61 = math.tanh %60 : vector<64x64xf32>
    %62 = vector.extract_strided_slice %59 {offsets = [0, 64], sizes = [64, 64], strides = [1, 1]} : vector<64x192xf32> to vector<64x64xf32>
    %63 = arith.mulf %62, %52 : vector<64x64xf32>
    %64 = vector.extract_strided_slice %59 {offsets = [0, 0], sizes = [64, 64], strides = [1, 1]} : vector<64x192xf32> to vector<64x64xf32>
    %65 = arith.mulf %64, %61 : vector<64x64xf32>
    %66 = arith.addf %63, %65 : vector<64x64xf32>
    %67 = vector.extract_strided_slice %59 {offsets = [0, 128], sizes = [64, 64], strides = [1, 1]} : vector<64x192xf32> to vector<64x64xf32>
    %68 = math.tanh %66 : vector<64x64xf32>
    %69 = arith.mulf %67, %68 : vector<64x64xf32>
    %70 = arith.select %18, %51, %40 : vector<64x256xi1>, vector<64x256xf32>
    %71 = arith.truncf %69 : vector<64x64xf32> to vector<64x64xbf16>
    %cst_22 = arith.constant dense<0.000000e+00> : vector<64x256xf32>
    %72 = tpu.matmul %71, %26, %cst_22 {dimension_numbers = #tpu.dot_dimension_numbers<[1], [0], [0], [1], [0, 0, 1, 1], [], []>} : vector<64x64xbf16>, vector<64x256xbf16>, vector<64x256xf32> -> vector<64x256xf32>
    %73 = arith.addf %70, %72 : vector<64x256xf32>
    %74 = vector.extract_strided_slice %73 {offsets = [0, 0], sizes = [64, 192], strides = [1, 1]} : vector<64x256xf32> to vector<64x192xf32>
    %75 = arith.negf %74 : vector<64x192xf32>
    %76 = math.exp %75 : vector<64x192xf32>
    %cst_23 = arith.constant 1.000000e+00 : f32
    %77 = vector.broadcast %cst_23 : f32 to vector<64x192xf32>
    %78 = arith.addf %77, %76 : vector<64x192xf32>
    %79 = arith.divf %77, %78 : vector<64x192xf32>
    %80 = vector.extract_strided_slice %73 {offsets = [0, 192], sizes = [64, 64], strides = [1, 1]} : vector<64x256xf32> to vector<64x64xf32>
    %81 = math.tanh %80 : vector<64x64xf32>
    %82 = vector.extract_strided_slice %79 {offsets = [0, 64], sizes = [64, 64], strides = [1, 1]} : vector<64x192xf32> to vector<64x64xf32>
    %83 = arith.mulf %82, %66 : vector<64x64xf32>
    %84 = vector.extract_strided_slice %79 {offsets = [0, 0], sizes = [64, 64], strides = [1, 1]} : vector<64x192xf32> to vector<64x64xf32>
    %85 = arith.mulf %84, %81 : vector<64x64xf32>
    %86 = arith.addf %83, %85 : vector<64x64xf32>
    %87 = vector.extract_strided_slice %79 {offsets = [0, 128], sizes = [64, 64], strides = [1, 1]} : vector<64x192xf32> to vector<64x64xf32>
    %88 = math.tanh %86 : vector<64x64xf32>
    %89 = arith.mulf %87, %88 : vector<64x64xf32>
    %90 = arith.select %21, %69, %89 : vector<64x64xi1>, vector<64x64xf32>
    %91 = arith.select %21, %89, %69 : vector<64x64xi1>, vector<64x64xf32>
    %92 = arith.truncf %90 : vector<64x64xf32> to vector<64x64xbf16>
    %cst_24 = arith.constant dense<0.000000e+00> : vector<64x256xf32>
    %93 = tpu.matmul %92, %27, %cst_24 {dimension_numbers = #tpu.dot_dimension_numbers<[1], [0], [0], [1], [0, 0, 1, 1], [], []>} : vector<64x64xbf16>, vector<64x256xbf16>, vector<64x256xf32> -> vector<64x256xf32>
    %94 = vector.broadcast %28 : vector<1x256xf32> to vector<64x256xf32>
    %95 = arith.addf %93, %94 : vector<64x256xf32>
    %96 = arith.truncf %91 : vector<64x64xf32> to vector<64x64xbf16>
    %cst_25 = arith.constant dense<0.000000e+00> : vector<64x256xf32>
    %97 = tpu.matmul %96, %27, %cst_25 {dimension_numbers = #tpu.dot_dimension_numbers<[1], [0], [0], [1], [0, 0, 1, 1], [], []>} : vector<64x64xbf16>, vector<64x256xbf16>, vector<64x256xf32> -> vector<64x256xf32>
    %98 = vector.broadcast %28 : vector<1x256xf32> to vector<64x256xf32>
    %99 = arith.addf %97, %98 : vector<64x256xf32>
    %cst_26 = arith.constant 0.000000e+00 : f32
    %100 = vector.broadcast %cst_26 : f32 to vector<64x64xf32>
    %101 = arith.select %18, %95, %99 : vector<64x256xi1>, vector<64x256xf32>
    %102 = vector.extract_strided_slice %101 {offsets = [0, 0], sizes = [64, 192], strides = [1, 1]} : vector<64x256xf32> to vector<64x192xf32>
    %103 = arith.negf %102 : vector<64x192xf32>
    %104 = math.exp %103 : vector<64x192xf32>
    %cst_27 = arith.constant 1.000000e+00 : f32
    %105 = vector.broadcast %cst_27 : f32 to vector<64x192xf32>
    %106 = arith.addf %105, %104 : vector<64x192xf32>
    %107 = arith.divf %105, %106 : vector<64x192xf32>
    %108 = vector.extract_strided_slice %101 {offsets = [0, 192], sizes = [64, 64], strides = [1, 1]} : vector<64x256xf32> to vector<64x64xf32>
    %109 = math.tanh %108 : vector<64x64xf32>
    %110 = vector.extract_strided_slice %107 {offsets = [0, 64], sizes = [64, 64], strides = [1, 1]} : vector<64x192xf32> to vector<64x64xf32>
    %111 = arith.mulf %110, %100 : vector<64x64xf32>
    %112 = vector.extract_strided_slice %107 {offsets = [0, 0], sizes = [64, 64], strides = [1, 1]} : vector<64x192xf32> to vector<64x64xf32>
    %113 = arith.mulf %112, %109 : vector<64x64xf32>
    %114 = arith.addf %111, %113 : vector<64x64xf32>
    %115 = vector.extract_strided_slice %107 {offsets = [0, 128], sizes = [64, 64], strides = [1, 1]} : vector<64x192xf32> to vector<64x64xf32>
    %116 = math.tanh %114 : vector<64x64xf32>
    %117 = arith.mulf %115, %116 : vector<64x64xf32>
    %118 = arith.select %18, %99, %95 : vector<64x256xi1>, vector<64x256xf32>
    %119 = arith.truncf %117 : vector<64x64xf32> to vector<64x64xbf16>
    %cst_28 = arith.constant dense<0.000000e+00> : vector<64x256xf32>
    %120 = tpu.matmul %119, %29, %cst_28 {dimension_numbers = #tpu.dot_dimension_numbers<[1], [0], [0], [1], [0, 0, 1, 1], [], []>} : vector<64x64xbf16>, vector<64x256xbf16>, vector<64x256xf32> -> vector<64x256xf32>
    %121 = arith.addf %118, %120 : vector<64x256xf32>
    %122 = vector.extract_strided_slice %121 {offsets = [0, 0], sizes = [64, 192], strides = [1, 1]} : vector<64x256xf32> to vector<64x192xf32>
    %123 = arith.negf %122 : vector<64x192xf32>
    %124 = math.exp %123 : vector<64x192xf32>
    %cst_29 = arith.constant 1.000000e+00 : f32
    %125 = vector.broadcast %cst_29 : f32 to vector<64x192xf32>
    %126 = arith.addf %125, %124 : vector<64x192xf32>
    %127 = arith.divf %125, %126 : vector<64x192xf32>
    %128 = vector.extract_strided_slice %121 {offsets = [0, 192], sizes = [64, 64], strides = [1, 1]} : vector<64x256xf32> to vector<64x64xf32>
    %129 = math.tanh %128 : vector<64x64xf32>
    %130 = vector.extract_strided_slice %127 {offsets = [0, 64], sizes = [64, 64], strides = [1, 1]} : vector<64x192xf32> to vector<64x64xf32>
    %131 = arith.mulf %130, %114 : vector<64x64xf32>
    %132 = vector.extract_strided_slice %127 {offsets = [0, 0], sizes = [64, 64], strides = [1, 1]} : vector<64x192xf32> to vector<64x64xf32>
    %133 = arith.mulf %132, %129 : vector<64x64xf32>
    %134 = arith.addf %131, %133 : vector<64x64xf32>
    %135 = vector.extract_strided_slice %127 {offsets = [0, 128], sizes = [64, 64], strides = [1, 1]} : vector<64x192xf32> to vector<64x64xf32>
    %136 = math.tanh %134 : vector<64x64xf32>
    %137 = arith.mulf %135, %136 : vector<64x64xf32>
    %138 = arith.select %21, %117, %137 : vector<64x64xi1>, vector<64x64xf32>
    %139 = arith.select %21, %137, %117 : vector<64x64xi1>, vector<64x64xf32>
    %c0_30 = arith.constant 0 : index
    %c0_31 = arith.constant 0 : index
    %140 = vector.load %arg9[%c0_30, %c0_31] : memref<64x128xbf16, #tpu.memory_space<vmem>>, vector<64x128xbf16>
    %c0_32 = arith.constant 0 : index
    %c0_33 = arith.constant 0 : index
    %141 = vector.load %arg10[%c0_32, %c0_33] : memref<1x128xf32, #tpu.memory_space<vmem>>, vector<1x128xf32>
    %c0_34 = arith.constant 0 : index
    %c0_35 = arith.constant 0 : index
    %142 = vector.load %arg11[%c0_34, %c0_35] : memref<1x128xf32, #tpu.memory_space<vmem>>, vector<1x128xf32>
    %143 = arith.truncf %138 : vector<64x64xf32> to vector<64x64xbf16>
    %cst_36 = arith.constant dense<0.000000e+00> : vector<64x128xf32>
    %144 = tpu.matmul %143, %140, %cst_36 {dimension_numbers = #tpu.dot_dimension_numbers<[1], [0], [0], [1], [0, 0, 1, 1], [], []>} : vector<64x64xbf16>, vector<64x128xbf16>, vector<64x128xf32> -> vector<64x128xf32>
    %145 = vector.broadcast %141 : vector<1x128xf32> to vector<64x128xf32>
    %146 = arith.addf %144, %145 : vector<64x128xf32>
    %147 = math.tanh %146 : vector<64x128xf32>
    %148 = vector.broadcast %142 : vector<1x128xf32> to vector<64x128xf32>
    %149 = arith.mulf %147, %148 : vector<64x128xf32>
    %cst_37 = arith.constant dense<0.000000e+00> : vector<64xf32>
    %150 = vector.multi_reduction <add>, %149, %cst_37 [1] : vector<64x128xf32> to vector<64xf32>
    %151 = vector.shape_cast %150 : vector<64xf32> to vector<64x1xf32>
    %152 = arith.truncf %139 : vector<64x64xf32> to vector<64x64xbf16>
    %cst_38 = arith.constant dense<0.000000e+00> : vector<64x128xf32>
    %153 = tpu.matmul %152, %140, %cst_38 {dimension_numbers = #tpu.dot_dimension_numbers<[1], [0], [0], [1], [0, 0, 1, 1], [], []>} : vector<64x64xbf16>, vector<64x128xbf16>, vector<64x128xf32> -> vector<64x128xf32>
    %154 = vector.broadcast %141 : vector<1x128xf32> to vector<64x128xf32>
    %155 = arith.addf %153, %154 : vector<64x128xf32>
    %156 = math.tanh %155 : vector<64x128xf32>
    %157 = vector.broadcast %142 : vector<1x128xf32> to vector<64x128xf32>
    %158 = arith.mulf %156, %157 : vector<64x128xf32>
    %cst_39 = arith.constant dense<0.000000e+00> : vector<64xf32>
    %159 = vector.multi_reduction <add>, %158, %cst_39 [1] : vector<64x128xf32> to vector<64xf32>
    %160 = vector.shape_cast %159 : vector<64xf32> to vector<64x1xf32>
    %161 = arith.maximumf %151, %160 : vector<64x1xf32>
    %cst_40 = arith.constant 0.000000e+00 : f32
    %162 = vector.broadcast %cst_40 : f32 to vector<64x64xf32>
    %cst_41 = arith.constant 0.000000e+00 : f32
    %163 = vector.broadcast %cst_41 : f32 to vector<64x1xf32>
    %164 = arith.subf %151, %161 : vector<64x1xf32>
    %165 = math.exp %164 : vector<64x1xf32>
    %166 = arith.addf %163, %165 : vector<64x1xf32>
    %167 = vector.broadcast %165 : vector<64x1xf32> to vector<64x64xf32>
    %168 = arith.mulf %167, %138 : vector<64x64xf32>
    %169 = arith.addf %162, %168 : vector<64x64xf32>
    %170 = arith.subf %160, %161 : vector<64x1xf32>
    %171 = math.exp %170 : vector<64x1xf32>
    %172 = arith.addf %166, %171 : vector<64x1xf32>
    %173 = vector.broadcast %171 : vector<64x1xf32> to vector<64x64xf32>
    %174 = arith.mulf %173, %139 : vector<64x64xf32>
    %175 = arith.addf %169, %174 : vector<64x64xf32>
    %176 = tpu.reciprocal %172 {approx = true} : vector<64x1xf32> -> vector<64x1xf32>
    %177 = vector.broadcast %176 : vector<64x1xf32> to vector<64x64xf32>
    %178 = arith.mulf %175, %177 : vector<64x64xf32>
    %c0_42 = arith.constant 0 : index
    %c0_43 = arith.constant 0 : index
    %179 = vector.load %arg12[%c0_42, %c0_43] : memref<64x64xf32, #tpu.memory_space<vmem>>, vector<64x64xf32>
    tpu.vector_store %arg12[%c0_42, %c0_43], %178 {strides = array<i32>} : memref<64x64xf32, #tpu.memory_space<vmem>>, vector<64x64xf32>,
    return
  }
  func.func @transform_0(%arg0: i32) -> (i32, i32) {
    %c0_i32 = arith.constant 0 : i32
    %c0_i32_0 = arith.constant 0 : i32
    return %arg0, %c0_i32 : i32, i32
  }
  func.func @transform_1(%arg0: i32) -> (i32, i32) {
    %c0_i32 = arith.constant 0 : i32
    %c0_i32_0 = arith.constant 0 : i32
    %c0_i32_1 = arith.constant 0 : i32
    return %c0_i32, %c0_i32_0 : i32, i32
  }
  func.func @transform_2(%arg0: i32) -> (i32, i32) {
    %c0_i32 = arith.constant 0 : i32
    %c0_i32_0 = arith.constant 0 : i32
    %c0_i32_1 = arith.constant 0 : i32
    return %c0_i32, %c0_i32_0 : i32, i32
  }
  func.func @transform_3(%arg0: i32) -> (i32, i32) {
    %c0_i32 = arith.constant 0 : i32
    %c0_i32_0 = arith.constant 0 : i32
    %c0_i32_1 = arith.constant 0 : i32
    return %c0_i32, %c0_i32_0 : i32, i32
  }
  func.func @transform_4(%arg0: i32) -> (i32, i32) {
    %c0_i32 = arith.constant 0 : i32
    %c0_i32_0 = arith.constant 0 : i32
    %c0_i32_1 = arith.constant 0 : i32
    return %c0_i32, %c0_i32_0 : i32, i32
  }
  func.func @transform_5(%arg0: i32) -> (i32, i32) {
    %c0_i32 = arith.constant 0 : i32
    %c0_i32_0 = arith.constant 0 : i32
    %c0_i32_1 = arith.constant 0 : i32
    return %c0_i32, %c0_i32_0 : i32, i32
  }
  func.func @transform_6(%arg0: i32) -> (i32, i32) {
    %c0_i32 = arith.constant 0 : i32
    %c0_i32_0 = arith.constant 0 : i32
    %c0_i32_1 = arith.constant 0 : i32
    return %c0_i32, %c0_i32_0 : i32, i32
  }
  func.func @transform_7(%arg0: i32) -> (i32, i32) {
    %c0_i32 = arith.constant 0 : i32
    %c0_i32_0 = arith.constant 0 : i32
    %c0_i32_1 = arith.constant 0 : i32
    return %c0_i32, %c0_i32_0 : i32, i32
  }
  func.func @transform_8(%arg0: i32) -> (i32, i32) {
    %c0_i32 = arith.constant 0 : i32
    %c0_i32_0 = arith.constant 0 : i32
    %c0_i32_1 = arith.constant 0 : i32
    return %c0_i32, %c0_i32_0 : i32, i32
  }
  func.func @transform_9(%arg0: i32) -> (i32, i32) {
    %c0_i32 = arith.constant 0 : i32
    %c0_i32_0 = arith.constant 0 : i32
    %c0_i32_1 = arith.constant 0 : i32
    return %c0_i32, %c0_i32_0 : i32, i32
  }
  func.func @transform_10(%arg0: i32) -> (i32, i32) {
    %c0_i32 = arith.constant 0 : i32
    %c0_i32_0 = arith.constant 0 : i32
    %c0_i32_1 = arith.constant 0 : i32
    return %c0_i32, %c0_i32_0 : i32, i32
  }
  func.func @transform_11(%arg0: i32) -> (i32, i32) {
    %c0_i32 = arith.constant 0 : i32
    %c0_i32_0 = arith.constant 0 : i32
    return %arg0, %c0_i32 : i32, i32
  }
}

module attributes {stable_mosaic.version = 11 : i64} {
  func.func @_hard_attn_proto_kernel(%arg0: i32, %arg1: memref<8x8x64xf32, #tpu.memory_space<vmem>>, %arg2: memref<8x64xf32, #tpu.memory_space<vmem>>, %arg3: memref<64x32xbf16, #tpu.memory_space<vmem>>, %arg4: memref<64x32xbf16, #tpu.memory_space<vmem>>, %arg5: memref<2x8x8xf32, #tpu.memory_space<vmem>>, %arg6: memref<64x8xbf16, #tpu.memory_space<vmem>>, %arg7: memref<1x8xf32, #tpu.memory_space<vmem>>, %arg8: memref<8x2x64xf32, #tpu.memory_space<vmem>>, %arg9: memref<8x2xi32, #tpu.memory_space<vmem>>, %arg10: memref<8x2xi32, #tpu.memory_space<vmem>>) attributes {dimension_semantics = [#tpu.dimension_semantics<parallel>], iteration_bounds = array<i64: 2>, scalar_prefetch = 0 : i64, scratch_operands = 0 : i64, tpu.core_type = #tpu.core_type<tc>, window_params = [{transform_indices = @transform_0, window_bounds = array<i64: 8, 8, 64>}, {pipeline_mode = #tpu.pipeline_mode<synchronous>, transform_indices = @transform_1, window_bounds = array<i64: 8, 64>}, {pipeline_mode = #tpu.pipeline_mode<synchronous>, transform_indices = @transform_2, window_bounds = array<i64: 64, 32>}, {pipeline_mode = #tpu.pipeline_mode<synchronous>, transform_indices = @transform_3, window_bounds = array<i64: 64, 32>}, {transform_indices = @transform_4, window_bounds = array<i64: 2, 8, 8>}, {pipeline_mode = #tpu.pipeline_mode<synchronous>, transform_indices = @transform_5, window_bounds = array<i64: 64, 8>}, {pipeline_mode = #tpu.pipeline_mode<synchronous>, transform_indices = @transform_6, window_bounds = array<i64: 1, 8>}, {transform_indices = @transform_7, window_bounds = array<i64: 8, 2, 64>}, {transform_indices = @transform_8, window_bounds = array<i64: 8, 2>}, {transform_indices = @transform_9, window_bounds = array<i64: 8, 2>}]} {
    %c0 = arith.constant 0 : index
    %c0_0 = arith.constant 0 : index
    %c0_1 = arith.constant 0 : index
    %0 = vector.load %arg1[%c0, %c0_0, %c0_1] : memref<8x8x64xf32, #tpu.memory_space<vmem>>, vector<8x8x64xf32>
    %c0_2 = arith.constant 0 : index
    %c0_3 = arith.constant 0 : index
    %1 = vector.load %arg2[%c0_2, %c0_3] : memref<8x64xf32, #tpu.memory_space<vmem>>, vector<8x64xf32>
    %2 = vector.shape_cast %1 : vector<8x64xf32> to vector<1x8x64xf32>
    %3 = vector.broadcast %2 : vector<1x8x64xf32> to vector<8x8x64xf32>
    %4 = arith.addf %0, %3 : vector<8x8x64xf32>
    %5 = vector.shape_cast %4 : vector<8x8x64xf32> to vector<64x64xf32>
    %6 = arith.truncf %5 : vector<64x64xf32> to vector<64x64xbf16>
    %c0_4 = arith.constant 0 : index
    %c0_5 = arith.constant 0 : index
    %7 = vector.load %arg3[%c0_4, %c0_5] : memref<64x32xbf16, #tpu.memory_space<vmem>>, vector<64x32xbf16>
    %cst = arith.constant dense<0.000000e+00> : vector<64x32xf32>
    %8 = tpu.matmul %6, %7, %cst {dimension_numbers = #tpu.dot_dimension_numbers<[1], [0], [0], [1], [0, 0, 1, 1], [], []>} : vector<64x64xbf16>, vector<64x32xbf16>, vector<64x32xf32> -> vector<64x32xf32>
    %9 = vector.shape_cast %8 : vector<64x32xf32> to vector<8x8x32xf32>
    %cst_6 = arith.constant dense<0.000000e+00> : vector<8x64xf32>
    %10 = vector.multi_reduction <add>, %4, %cst_6 [1] : vector<8x8x64xf32> to vector<8x64xf32>
    %11 = arith.truncf %10 : vector<8x64xf32> to vector<8x64xbf16>
    %c0_7 = arith.constant 0 : index
    %c0_8 = arith.constant 0 : index
    %12 = vector.load %arg4[%c0_7, %c0_8] : memref<64x32xbf16, #tpu.memory_space<vmem>>, vector<64x32xbf16>
    %cst_9 = arith.constant dense<0.000000e+00> : vector<8x32xf32>
    %13 = tpu.matmul %11, %12, %cst_9 {dimension_numbers = #tpu.dot_dimension_numbers<[1], [0], [0], [1], [0, 0, 1, 1], [], []>} : vector<8x64xbf16>, vector<64x32xbf16>, vector<8x32xf32> -> vector<8x32xf32>
    %14 = vector.shape_cast %13 : vector<8x32xf32> to vector<8x1x32xf32>
    %15 = vector.broadcast %14 : vector<8x1x32xf32> to vector<8x8x32xf32>
    %16 = arith.mulf %9, %15 : vector<8x8x32xf32>
    %17 = tpu.iota {dimensions = array<i32: 1>} : vector<8x8xi32>
    %18 = tpu.iota {dimensions = array<i32: 1>} : vector<8x8xi32>
    %19 = vector.extract_strided_slice %16 {offsets = [0, 0, 0], sizes = [8, 8, 16], strides = [1, 1, 1]} : vector<8x8x32xf32> to vector<8x8x16xf32>
    %cst_10 = arith.constant dense<0.000000e+00> : vector<8x8xf32>
    %20 = vector.multi_reduction <add>, %19, %cst_10 [2] : vector<8x8x16xf32> to vector<8x8xf32>
    %cst_11 = arith.constant 1.562500e-02 : f32
    %21 = vector.broadcast %cst_11 : f32 to vector<8x8xf32>
    %22 = arith.mulf %20, %21 : vector<8x8xf32>
    %c0_12 = arith.constant 0 : index
    %c0_13 = arith.constant 0 : index
    %c0_14 = arith.constant 0 : index
    %23 = vector.load %arg5[%c0_12, %c0_13, %c0_14] : memref<2x8x8xf32, #tpu.memory_space<vmem>>, vector<1x8x8xf32>
    %24 = vector.shape_cast %23 : vector<1x8x8xf32> to vector<8x8xf32>
    %25 = arith.addf %22, %24 : vector<8x8xf32>
    %cst_15 = arith.constant 1.000000e+00 : f32
    %26 = vector.broadcast %cst_15 : f32 to vector<8x8xf32>
    %27 = arith.mulf %25, %26 : vector<8x8xf32>
    %cst_16 = arith.constant dense<0xFF800000> : vector<8xf32>
    %28 = vector.multi_reduction <maximumf>, %27, %cst_16 [1] : vector<8x8xf32> to vector<8xf32>
    %29 = vector.shape_cast %28 : vector<8xf32> to vector<8x1xf32>
    %30 = vector.broadcast %29 : vector<8x1xf32> to vector<8x8xf32>
    %31 = arith.cmpf oge, %27, %30 : vector<8x8xf32>
    %c8_i32 = arith.constant 8 : i32
    %32 = vector.broadcast %c8_i32 : i32 to vector<8x8xi32>
    %33 = arith.select %31, %17, %32 : vector<8x8xi1>, vector<8x8xi32>
    %cst_17 = arith.constant dense<2147483647> : vector<8xi32>
    %34 = vector.multi_reduction <minsi>, %33, %cst_17 [1] : vector<8x8xi32> to vector<8xi32>
    %35 = vector.shape_cast %34 : vector<8xi32> to vector<8x1xi32>
    %36 = vector.broadcast %35 : vector<8x1xi32> to vector<8x8xi32>
    %37 = arith.cmpi eq, %17, %36 : vector<8x8xi32>
    %38 = arith.extui %37 : vector<8x8xi1> to vector<8x8xi32>
    %39 = arith.sitofp %38 : vector<8x8xi32> to vector<8x8xf32>
    %40 = vector.shape_cast %39 : vector<8x8xf32> to vector<8x8x1xf32>
    %41 = vector.broadcast %40 : vector<8x8x1xf32> to vector<8x8x64xf32>
    %42 = arith.mulf %41, %0 : vector<8x8x64xf32>
    %cst_18 = arith.constant dense<0.000000e+00> : vector<8x64xf32>
    %43 = vector.multi_reduction <add>, %42, %cst_18 [1] : vector<8x8x64xf32> to vector<8x64xf32>
    %c0_19 = arith.constant 0 : index
    %c0_20 = arith.constant 0 : index
    %44 = vector.load %arg7[%c0_19, %c0_20] : memref<1x8xf32, #tpu.memory_space<vmem>>, vector<1x8xf32>
    %45 = arith.truncf %43 : vector<8x64xf32> to vector<8x64xbf16>
    %c0_21 = arith.constant 0 : index
    %c0_22 = arith.constant 0 : index
    %46 = vector.load %arg6[%c0_21, %c0_22] : memref<64x8xbf16, #tpu.memory_space<vmem>>, vector<64x8xbf16>
    %cst_23 = arith.constant dense<0.000000e+00> : vector<8x8xf32>
    %47 = tpu.matmul %45, %46, %cst_23 {dimension_numbers = #tpu.dot_dimension_numbers<[1], [0], [0], [1], [0, 0, 1, 1], [], []>} : vector<8x64xbf16>, vector<64x8xbf16>, vector<8x8xf32> -> vector<8x8xf32>
    %cst_24 = arith.constant 2.000000e+00 : f32
    %48 = vector.broadcast %cst_24 : f32 to vector<8x8xf32>
    %49 = arith.mulf %48, %47 : vector<8x8xf32>
    %50 = vector.broadcast %44 : vector<1x8xf32> to vector<8x8xf32>
    %51 = arith.subf %50, %49 : vector<8x8xf32>
    %cst_25 = arith.constant dense<0x7F800000> : vector<8xf32>
    %52 = vector.multi_reduction <minimumf>, %51, %cst_25 [1] : vector<8x8xf32> to vector<8xf32>
    %53 = vector.shape_cast %52 : vector<8xf32> to vector<8x1xf32>
    %54 = vector.broadcast %53 : vector<8x1xf32> to vector<8x8xf32>
    %55 = arith.cmpf ole, %51, %54 : vector<8x8xf32>
    %c8_i32_26 = arith.constant 8 : i32
    %56 = vector.broadcast %c8_i32_26 : i32 to vector<8x8xi32>
    %57 = arith.select %55, %18, %56 : vector<8x8xi1>, vector<8x8xi32>
    %cst_27 = arith.constant dense<2147483647> : vector<8xi32>
    %58 = vector.multi_reduction <minsi>, %57, %cst_27 [1] : vector<8x8xi32> to vector<8xi32>
    %59 = vector.shape_cast %58 : vector<8xi32> to vector<8x1xi32>
    %60 = vector.shape_cast %43 : vector<8x64xf32> to vector<8x1x64xf32>
    %61 = vector.extract_strided_slice %16 {offsets = [0, 0, 16], sizes = [8, 8, 16], strides = [1, 1, 1]} : vector<8x8x32xf32> to vector<8x8x16xf32>
    %cst_28 = arith.constant dense<0.000000e+00> : vector<8x8xf32>
    %62 = vector.multi_reduction <add>, %61, %cst_28 [2] : vector<8x8x16xf32> to vector<8x8xf32>
    %cst_29 = arith.constant 1.562500e-02 : f32
    %63 = vector.broadcast %cst_29 : f32 to vector<8x8xf32>
    %64 = arith.mulf %62, %63 : vector<8x8xf32>
    %c1 = arith.constant 1 : index
    %c0_30 = arith.constant 0 : index
    %c0_31 = arith.constant 0 : index
    %65 = vector.load %arg5[%c1, %c0_30, %c0_31] : memref<2x8x8xf32, #tpu.memory_space<vmem>>, vector<1x8x8xf32>
    %66 = vector.shape_cast %65 : vector<1x8x8xf32> to vector<8x8xf32>
    %67 = arith.addf %64, %66 : vector<8x8xf32>
    %cst_32 = arith.constant 1.000000e+00 : f32
    %68 = vector.broadcast %cst_32 : f32 to vector<8x8xf32>
    %69 = arith.mulf %67, %68 : vector<8x8xf32>
    %cst_33 = arith.constant dense<0xFF800000> : vector<8xf32>
    %70 = vector.multi_reduction <maximumf>, %69, %cst_33 [1] : vector<8x8xf32> to vector<8xf32>
    %71 = vector.shape_cast %70 : vector<8xf32> to vector<8x1xf32>
    %72 = vector.broadcast %71 : vector<8x1xf32> to vector<8x8xf32>
    %73 = arith.cmpf oge, %69, %72 : vector<8x8xf32>
    %c8_i32_34 = arith.constant 8 : i32
    %74 = vector.broadcast %c8_i32_34 : i32 to vector<8x8xi32>
    %75 = arith.select %73, %17, %74 : vector<8x8xi1>, vector<8x8xi32>
    %cst_35 = arith.constant dense<2147483647> : vector<8xi32>
    %76 = vector.multi_reduction <minsi>, %75, %cst_35 [1] : vector<8x8xi32> to vector<8xi32>
    %77 = vector.shape_cast %76 : vector<8xi32> to vector<8x1xi32>
    %78 = vector.broadcast %77 : vector<8x1xi32> to vector<8x8xi32>
    %79 = arith.cmpi eq, %17, %78 : vector<8x8xi32>
    %80 = arith.extui %79 : vector<8x8xi1> to vector<8x8xi32>
    %81 = arith.sitofp %80 : vector<8x8xi32> to vector<8x8xf32>
    %82 = vector.shape_cast %81 : vector<8x8xf32> to vector<8x8x1xf32>
    %83 = vector.broadcast %82 : vector<8x8x1xf32> to vector<8x8x64xf32>
    %84 = arith.mulf %83, %0 : vector<8x8x64xf32>
    %cst_36 = arith.constant dense<0.000000e+00> : vector<8x64xf32>
    %85 = vector.multi_reduction <add>, %84, %cst_36 [1] : vector<8x8x64xf32> to vector<8x64xf32>
    %c0_37 = arith.constant 0 : index
    %c0_38 = arith.constant 0 : index
    %86 = vector.load %arg7[%c0_37, %c0_38] : memref<1x8xf32, #tpu.memory_space<vmem>>, vector<1x8xf32>
    %87 = arith.truncf %85 : vector<8x64xf32> to vector<8x64xbf16>
    %c0_39 = arith.constant 0 : index
    %c0_40 = arith.constant 0 : index
    %88 = vector.load %arg6[%c0_39, %c0_40] : memref<64x8xbf16, #tpu.memory_space<vmem>>, vector<64x8xbf16>
    %cst_41 = arith.constant dense<0.000000e+00> : vector<8x8xf32>
    %89 = tpu.matmul %87, %88, %cst_41 {dimension_numbers = #tpu.dot_dimension_numbers<[1], [0], [0], [1], [0, 0, 1, 1], [], []>} : vector<8x64xbf16>, vector<64x8xbf16>, vector<8x8xf32> -> vector<8x8xf32>
    %cst_42 = arith.constant 2.000000e+00 : f32
    %90 = vector.broadcast %cst_42 : f32 to vector<8x8xf32>
    %91 = arith.mulf %90, %89 : vector<8x8xf32>
    %92 = vector.broadcast %86 : vector<1x8xf32> to vector<8x8xf32>
    %93 = arith.subf %92, %91 : vector<8x8xf32>
    %cst_43 = arith.constant dense<0x7F800000> : vector<8xf32>
    %94 = vector.multi_reduction <minimumf>, %93, %cst_43 [1] : vector<8x8xf32> to vector<8xf32>
    %95 = vector.shape_cast %94 : vector<8xf32> to vector<8x1xf32>
    %96 = vector.broadcast %95 : vector<8x1xf32> to vector<8x8xf32>
    %97 = arith.cmpf ole, %93, %96 : vector<8x8xf32>
    %c8_i32_44 = arith.constant 8 : i32
    %98 = vector.broadcast %c8_i32_44 : i32 to vector<8x8xi32>
    %99 = arith.select %97, %18, %98 : vector<8x8xi1>, vector<8x8xi32>
    %cst_45 = arith.constant dense<2147483647> : vector<8xi32>
    %100 = vector.multi_reduction <minsi>, %99, %cst_45 [1] : vector<8x8xi32> to vector<8xi32>
    %101 = vector.shape_cast %100 : vector<8xi32> to vector<8x1xi32>
    %102 = vector.shape_cast %85 : vector<8x64xf32> to vector<8x1x64xf32>
    %103 = tpu.concatenate %60, %102 in 1 : vector<8x1x64xf32>, vector<8x1x64xf32> -> vector<8x2x64xf32>
    %c0_46 = arith.constant 0 : index
    %c0_47 = arith.constant 0 : index
    %c0_48 = arith.constant 0 : index
    %104 = vector.load %arg8[%c0_46, %c0_47, %c0_48] : memref<8x2x64xf32, #tpu.memory_space<vmem>>, vector<8x2x64xf32>
    tpu.vector_store %arg8[%c0_46, %c0_47, %c0_48], %103 {strides = array<i32>} : memref<8x2x64xf32, #tpu.memory_space<vmem>>, vector<8x2x64xf32>,
    %105 = tpu.concatenate %35, %77 in 1 : vector<8x1xi32>, vector<8x1xi32> -> vector<8x2xi32>
    %c0_49 = arith.constant 0 : index
    %c0_50 = arith.constant 0 : index
    %106 = vector.load %arg9[%c0_49, %c0_50] : memref<8x2xi32, #tpu.memory_space<vmem>>, vector<8x2xi32>
    tpu.vector_store %arg9[%c0_49, %c0_50], %105 {strides = array<i32>} : memref<8x2xi32, #tpu.memory_space<vmem>>, vector<8x2xi32>,
    %107 = tpu.concatenate %59, %101 in 1 : vector<8x1xi32>, vector<8x1xi32> -> vector<8x2xi32>
    %c0_51 = arith.constant 0 : index
    %c0_52 = arith.constant 0 : index
    %108 = vector.load %arg10[%c0_51, %c0_52] : memref<8x2xi32, #tpu.memory_space<vmem>>, vector<8x2xi32>
    tpu.vector_store %arg10[%c0_51, %c0_52], %107 {strides = array<i32>} : memref<8x2xi32, #tpu.memory_space<vmem>>, vector<8x2xi32>,
    return
  }
  func.func @transform_0(%arg0: i32) -> (i32, i32, i32) {
    %c0_i32 = arith.constant 0 : i32
    %c0_i32_0 = arith.constant 0 : i32
    %c0_i32_1 = arith.constant 0 : i32
    return %arg0, %c0_i32, %c0_i32_0 : i32, i32, i32
  }
  func.func @transform_1(%arg0: i32) -> (i32, i32) {
    %c0_i32 = arith.constant 0 : i32
    %c0_i32_0 = arith.constant 0 : i32
    %c0_i32_1 = arith.constant 0 : i32
    return %c0_i32, %c0_i32_0 : i32, i32
  }
  func.func @transform_2(%arg0: i32) -> (i32, i32) {
    %c0_i32 = arith.constant 0 : i32
    %c0_i32_0 = arith.constant 0 : i32
    %c0_i32_1 = arith.constant 0 : i32
    return %c0_i32, %c0_i32_0 : i32, i32
  }
  func.func @transform_3(%arg0: i32) -> (i32, i32) {
    %c0_i32 = arith.constant 0 : i32
    %c0_i32_0 = arith.constant 0 : i32
    %c0_i32_1 = arith.constant 0 : i32
    return %c0_i32, %c0_i32_0 : i32, i32
  }
  func.func @transform_4(%arg0: i32) -> (i32, i32, i32) {
    %c0_i32 = arith.constant 0 : i32
    %c0_i32_0 = arith.constant 0 : i32
    %c0_i32_1 = arith.constant 0 : i32
    return %c0_i32, %arg0, %c0_i32_0 : i32, i32, i32
  }
  func.func @transform_5(%arg0: i32) -> (i32, i32) {
    %c0_i32 = arith.constant 0 : i32
    %c0_i32_0 = arith.constant 0 : i32
    %c0_i32_1 = arith.constant 0 : i32
    return %c0_i32, %c0_i32_0 : i32, i32
  }
  func.func @transform_6(%arg0: i32) -> (i32, i32) {
    %c0_i32 = arith.constant 0 : i32
    %c0_i32_0 = arith.constant 0 : i32
    %c0_i32_1 = arith.constant 0 : i32
    return %c0_i32, %c0_i32_0 : i32, i32
  }
  func.func @transform_7(%arg0: i32) -> (i32, i32, i32) {
    %c0_i32 = arith.constant 0 : i32
    %c0_i32_0 = arith.constant 0 : i32
    %c0_i32_1 = arith.constant 0 : i32
    return %arg0, %c0_i32, %c0_i32_0 : i32, i32, i32
  }
  func.func @transform_8(%arg0: i32) -> (i32, i32) {
    %c0_i32 = arith.constant 0 : i32
    %c0_i32_0 = arith.constant 0 : i32
    return %arg0, %c0_i32 : i32, i32
  }
  func.func @transform_9(%arg0: i32) -> (i32, i32) {
    %c0_i32 = arith.constant 0 : i32
    %c0_i32_0 = arith.constant 0 : i32
    return %arg0, %c0_i32 : i32, i32
  }
}

</mosaic_0001>

<llo_original>
// kernel: epoch_encoder_forward.2
$region0: #{epoch_encoder_forward.2}
  #allocation0 [shape = 'u32[]', space=smem, size = 0x4, offset = 0x4, fixed_abs, tag = 'smem constant byte address 0x4 - core index']
  #allocation1 [shape = 'u32[144,128]{1,0:T(1,128)}', space=vmem, size = 0x12000, scoped, tag = 'internal scratch']
  %s0 = inlined_call_operand.vmem [shape: f32[128,258], index: 0, kind: input, shape index: {}]
  %s1 = inlined_call_operand.vmem [shape: bf16[128,256], index: 1, kind: input, shape index: {}]
  %s2 = inlined_call_operand.vmem [shape: f32[1,256], index: 2, kind: input, shape index: {}]
  %s3 = inlined_call_operand.vmem [shape: f32[1,256], index: 3, kind: input, shape index: {}]
  %s4 = inlined_call_operand.vmem [shape: bf16[64,256], index: 4, kind: input, shape index: {}]
  %s5 = inlined_call_operand.vmem [shape: bf16[64,256], index: 5, kind: input, shape index: {}]
  %s6 = inlined_call_operand.vmem [shape: f32[1,256], index: 6, kind: input, shape index: {}]
  %s7 = inlined_call_operand.vmem [shape: bf16[64,256], index: 7, kind: input, shape index: {}]
  %s8 = inlined_call_operand.vmem [shape: bf16[64,128], index: 8, kind: input, shape index: {}]
  %s9 = inlined_call_operand.vmem [shape: f32[1,128], index: 9, kind: input, shape index: {}]
  %s10 = inlined_call_operand.vmem [shape: f32[1,128], index: 10, kind: input, shape index: {}]
  %s11 = inlined_call_operand.vmem [shape: f32[128,64], index: 11, kind: output, shape index: {}]
  %s12 = sld [smem:[#allocation0]]
  $region77: #{epoch_encoder_forward.2} parent=0
    _
  %s14 = ssub.s32 1, %s12
  %s15 = scalar_select 0, %s14, %s12
  loop: start=0, step=1, limit=4
  $region2: #{epoch_encoder_forward.2} parent=0 // loop_pre_header
    _
  $region3: #{epoch_encoder_forward.2} parent=0 // loop_header
    %s17 = sphi 0, %s21
    %p18 = scmp.ge.s32.totalorder %s17, 4
    %s27 = sphi 0, %s29
    %s30 = sphi 0, %s27
    %s31 = sphi 0, %s30
    %s47 = sphi 0, %s31
    %s51 = sphi 0, %s51
    %s53 = sphi 0, %s51
    %s54 = sphi 0, %s53
    %s68 = sphi 0, %s54
    %s72 = sphi 0, %s72
    %s74 = sphi 0, %s72
    %s75 = sphi 0, %s74
    %s89 = sphi 0, %s75
    %s93 = sphi 0, %s93
    %s95 = sphi 0, %s93
    %s96 = sphi 0, %s95
    %s110 = sphi 0, %s96
    %s114 = sphi 0, %s114
    %s116 = sphi 0, %s114
    %s117 = sphi 0, %s116
    %s131 = sphi 0, %s117
    %s135 = sphi 0, %s135
    %s137 = sphi 0, %s135
    %s138 = sphi 0, %s137
    %s152 = sphi 0, %s138
    %s156 = sphi 0, %s156
    %s158 = sphi 0, %s156
    %s159 = sphi 0, %s158
    %s173 = sphi 0, %s159
    %s177 = sphi 0, %s177
    %s179 = sphi 0, %s177
    %s180 = sphi 0, %s179
    %s194 = sphi 0, %s180
    %s198 = sphi 0, %s198
    %s200 = sphi 0, %s198
    %s201 = sphi 0, %s200
    %s215 = sphi 0, %s201
    %s219 = sphi 0, %s219
    %s221 = sphi 0, %s219
    %s222 = sphi 0, %s221
    %s236 = sphi 0, %s222
    %s240 = sphi 0, %s240
    %s242 = sphi 0, %s240
    %s243 = sphi 0, %s242
    %s257 = sphi 0, %s243
    %s263 = sphi 0, %s265
    %s266 = sphi 0, %s263
    %s267 = sphi 0, %s266
    %s283 = sphi 0, %s267
  $region4: #{epoch_encoder_forward.2} parent=0 // loop_header_branch
    %20 = sbr.rel (%p18) target = $region8
  $region5: #{epoch_encoder_forward.2} parent=0 // loop_body
    %s22 = ssub.s32 %s17, 1
    %s23 = ssub.s32 %s17, 2
    %s24 = sadd.s32 %s17, 1
    %s25 = ssub.s32 %s17, %s24
    %p26 = scmp.eq.s32.totalorder %s25, 0
    %s28 = sadd.s32 %s27, 1
    %s29 = scalar_select %p26, %s27, %s28
    %p32 = pneg %p26
    %p33 = scmp.eq.s32.totalorder %s17, 1
    %p34 = por %p32, %p33
    %p35 = scmp.ne.s32.totalorder %s27, %s30
    %p36 = scmp.eq.s32.totalorder %s17, 0
    %p37 = por %p35, %p36
    %p38 = scmp.ne.s32.totalorder %s27, %s30
    %p39 = scmp.eq.s32.totalorder %s22, 1
    %p40 = por %p38, %p39
    %p41 = scmp.ne.s32.totalorder %s30, %s31
    %p42 = scmp.eq.s32.totalorder %s22, 0
    %p43 = por %p41, %p42
    %p44 = scmp.ne.s32.totalorder %s30, %s31
    %p45 = scmp.eq.s32.totalorder %s23, 1
    %p46 = por %p44, %p45
    %p48 = scmp.ne.s32.totalorder %s31, %s47
    %p49 = scmp.eq.s32.totalorder %s23, 0
    %p50 = por %p48, %p49
    %s52 = sadd.s32 %s51, 1
    %p55 = scmp.eq.s32.totalorder %s17, 1
    %p56 = scmp.ne.s32.totalorder %s51, %s53
    %p57 = scmp.eq.s32.totalorder %s17, 0
    %p58 = por %p56, %p57
    %p59 = scmp.ne.s32.totalorder %s51, %s53
    %p60 = scmp.eq.s32.totalorder %s22, 1
    %p61 = por %p59, %p60
    %p62 = scmp.ne.s32.totalorder %s53, %s54
    %p63 = scmp.eq.s32.totalorder %s22, 0
    %p64 = por %p62, %p63
    %p65 = scmp.ne.s32.totalorder %s53, %s54
    %p66 = scmp.eq.s32.totalorder %s23, 1
    %p67 = por %p65, %p66
    %p69 = scmp.ne.s32.totalorder %s54, %s68
    %p70 = scmp.eq.s32.totalorder %s23, 0
    %p71 = por %p69, %p70
    %s73 = sadd.s32 %s72, 1
    %p76 = scmp.eq.s32.totalorder %s17, 1
    %p77 = scmp.ne.s32.totalorder %s72, %s74
    %p78 = scmp.eq.s32.totalorder %s17, 0
    %p79 = por %p77, %p78
    %p80 = scmp.ne.s32.totalorder %s72, %s74
    %p81 = scmp.eq.s32.totalorder %s22, 1
    %p82 = por %p80, %p81
    %p83 = scmp.ne.s32.totalorder %s74, %s75
    %p84 = scmp.eq.s32.totalorder %s22, 0
    %p85 = por %p83, %p84
    %p86 = scmp.ne.s32.totalorder %s74, %s75
    %p87 = scmp.eq.s32.totalorder %s23, 1
    %p88 = por %p86, %p87
    %p90 = scmp.ne.s32.totalorder %s75, %s89
    %p91 = scmp.eq.s32.totalorder %s23, 0
    %p92 = por %p90, %p91
    %s94 = sadd.s32 %s93, 1
    %p97 = scmp.eq.s32.totalorder %s17, 1
    %p98 = scmp.ne.s32.totalorder %s93, %s95
    %p99 = scmp.eq.s32.totalorder %s17, 0
    %p100 = por %p98, %p99
    %p101 = scmp.ne.s32.totalorder %s93, %s95
    %p102 = scmp.eq.s32.totalorder %s22, 1
    %p103 = por %p101, %p102
    %p104 = scmp.ne.s32.totalorder %s95, %s96
    %p105 = scmp.eq.s32.totalorder %s22, 0
    %p106 = por %p104, %p105
    %p107 = scmp.ne.s32.totalorder %s95, %s96
    %p108 = scmp.eq.s32.totalorder %s23, 1
    %p109 = por %p107, %p108
    %p111 = scmp.ne.s32.totalorder %s96, %s110
    %p112 = scmp.eq.s32.totalorder %s23, 0
    %p113 = por %p111, %p112
    %s115 = sadd.s32 %s114, 1
    %p118 = scmp.eq.s32.totalorder %s17, 1
    %p119 = scmp.ne.s32.totalorder %s114, %s116
    %p120 = scmp.eq.s32.totalorder %s17, 0
    %p121 = por %p119, %p120
    %p122 = scmp.ne.s32.totalorder %s114, %s116
    %p123 = scmp.eq.s32.totalorder %s22, 1
    %p124 = por %p122, %p123
    %p125 = scmp.ne.s32.totalorder %s116, %s117
    %p126 = scmp.eq.s32.totalorder %s22, 0
    %p127 = por %p125, %p126
    %p128 = scmp.ne.s32.totalorder %s116, %s117
    %p129 = scmp.eq.s32.totalorder %s23, 1
    %p130 = por %p128, %p129
    %p132 = scmp.ne.s32.totalorder %s117, %s131
    %p133 = scmp.eq.s32.totalorder %s23, 0
    %p134 = por %p132, %p133
    %s136 = sadd.s32 %s135, 1
    %p139 = scmp.eq.s32.totalorder %s17, 1
    %p140 = scmp.ne.s32.totalorder %s135, %s137
    %p141 = scmp.eq.s32.totalorder %s17, 0
    %p142 = por %p140, %p141
    %p143 = scmp.ne.s32.totalorder %s135, %s137
    %p144 = scmp.eq.s32.totalorder %s22, 1
    %p145 = por %p143, %p144
    %p146 = scmp.ne.s32.totalorder %s137, %s138
    %p147 = scmp.eq.s32.totalorder %s22, 0
    %p148 = por %p146, %p147
    %p149 = scmp.ne.s32.totalorder %s137, %s138
    %p150 = scmp.eq.s32.totalorder %s23, 1
    %p151 = por %p149, %p150
    %p153 = scmp.ne.s32.totalorder %s138, %s152
    %p154 = scmp.eq.s32.totalorder %s23, 0
    %p155 = por %p153, %p154
    %s157 = sadd.s32 %s156, 1
    %p160 = scmp.eq.s32.totalorder %s17, 1
    %p161 = scmp.ne.s32.totalorder %s156, %s158
    %p162 = scmp.eq.s32.totalorder %s17, 0
    %p163 = por %p161, %p162
    %p164 = scmp.ne.s32.totalorder %s156, %s158
    %p165 = scmp.eq.s32.totalorder %s22, 1
    %p166 = por %p164, %p165
    %p167 = scmp.ne.s32.totalorder %s158, %s159
    %p168 = scmp.eq.s32.totalorder %s22, 0
    %p169 = por %p167, %p168
    %p170 = scmp.ne.s32.totalorder %s158, %s159
    %p171 = scmp.eq.s32.totalorder %s23, 1
    %p172 = por %p170, %p171
    %p174 = scmp.ne.s32.totalorder %s159, %s173
    %p175 = scmp.eq.s32.totalorder %s23, 0
    %p176 = por %p174, %p175
    %s178 = sadd.s32 %s177, 1
    %p181 = scmp.eq.s32.totalorder %s17, 1
    %p182 = scmp.ne.s32.totalorder %s177, %s179
    %p183 = scmp.eq.s32.totalorder %s17, 0
    %p184 = por %p182, %p183
    %p185 = scmp.ne.s32.totalorder %s177, %s179
    %p186 = scmp.eq.s32.totalorder %s22, 1
    %p187 = por %p185, %p186
    %p188 = scmp.ne.s32.totalorder %s179, %s180
    %p189 = scmp.eq.s32.totalorder %s22, 0
    %p190 = por %p188, %p189
    %p191 = scmp.ne.s32.totalorder %s179, %s180
    %p192 = scmp.eq.s32.totalorder %s23, 1
    %p193 = por %p191, %p192
    %p195 = scmp.ne.s32.totalorder %s180, %s194
    %p196 = scmp.eq.s32.totalorder %s23, 0
    %p197 = por %p195, %p196
    %s199 = sadd.s32 %s198, 1
    %p202 = scmp.eq.s32.totalorder %s17, 1
    %p203 = scmp.ne.s32.totalorder %s198, %s200
    %p204 = scmp.eq.s32.totalorder %s17, 0
    %p205 = por %p203, %p204
    %p206 = scmp.ne.s32.totalorder %s198, %s200
    %p207 = scmp.eq.s32.totalorder %s22, 1
    %p208 = por %p206, %p207
    %p209 = scmp.ne.s32.totalorder %s200, %s201
    %p210 = scmp.eq.s32.totalorder %s22, 0
    %p211 = por %p209, %p210
    %p212 = scmp.ne.s32.totalorder %s200, %s201
    %p213 = scmp.eq.s32.totalorder %s23, 1
    %p214 = por %p212, %p213
    %p216 = scmp.ne.s32.totalorder %s201, %s215
    %p217 = scmp.eq.s32.totalorder %s23, 0
    %p218 = por %p216, %p217
    %s220 = sadd.s32 %s219, 1
    %p223 = scmp.eq.s32.totalorder %s17, 1
    %p224 = scmp.ne.s32.totalorder %s219, %s221
    %p225 = scmp.eq.s32.totalorder %s17, 0
    %p226 = por %p224, %p225
    %p227 = scmp.ne.s32.totalorder %s219, %s221
    %p228 = scmp.eq.s32.totalorder %s22, 1
    %p229 = por %p227, %p228
    %p230 = scmp.ne.s32.totalorder %s221, %s222
    %p231 = scmp.eq.s32.totalorder %s22, 0
    %p232 = por %p230, %p231
    %p233 = scmp.ne.s32.totalorder %s221, %s222
    %p234 = scmp.eq.s32.totalorder %s23, 1
    %p235 = por %p233, %p234
    %p237 = scmp.ne.s32.totalorder %s222, %s236
    %p238 = scmp.eq.s32.totalorder %s23, 0
    %p239 = por %p237, %p238
    %s241 = sadd.s32 %s240, 1
    %p244 = scmp.eq.s32.totalorder %s17, 1
    %p245 = scmp.ne.s32.totalorder %s240, %s242
    %p246 = scmp.eq.s32.totalorder %s17, 0
    %p247 = por %p245, %p246
    %p248 = scmp.ne.s32.totalorder %s240, %s242
    %p249 = scmp.eq.s32.totalorder %s22, 1
    %p250 = por %p248, %p249
    %p251 = scmp.ne.s32.totalorder %s242, %s243
    %p252 = scmp.eq.s32.totalorder %s22, 0
    %p253 = por %p251, %p252
    %p254 = scmp.ne.s32.totalorder %s242, %s243
    %p255 = scmp.eq.s32.totalorder %s23, 1
    %p256 = por %p254, %p255
    %p258 = scmp.ne.s32.totalorder %s243, %s257
    %p259 = scmp.eq.s32.totalorder %s23, 0
    %p260 = por %p258, %p259
    %s261 = ssub.s32 %s17, %s24
    %p262 = scmp.eq.s32.totalorder %s261, 0
    %s264 = sadd.s32 %s263, 1
    %s265 = scalar_select %p262, %s263, %s264
    %p268 = pneg %p262
    %p269 = scmp.eq.s32.totalorder %s17, 1
    %p270 = por %p268, %p269
    %p271 = scmp.ne.s32.totalorder %s263, %s266
    %p272 = scmp.eq.s32.totalorder %s17, 0
    %p273 = por %p271, %p272
    %p274 = scmp.ne.s32.totalorder %s263, %s266
    %p275 = scmp.eq.s32.totalorder %s22, 1
    %p276 = por %p274, %p275
    %p277 = scmp.ne.s32.totalorder %s266, %s267
    %p278 = scmp.eq.s32.totalorder %s22, 0
    %p279 = por %p277, %p278
    %p280 = scmp.ne.s32.totalorder %s266, %s267
    %p281 = scmp.eq.s32.totalorder %s23, 1
    %p282 = por %p280, %p281
    %p284 = scmp.ne.s32.totalorder %s267, %s283
    %p285 = scmp.eq.s32.totalorder %s23, 0
    %p286 = por %p284, %p285
    %p287 = scmp.le.s32.totalorder 1, %s17
    %p288 = scmp.lt.s32.totalorder %s17, 3
    %p289 = pnand %p287, %p288
    %p290 = pneg %p289
    // Predicated region
    $region9: #{epoch_encoder_forward.2} parent=5 // pred_check
      _
    $region10: #{epoch_encoder_forward.2} parent=5 // pred_check_branch
      %292 = sbr.rel (%p289) target = $region12
    $region11: #{epoch_encoder_forward.2} parent=5 // pred_region
      %s293 = ssub.s32 %s17, 1
      // Predicated region
      $region13: #{epoch_encoder_forward.2} parent=11 // pred_check
        %p294 = pneg %p64
      $region14: #{epoch_encoder_forward.2} parent=11 // pred_check_branch
        %296 = sbr.rel (%p294) target = $region16
      $region15: #{epoch_encoder_forward.2} parent=11 // pred_region
        _
      $region16: #{epoch_encoder_forward.2} parent=11 // pred_fallthru
        _
      // Predicated region
      $region17: #{epoch_encoder_forward.2} parent=11 // pred_check
        %p297 = pneg %p85
      $region18: #{epoch_encoder_forward.2} parent=11 // pred_check_branch
        %299 = sbr.rel (%p297) target = $region20
      $region19: #{epoch_encoder_forward.2} parent=11 // pred_region
        _
      $region20: #{epoch_encoder_forward.2} parent=11 // pred_fallthru
        _
      // Predicated region
      $region21: #{epoch_encoder_forward.2} parent=11 // pred_check
        %p300 = pneg %p106
      $region22: #{epoch_encoder_forward.2} parent=11 // pred_check_branch
        %302 = sbr.rel (%p300) target = $region24
      $region23: #{epoch_encoder_forward.2} parent=11 // pred_region
        _
      $region24: #{epoch_encoder_forward.2} parent=11 // pred_fallthru
        _
      // Predicated region
      $region25: #{epoch_encoder_forward.2} parent=11 // pred_check
        %p303 = pneg %p127
      $region26: #{epoch_encoder_forward.2} parent=11 // pred_check_branch
        %305 = sbr.rel (%p303) target = $region28
      $region27: #{epoch_encoder_forward.2} parent=11 // pred_region
        _
      $region28: #{epoch_encoder_forward.2} parent=11 // pred_fallthru
        _
      // Predicated region
      $region29: #{epoch_encoder_forward.2} parent=11 // pred_check
        %p306 = pneg %p148
      $region30: #{epoch_encoder_forward.2} parent=11 // pred_check_branch
        %308 = sbr.rel (%p306) target = $region32
      $region31: #{epoch_encoder_forward.2} parent=11 // pred_region
        _
      $region32: #{epoch_encoder_forward.2} parent=11 // pred_fallthru
        _
      // Predicated region
      $region33: #{epoch_encoder_forward.2} parent=11 // pred_check
        %p309 = pneg %p169
      $region34: #{epoch_encoder_forward.2} parent=11 // pred_check_branch
        %311 = sbr.rel (%p309) target = $region36
      $region35: #{epoch_encoder_forward.2} parent=11 // pred_region
        _
      $region36: #{epoch_encoder_forward.2} parent=11 // pred_fallthru
        _
      // Predicated region
      $region37: #{epoch_encoder_forward.2} parent=11 // pred_check
        %p312 = pneg %p190
      $region38: #{epoch_encoder_forward.2} parent=11 // pred_check_branch
        %314 = sbr.rel (%p312) target = $region40
      $region39: #{epoch_encoder_forward.2} parent=11 // pred_region
        _
      $region40: #{epoch_encoder_forward.2} parent=11 // pred_fallthru
        _
      // Predicated region
      $region41: #{epoch_encoder_forward.2} parent=11 // pred_check
        %p315 = pneg %p211
      $region42: #{epoch_encoder_forward.2} parent=11 // pred_check_branch
        %317 = sbr.rel (%p315) target = $region44
      $region43: #{epoch_encoder_forward.2} parent=11 // pred_region
        _
      $region44: #{epoch_encoder_forward.2} parent=11 // pred_fallthru
        _
      // Predicated region
      $region45: #{epoch_encoder_forward.2} parent=11 // pred_check
        %p318 = pneg %p232
      $region46: #{epoch_encoder_forward.2} parent=11 // pred_check_branch
        %320 = sbr.rel (%p318) target = $region48
      $region47: #{epoch_encoder_forward.2} parent=11 // pred_region
        _
      $region48: #{epoch_encoder_forward.2} parent=11 // pred_fallthru
        _
      // Predicated region
      $region49: #{epoch_encoder_forward.2} parent=11 // pred_check
        %p321 = pneg %p253
      $region50: #{epoch_encoder_forward.2} parent=11 // pred_check_branch
        %323 = sbr.rel (%p321) target = $region52
      $region51: #{epoch_encoder_forward.2} parent=11 // pred_region
        _
      $region52: #{epoch_encoder_forward.2} parent=11 // pred_fallthru
        _
    $region12: #{epoch_encoder_forward.2} parent=5 // pred_fallthru
      _
    %p324 = scmp.lt.s32.totalorder %s17, 2
    // Predicated region
    $region53: #{epoch_encoder_forward.2} parent=5 // pred_check
      %p325 = pneg %p324
    $region54: #{epoch_encoder_forward.2} parent=5 // pred_check_branch
      %327 = sbr.rel (%p325) target = $region56
    $region55: #{epoch_encoder_forward.2} parent=5 // pred_region
      // Predicated region
      $region57: #{epoch_encoder_forward.2} parent=55 // pred_check
        %p328 = pneg %p37
      $region58: #{epoch_encoder_forward.2} parent=55 // pred_check_branch
        %330 = sbr.rel (%p328) target = $region60
      $region59: #{epoch_encoder_forward.2} parent=55 // pred_region
        %s331 = smul.u32 8, %s17
        %p332 = scmp.lt.s32.totalorder %s331, 15
        %s333 = scalar_select %p332, %s331, 15
        %s334 = smul.addr %s333, 3
        %s335 = smul.addr %s334, 8
        %s336 = scalar_lea.vmem %s0, %s335
        %s337 = smul.u32 8, %s17
      $region60: #{epoch_encoder_forward.2} parent=55 // pred_fallthru
        _
    $region56: #{epoch_encoder_forward.2} parent=5 // pred_fallthru
      _
    %p338 = scmp.le.s32.totalorder 1, %s17
    %p339 = scmp.lt.s32.totalorder %s17, 3
    %p340 = pnand %p338, %p339
    %p341 = pneg %p340
    // Predicated region
    $region61: #{epoch_encoder_forward.2} parent=5 // pred_check
      _
    $region62: #{epoch_encoder_forward.2} parent=5 // pred_check_branch
      %343 = sbr.rel (%p340) target = $region64
    $region63: #{epoch_encoder_forward.2} parent=5 // pred_region
      %s344 = ssub.s32 %s17, 1
      %s345 = smul.u32 8, %s22
      %p346 = scmp.lt.s32.totalorder %s345, 15
      %s347 = scalar_select %p346, %s345, 15
      %s348 = smul.addr %s347, 3
      %s349 = smul.addr %s348, 8
      %s350 = scalar_lea.vmem %s0, %s349
      %p351 = pneg %p43
      %p352 = pneg %p40
      %p353 = pneg %p64
      %p354 = pneg %p61
      %p355 = pneg %p85
      %p356 = pneg %p82
      %p357 = pneg %p106
      %p358 = pneg %p103
      %p359 = pneg %p127
      %p360 = pneg %p124
      %p361 = pneg %p148
      %p362 = pneg %p145
      %p363 = pneg %p169
      %p364 = pneg %p166
      %p365 = pneg %p190
      %p366 = pneg %p187
      %p367 = pneg %p211
      %p368 = pneg %p208
      %p369 = pneg %p232
      %p370 = pneg %p229
      %p371 = pneg %p253
      %p372 = pneg %p250
      %p373 = pneg %p279
      %p374 = pneg %p276
      %s375 = smul.u32 8, %s22
      %p376 = scmp.lt.s32.totalorder %s375, 15
      %s377 = scalar_select %p376, %s375, 15
      %s378 = smul.addr %s377, 8
      %s379 = scalar_lea.vmem %s11, %s378
      %s380 = smul.u32 8, %s22
      %p381 = scmp.lt.s32.totalorder %s380, 15
      %s382 = scalar_select %p381, %s380, 15
      %s383 = smul.addr %s382, 3
      %s384 = smul.addr %s383, 8
      %s385 = scalar_lea.vmem %s0, %s384
      %s386 = smul.u32 8, %s22
      %s387 = smul.u32 8, %s22
      %p388 = scmp.lt.s32.totalorder %s387, 15
      %s389 = scalar_select %p388, %s387, 15
      %s390 = smul.addr %s389, 8
      %s391 = scalar_lea.vmem %s11, %s390
      %s392 = smul.u32 8, %s22
      %v394 = vlaneseq
      %v395 = vand.u32 %v394, 127
      %v396 = vadd.s32 %v395, 128
      %vm397 = vcmp.lt.s32.totalorder %v395, 0
      %v398 = vsub.s32 0, %v395
      %v399 = vsel %vm397, %v398, %v395
      %v400 = vshrl.u32 %v399, 6
      %v401 = vand.u32 %v399, 63
      %v402 = vsub.s32 0, %v401
      %v403 = vsel %vm397, %v402, %v401
      %vm404 = vcmp.lt.s32.totalorder %v396, 0
      %v405 = vsub.s32 0, %v396
      %v406 = vsel %vm404, %v405, %v396
      %v407 = vshrl.u32 %v406, 6
      %v408 = vand.u32 %v406, 63
      %v409 = vsub.s32 0, %v408
      %v410 = vsel %vm404, %v409, %v408
      %vm411 = vcmp.ne.s32.totalorder %v403, 0
      %vm412 = vcmp.ne.s32.totalorder %v410, 0
      %vm413 = vcmp.lt.s32.totalorder %v403, 0
      %vm414 = vcmp.lt.s32.totalorder %v410, 0
      %vm415 = vmand %vm413, %vm411
      %vm416 = vmand %vm414, %vm412
      %v417 = vadd.s32 %v403, 64
      %v418 = vadd.s32 %v410, 64
      %v419 = vsel %vm415, %v417, %v403
      %v420 = vsel %vm416, %v418, %v410
      %vm421 = vcmp.lt.s32.totalorder %v419, 32
      %vm422 = vcmp.lt.s32.totalorder %v420, 32
      %vm423 = vcmp.lt.s32.totalorder %v395, 32
      %v424 = vld [vmem:[%s385] sm:$0xff]
      %v425 = vld [vmem:[%s385 + $0x8] sm:$0xff]
      %v426 = vld [vmem:[%s385 + $0x10] sm:$0xff]
      %v427 = vld [vmem:[%s385 + $0x18] sm:$0xff]
      %v428 = vld [vmem:[%s385 + $0x20] sm:$0xff]
      %v429 = vld [vmem:[%s385 + $0x28] sm:$0xff]
      %v430 = vld [vmem:[%s385 + $0x30] sm:$0xff]
      %v431 = vld [vmem:[%s385 + $0x38] sm:$0xff]
      %v432 = vld [vmem:[%s385 + $0x40] sm:$0xff]
      %v433 = vld [vmem:[%s385 + $0x48] sm:$0xff]
      %v434 = vld [vmem:[%s385 + $0x50] sm:$0xff]
      %v435 = vld [vmem:[%s385 + $0x58] sm:$0xff]
      %v436 = vld [vmem:[%s385 + $0x60] sm:$0xff]
      %v437 = vld [vmem:[%s385 + $0x68] sm:$0xff]
      %v438 = vld [vmem:[%s385 + $0x70] sm:$0xff]
      %v439 = vld [vmem:[%s385 + $0x78] sm:$0xff]
      %v440 = vld [vmem:[%s385 + $0x80] sm:$0xff]
      %v441 = vld [vmem:[%s385 + $0x88] sm:$0xff]
      %v442 = vld [vmem:[%s385 + $0x90] sm:$0xff]
      %v443 = vld [vmem:[%s385 + $0x98] sm:$0xff]
      %v444 = vld [vmem:[%s385 + $0xa0] sm:$0xff]
      %v445 = vld [vmem:[%s385 + $0xa8] sm:$0xff]
      %v446 = vld [vmem:[%s385 + $0xb0] sm:$0xff]
      %v447 = vld [vmem:[%s385 + $0xb8] sm:$0xff]
      %v448 = vld [vmem:[%s1] sm:$0xff]
      %v449 = vld [vmem:[%s1 + $0x8] sm:$0xff]
      %v450 = vld [vmem:[%s1 + $0x10] sm:$0xff]
      %v451 = vld [vmem:[%s1 + $0x18] sm:$0xff]
      %v452 = vld [vmem:[%s1 + $0x20] sm:$0xff]
      %v453 = vld [vmem:[%s1 + $0x28] sm:$0xff]
      %v454 = vld [vmem:[%s1 + $0x30] sm:$0xff]
      %v455 = vld [vmem:[%s1 + $0x38] sm:$0xff]
      %v456 = vld [vmem:[%s1 + $0x40] sm:$0xff]
      %v457 = vld [vmem:[%s1 + $0x48] sm:$0xff]
      %v458 = vld [vmem:[%s1 + $0x50] sm:$0xff]
      %v459 = vld [vmem:[%s1 + $0x58] sm:$0xff]
      %v460 = vld [vmem:[%s1 + $0x60] sm:$0xff]
      %v461 = vld [vmem:[%s1 + $0x68] sm:$0xff]
      %v462 = vld [vmem:[%s1 + $0x70] sm:$0xff]
      %v463 = vld [vmem:[%s1 + $0x78] sm:$0xff]
      %v464 = vld [vmem:[%s2] sm:$0x3]
      %v465 = vld [vmem:[%s3] sm:$0x3]
      %v466 = vld [vmem:[%s4] sm:$0xff]
      %v467 = vld [vmem:[%s4 + $0x8] sm:$0xff]
      %v468 = vld [vmem:[%s4 + $0x10] sm:$0xff]
      %v469 = vld [vmem:[%s4 + $0x18] sm:$0xff]
      %v470 = vld [vmem:[%s4 + $0x20] sm:$0xff]
      %v471 = vld [vmem:[%s4 + $0x28] sm:$0xff]
      %v472 = vld [vmem:[%s4 + $0x30] sm:$0xff]
      %v473 = vld [vmem:[%s4 + $0x38] sm:$0xff]
      %v474 = vld [vmem:[%s5] sm:$0xff]
      %v475 = vld [vmem:[%s5 + $0x8] sm:$0xff]
      %v476 = vld [vmem:[%s5 + $0x10] sm:$0xff]
      %v477 = vld [vmem:[%s5 + $0x18] sm:$0xff]
      %v478 = vld [vmem:[%s5 + $0x20] sm:$0xff]
      %v479 = vld [vmem:[%s5 + $0x28] sm:$0xff]
      %v480 = vld [vmem:[%s5 + $0x30] sm:$0xff]
      %v481 = vld [vmem:[%s5 + $0x38] sm:$0xff]
      %v482 = vld [vmem:[%s6] sm:$0x3]
      %v483 = vld [vmem:[%s7] sm:$0xff]
      %v484 = vld [vmem:[%s7 + $0x8] sm:$0xff]
      %v485 = vld [vmem:[%s7 + $0x10] sm:$0xff]
      %v486 = vld [vmem:[%s7 + $0x18] sm:$0xff]
      %v487 = vld [vmem:[%s7 + $0x20] sm:$0xff]
      %v488 = vld [vmem:[%s7 + $0x28] sm:$0xff]
      %v489 = vld [vmem:[%s7 + $0x30] sm:$0xff]
      %v490 = vld [vmem:[%s7 + $0x38] sm:$0xff]
      %v491 = vpack.c.bf16 %v427, %v424
      %v492 = vpack.c.bf16 %v433, %v430
      %v493 = vpack.c.bf16 %v439, %v436
      %v494 = vpack.c.bf16 %v445, %v442
      %496 = vset.pattern.permute.xlu0 0
      %497 = vperm.xlu0 %496, %v425
      %v498 = vpop.permute.xlu0 %497
      %501 = vset.pattern.permute.xlu0 0
      %502 = vperm.xlu0 %501, %v428
      %v503 = vpop.permute.xlu0 %502
      %506 = vset.pattern.permute.xlu0 0
      %507 = vperm.xlu0 %506, %v431
      %v508 = vpop.permute.xlu0 %507
      %511 = vset.pattern.permute.xlu0 0
      %512 = vperm.xlu0 %511, %v434
      %v513 = vpop.permute.xlu0 %512
      %516 = vset.pattern.permute.xlu0 0
      %517 = vperm.xlu0 %516, %v437
      %v518 = vpop.permute.xlu0 %517
      %521 = vset.pattern.permute.xlu0 0
      %522 = vperm.xlu0 %521, %v440
      %v523 = vpop.permute.xlu0 %522
      %526 = vset.pattern.permute.xlu0 0
      %527 = vperm.xlu0 %526, %v443
      %v528 = vpop.permute.xlu0 %527
      %531 = vset.pattern.permute.xlu0 0
      %532 = vperm.xlu0 %531, %v446
      %v533 = vpop.permute.xlu0 %532
      %v536 = vlaneseq
      %v537 = vshrl.u32 %v536, 7
      %v538 = vsub.s32 0, %v537
      %v539 = vrot.slane %v464, %v538
      %v540 = vlaneseq
      %v541 = vshrl.u32 %v540, 7
      %v542 = vsub.s32 1, %v541
      %v543 = vrot.slane %v464, %v542
      %v546 = vmul.f32 %v498, %v539
      %v547 = vmul.f32 %v498, %v543
      %v548 = vmul.f32 %v503, %v539
      %v549 = vmul.f32 %v503, %v543
      %v550 = vmul.f32 %v508, %v539
      %v551 = vmul.f32 %v508, %v543
      %v552 = vmul.f32 %v513, %v539
      %v553 = vmul.f32 %v513, %v543
      %v554 = vmul.f32 %v518, %v539
      %v555 = vmul.f32 %v518, %v543
      %v556 = vmul.f32 %v523, %v539
      %v557 = vmul.f32 %v523, %v543
      %v558 = vmul.f32 %v528, %v539
      %v559 = vmul.f32 %v528, %v543
      %v560 = vmul.f32 %v533, %v539
      %v561 = vmul.f32 %v533, %v543
      %v578 = vunpack.c.l.b16 %v448
      %v579 = vunpack.c.h.b16 %v448
      %v580 = vunpack.c.l.b16 %v449
      %v581 = vunpack.c.h.b16 %v449
      %v582 = vunpack.c.l.b16 %v450
      %v583 = vunpack.c.h.b16 %v450
      %v584 = vunpack.c.l.b16 %v451
      %v585 = vunpack.c.h.b16 %v451
      %v586 = vunpack.c.l.b16 %v452
      %v587 = vunpack.c.h.b16 %v452
      %v588 = vunpack.c.l.b16 %v453
      %v589 = vunpack.c.h.b16 %v453
      %v590 = vunpack.c.l.b16 %v454
      %v591 = vunpack.c.h.b16 %v454
      %v592 = vunpack.c.l.b16 %v455
      %v593 = vunpack.c.h.b16 %v455
      %v594 = vunpack.c.l.b16 %v456
      %v595 = vunpack.c.h.b16 %v456
      %v596 = vunpack.c.l.b16 %v457
      %v597 = vunpack.c.h.b16 %v457
      %v598 = vunpack.c.l.b16 %v458
      %v599 = vunpack.c.h.b16 %v458
      %v600 = vunpack.c.l.b16 %v459
      %v601 = vunpack.c.h.b16 %v459
      %v602 = vunpack.c.l.b16 %v460
      %v603 = vunpack.c.h.b16 %v460
      %v604 = vunpack.c.l.b16 %v461
      %v605 = vunpack.c.h.b16 %v461
      %v606 = vunpack.c.l.b16 %v462
      %v607 = vunpack.c.h.b16 %v462
      %v608 = vunpack.c.l.b16 %v463
      %v609 = vunpack.c.h.b16 %v463
      %v610 = vpack.c.b16 %v580, %v578
      %v611 = vpack.c.b16 %v581, %v579
      %v612 = vpack.c.b16 %v584, %v582
      %v613 = vpack.c.b16 %v585, %v583
      %v614 = vpack.c.b16 %v588, %v586
      %v615 = vpack.c.b16 %v589, %v587
      %v616 = vpack.c.b16 %v592, %v590
      %v617 = vpack.c.b16 %v593, %v591
      %v618 = vpack.c.b16 %v596, %v594
      %v619 = vpack.c.b16 %v597, %v595
      %v620 = vpack.c.b16 %v600, %v598
      %v621 = vpack.c.b16 %v601, %v599
      %v622 = vpack.c.b16 %v604, %v602
      %v623 = vpack.c.b16 %v605, %v603
      %v624 = vpack.c.b16 %v608, %v606
      %v625 = vpack.c.b16 %v609, %v607
      %642 = vmatprep.subr.bf16.mxu0 %v611
      %643 = vmatpush1.bf16.msra.mxu0 %v610
      %644 = vmatprep.subr.bf16.mxu0 %v613
      %645 = vmatpush1.bf16.msra.mxu0 %v612
      %646 = vmatprep.subr.bf16.mxu0 %v615
      %647 = vmatpush1.bf16.msra.mxu0 %v614
      %648 = vmatprep.subr.bf16.mxu0 %v617
      %649 = vmatpush1.bf16.msra.mxu0 %v616
      %650 = vmatprep.subr.bf16.mxu0 %v619
      %651 = vmatpush1.bf16.msra.mxu0 %v618
      %652 = vmatprep.subr.bf16.mxu0 %v621
      %653 = vmatpush1.bf16.msra.mxu0 %v620
      %654 = vmatprep.subr.bf16.mxu0 %v623
      %655 = vmatpush1.bf16.msra.mxu0 %v622
      %656 = vmatprep.subr.bf16.mxu0 %v625
      %657 = vmatpush1.bf16.msra.mxu0 %v624
      %658 = vmatprep.subr.bf16.mxu0 0
      %659 = vmatpush1.bf16.msra.mxu0 0
      %660 = vmatprep.subr.bf16.mxu0 0
      %661 = vmatpush1.bf16.msra.mxu0 0
      %662 = vmatprep.subr.bf16.mxu0 0
      %663 = vmatpush1.bf16.msra.mxu0 0
      %664 = vmatprep.subr.bf16.mxu0 0
      %665 = vmatpush1.bf16.msra.mxu0 0
      %666 = vmatprep.subr.bf16.mxu0 0
      %667 = vmatpush1.bf16.msra.mxu0 0
      %668 = vmatprep.subr.bf16.mxu0 0
      %669 = vmatpush1.bf16.msra.mxu0 0
      %670 = vmatprep.subr.bf16.mxu0 0
      %671 = vmatpush1.bf16.msra.mxu0 0
      %672 = vmatprep.subr.bf16.mxu0 0
      %673 = vmatpush1.bf16.msra.mxu0 0
      %674 = vmatprep.mubr.bf16.mxu0 0
      %675 = vmatmul.mubr.bf16.gmra.mrb[0].mxu0 %v491
      %v676 = vpop.f32.mrb[0].mxu0
      %v677 = vadd.f32 %v546, %v676
      %v678 = vpop.f32.mrb[0].mxu0
      %v679 = vadd.f32 %v547, %v678
      %v680 = vpop.f32.mrb[0].mxu0
      %v681 = vadd.f32 %v548, %v680
      %v682 = vpop.f32.mrb[0].mxu0
      %v683 = vadd.f32 %v549, %v682
      %684 = vmatprep.mubr.bf16.mxu0 0
      %685 = vmatmul.mubr.bf16.gmra.mrb[0].mxu0 %v492
      %v686 = vpop.f32.mrb[0].mxu0
      %v687 = vadd.f32 %v550, %v686
      %v688 = vpop.f32.mrb[0].mxu0
      %v689 = vadd.f32 %v551, %v688
      %v690 = vpop.f32.mrb[0].mxu0
      %v691 = vadd.f32 %v552, %v690
      %v692 = vpop.f32.mrb[0].mxu0
      %v693 = vadd.f32 %v553, %v692
      %694 = vmatprep.mubr.bf16.mxu0 0
      %695 = vmatmul.mubr.bf16.gmra.mrb[0].mxu0 %v493
      %v696 = vpop.f32.mrb[0].mxu0
      %v697 = vadd.f32 %v554, %v696
      %v698 = vpop.f32.mrb[0].mxu0
      %v699 = vadd.f32 %v555, %v698
      %v700 = vpop.f32.mrb[0].mxu0
      %v701 = vadd.f32 %v556, %v700
      %v702 = vpop.f32.mrb[0].mxu0
      %v703 = vadd.f32 %v557, %v702
      %704 = vmatprep.mubr.bf16.mxu0 0
      %705 = vmatmul.mubr.bf16.gmra.mrb[0].mxu0 %v494
      %v706 = vpop.f32.mrb[0].mxu0
      %v707 = vadd.f32 %v558, %v706
      %v708 = vpop.f32.mrb[0].mxu0
      %v709 = vadd.f32 %v559, %v708
      %v710 = vpop.f32.mrb[0].mxu0
      %v711 = vadd.f32 %v560, %v710
      %v712 = vpop.f32.mrb[0].mxu0
      %v713 = vadd.f32 %v561, %v712
      %714 = vdwg.mxu0
      %v716 = vlaneseq
      %v717 = vshrl.u32 %v716, 7
      %v718 = vsub.s32 0, %v717
      %v719 = vrot.slane %v465, %v718
      %v720 = vlaneseq
      %v721 = vshrl.u32 %v720, 7
      %v722 = vsub.s32 1, %v721
      %v723 = vrot.slane %v465, %v722
      %v726 = vadd.f32 %v677, %v719
      %v727 = vadd.f32 %v679, %v723
      %v728 = vadd.f32 %v681, %v719
      %v729 = vadd.f32 %v683, %v723
      %v730 = vadd.f32 %v687, %v719
      %v731 = vadd.f32 %v689, %v723
      %v732 = vadd.f32 %v691, %v719
      %v733 = vadd.f32 %v693, %v723
      %v734 = vadd.f32 %v697, %v719
      %v735 = vadd.f32 %v699, %v723
      %v736 = vadd.f32 %v701, %v719
      %v737 = vadd.f32 %v703, %v723
      %v738 = vadd.f32 %v707, %v719
      %v739 = vadd.f32 %v709, %v723
      %v740 = vadd.f32 %v711, %v719
      %v741 = vadd.f32 %v713, %v723
      %v742 = vpack.c.bf16 %v428, %v425
      %v743 = vpack.c.bf16 %v429, %v426
      %v744 = vpack.c.bf16 %v434, %v431
      %v745 = vpack.c.bf16 %v435, %v432
      %v746 = vpack.c.bf16 %v440, %v437
      %v747 = vpack.c.bf16 %v441, %v438
      %v748 = vpack.c.bf16 %v446, %v443
      %v749 = vpack.c.bf16 %v447, %v444
      %751 = vset.pattern.permute.xlu0 1
      %752 = vperm.xlu0 %751, %v426
      %v753 = vpop.permute.xlu0 %752
      %756 = vset.pattern.permute.xlu0 1
      %757 = vperm.xlu0 %756, %v429
      %v758 = vpop.permute.xlu0 %757
      %761 = vset.pattern.permute.xlu0 1
      %762 = vperm.xlu0 %761, %v432
      %v763 = vpop.permute.xlu0 %762
      %766 = vset.pattern.permute.xlu0 1
      %767 = vperm.xlu0 %766, %v435
      %v768 = vpop.permute.xlu0 %767
      %771 = vset.pattern.permute.xlu0 1
      %772 = vperm.xlu0 %771, %v438
      %v773 = vpop.permute.xlu0 %772
      %776 = vset.pattern.permute.xlu0 1
      %777 = vperm.xlu0 %776, %v441
      %v778 = vpop.permute.xlu0 %777
      %781 = vset.pattern.permute.xlu0 1
      %782 = vperm.xlu0 %781, %v444
      %v783 = vpop.permute.xlu0 %782
      %786 = vset.pattern.permute.xlu0 1
      %787 = vperm.xlu0 %786, %v447
      %v788 = vpop.permute.xlu0 %787
      %v790 = vmul.f32 %v753, %v539
      %v791 = vmul.f32 %v753, %v543
      %v792 = vmul.f32 %v758, %v539
      %v793 = vmul.f32 %v758, %v543
      %v794 = vmul.f32 %v763, %v539
      %v795 = vmul.f32 %v763, %v543
      %v796 = vmul.f32 %v768, %v539
      %v797 = vmul.f32 %v768, %v543
      %v798 = vmul.f32 %v773, %v539
      %v799 = vmul.f32 %v773, %v543
      %v800 = vmul.f32 %v778, %v539
      %v801 = vmul.f32 %v778, %v543
      %v802 = vmul.f32 %v783, %v539
      %v803 = vmul.f32 %v783, %v543
      %v804 = vmul.f32 %v788, %v539
      %v805 = vmul.f32 %v788, %v543
      %814 = vrot.lane.b32.xlu0 %v742, 127
      %v815 = vpop.permute.xlu0 %814
      %816 = vrot.lane.b32.xlu0 %v743, 127
      %v817 = vpop.permute.xlu0 %816
      %818 = vrot.lane.b32.xlu0 %v744, 127
      %v819 = vpop.permute.xlu0 %818
      %820 = vrot.lane.b32.xlu0 %v745, 127
      %v821 = vpop.permute.xlu0 %820
      %822 = vrot.lane.b32.xlu0 %v746, 127
      %v823 = vpop.permute.xlu0 %822
      %824 = vrot.lane.b32.xlu0 %v747, 127
      %v825 = vpop.permute.xlu0 %824
      %826 = vrot.lane.b32.xlu0 %v748, 127
      %v827 = vpop.permute.xlu0 %826
      %828 = vrot.lane.b32.xlu0 %v749, 127
      %v829 = vpop.permute.xlu0 %828
      %vm830 = vcmask 1039360
      %v831 = vsel %vm830, %v815, %v817
      %v832 = vsel %vm830, %v819, %v821
      %v833 = vsel %vm830, %v823, %v825
      %v834 = vsel %vm830, %v827, %v829
      %839 = vmatprep.subr.bf16.mxu0 %v611
      %840 = vmatpush1.bf16.msra.mxu0 %v610
      %841 = vmatprep.subr.bf16.mxu0 %v613
      %842 = vmatpush1.bf16.msra.mxu0 %v612
      %843 = vmatprep.subr.bf16.mxu0 %v615
      %844 = vmatpush1.bf16.msra.mxu0 %v614
      %845 = vmatprep.subr.bf16.mxu0 %v617
      %846 = vmatpush1.bf16.msra.mxu0 %v616
      %847 = vmatprep.subr.bf16.mxu0 %v619
      %848 = vmatpush1.bf16.msra.mxu0 %v618
      %849 = vmatprep.subr.bf16.mxu0 %v621
      %850 = vmatpush1.bf16.msra.mxu0 %v620
      %851 = vmatprep.subr.bf16.mxu0 %v623
      %852 = vmatpush1.bf16.msra.mxu0 %v622
      %853 = vmatprep.subr.bf16.mxu0 %v625
      %854 = vmatpush1.bf16.msra.mxu0 %v624
      %855 = vmatprep.subr.bf16.mxu0 0
      %856 = vmatpush1.bf16.msra.mxu0 0
      %857 = vmatprep.subr.bf16.mxu0 0
      %858 = vmatpush1.bf16.msra.mxu0 0
      %859 = vmatprep.subr.bf16.mxu0 0
      %860 = vmatpush1.bf16.msra.mxu0 0
      %861 = vmatprep.subr.bf16.mxu0 0
      %862 = vmatpush1.bf16.msra.mxu0 0
      %863 = vmatprep.subr.bf16.mxu0 0
      %864 = vmatpush1.bf16.msra.mxu0 0
      %865 = vmatprep.subr.bf16.mxu0 0
      %866 = vmatpush1.bf16.msra.mxu0 0
      %867 = vmatprep.subr.bf16.mxu0 0
      %868 = vmatpush1.bf16.msra.mxu0 0
      %869 = vmatprep.subr.bf16.mxu0 0
      %870 = vmatpush1.bf16.msra.mxu0 0
      %871 = vmatprep.mubr.bf16.mxu0 0
      %872 = vmatmul.mubr.bf16.gmra.mrb[0].mxu0 %v831
      %v873 = vpop.f32.mrb[0].mxu0
      %v874 = vadd.f32 %v790, %v873
      %v875 = vpop.f32.mrb[0].mxu0
      %v876 = vadd.f32 %v791, %v875
      %v877 = vpop.f32.mrb[0].mxu0
      %v878 = vadd.f32 %v792, %v877
      %v879 = vpop.f32.mrb[0].mxu0
      %v880 = vadd.f32 %v793, %v879
      %881 = vmatprep.mubr.bf16.mxu0 0
      %882 = vmatmul.mubr.bf16.gmra.mrb[0].mxu0 %v832
      %v883 = vpop.f32.mrb[0].mxu0
      %v884 = vadd.f32 %v794, %v883
      %v885 = vpop.f32.mrb[0].mxu0
      %v886 = vadd.f32 %v795, %v885
      %v887 = vpop.f32.mrb[0].mxu0
      %v888 = vadd.f32 %v796, %v887
      %v889 = vpop.f32.mrb[0].mxu0
      %v890 = vadd.f32 %v797, %v889
      %891 = vmatprep.mubr.bf16.mxu0 0
      %892 = vmatmul.mubr.bf16.gmra.mrb[0].mxu0 %v833
      %v893 = vpop.f32.mrb[0].mxu0
      %v894 = vadd.f32 %v798, %v893
      %v895 = vpop.f32.mrb[0].mxu0
      %v896 = vadd.f32 %v799, %v895
      %v897 = vpop.f32.mrb[0].mxu0
      %v898 = vadd.f32 %v800, %v897
      %v899 = vpop.f32.mrb[0].mxu0
      %v900 = vadd.f32 %v801, %v899
      %901 = vmatprep.mubr.bf16.mxu0 0
      %902 = vmatmul.mubr.bf16.gmra.mrb[0].mxu0 %v834
      %v903 = vpop.f32.mrb[0].mxu0
      %v904 = vadd.f32 %v802, %v903
      %v905 = vpop.f32.mrb[0].mxu0
      %v906 = vadd.f32 %v803, %v905
      %v907 = vpop.f32.mrb[0].mxu0
      %v908 = vadd.f32 %v804, %v907
      %v909 = vpop.f32.mrb[0].mxu0
      %v910 = vadd.f32 %v805, %v909
      %911 = vdwg.mxu0
      %v912 = vadd.f32 %v874, %v719
      %v913 = vadd.f32 %v876, %v723
      %v914 = vadd.f32 %v878, %v719
      %v915 = vadd.f32 %v880, %v723
      %v916 = vadd.f32 %v884, %v719
      %v917 = vadd.f32 %v886, %v723
      %v918 = vadd.f32 %v888, %v719
      %v919 = vadd.f32 %v890, %v723
      %v920 = vadd.f32 %v894, %v719
      %v921 = vadd.f32 %v896, %v723
      %v922 = vadd.f32 %v898, %v719
      %v923 = vadd.f32 %v900, %v723
      %v924 = vadd.f32 %v904, %v719
      %v925 = vadd.f32 %v906, %v723
      %v926 = vadd.f32 %v908, %v719
      %v927 = vadd.f32 %v910, %v723
      %v928 = vsel %vm421, %v726, %v912
      %v929 = vsel %vm422, %v727, %v913
      %v930 = vsel %vm421, %v728, %v914
      %v931 = vsel %vm422, %v729, %v915
      %v932 = vsel %vm421, %v730, %v916
      %v933 = vsel %vm422, %v731, %v917
      %v934 = vsel %vm421, %v732, %v918
      %v935 = vsel %vm422, %v733, %v919
      %v936 = vsel %vm421, %v734, %v920
      %v937 = vsel %vm422, %v735, %v921
      %v938 = vsel %vm421, %v736, %v922
      %v939 = vsel %vm422, %v737, %v923
      %v940 = vsel %vm421, %v738, %v924
      %v941 = vsel %vm422, %v739, %v925
      %v942 = vsel %vm421, %v740, %v926
      %v943 = vsel %vm422, %v741, %v927
      %v944 = vxor.u32 %v928, 2147483648
      %v945 = vxor.u32 %v929, 2147483648
      %v946 = vxor.u32 %v930, 2147483648
      %v947 = vxor.u32 %v931, 2147483648
      %v948 = vxor.u32 %v932, 2147483648
      %v949 = vxor.u32 %v933, 2147483648
      %v950 = vxor.u32 %v934, 2147483648
      %v951 = vxor.u32 %v935, 2147483648
      %v952 = vxor.u32 %v936, 2147483648
      %v953 = vxor.u32 %v937, 2147483648
      %v954 = vxor.u32 %v938, 2147483648
      %v955 = vxor.u32 %v939, 2147483648
      %v956 = vxor.u32 %v940, 2147483648
      %v957 = vxor.u32 %v941, 2147483648
      %v958 = vxor.u32 %v942, 2147483648
      %v959 = vxor.u32 %v943, 2147483648
      %v960 = vmul.f32 %v944, 1.442695
      %v961 = vpow.pop %v960
      %v962 = vmul.f32 %v945, 1.442695
      %v963 = vpow.pop %v962
      %v964 = vmul.f32 %v946, 1.442695
      %v965 = vpow.pop %v964
      %v966 = vmul.f32 %v947, 1.442695
      %v967 = vpow.pop %v966
      %v968 = vmul.f32 %v948, 1.442695
      %v969 = vpow.pop %v968
      %v970 = vmul.f32 %v949, 1.442695
      %v971 = vpow.pop %v970
      %v972 = vmul.f32 %v950, 1.442695
      %v973 = vpow.pop %v972
      %v974 = vmul.f32 %v951, 1.442695
      %v975 = vpow.pop %v974
      %v976 = vmul.f32 %v952, 1.442695
      %v977 = vpow.pop %v976
      %v978 = vmul.f32 %v953, 1.442695
      %v979 = vpow.pop %v978
      %v980 = vmul.f32 %v954, 1.442695
      %v981 = vpow.pop %v980
      %v982 = vmul.f32 %v955, 1.442695
      %v983 = vpow.pop %v982
      %v984 = vmul.f32 %v956, 1.442695
      %v985 = vpow.pop %v984
      %v986 = vmul.f32 %v957, 1.442695
      %v987 = vpow.pop %v986
      %v988 = vmul.f32 %v958, 1.442695
      %v989 = vpow.pop %v988
      %v990 = vmul.f32 %v959, 1.442695
      %v991 = vpow.pop %v990
      %v992 = vadd.f32 %v961, 1.0
      %v993 = vadd.f32 %v963, 1.0
      %v994 = vadd.f32 %v965, 1.0
      %v995 = vadd.f32 %v967, 1.0
      %v996 = vadd.f32 %v969, 1.0
      %v997 = vadd.f32 %v971, 1.0
      %v998 = vadd.f32 %v973, 1.0
      %v999 = vadd.f32 %v975, 1.0
      %v1000 = vadd.f32 %v977, 1.0
      %v1001 = vadd.f32 %v979, 1.0
      %v1002 = vadd.f32 %v981, 1.0
      %v1003 = vadd.f32 %v983, 1.0
      %v1004 = vadd.f32 %v985, 1.0
      %v1005 = vadd.f32 %v987, 1.0
      %v1006 = vadd.f32 %v989, 1.0
      %v1007 = vadd.f32 %v991, 1.0
      %v1008 = vrcp.pop %v992
      %v1009 = vmul.f32 1.0, %v1008
      %v1010 = vrcp.pop %v993
      %v1011 = vmul.f32 1.0, %v1010
      %v1012 = vrcp.pop %v994
      %v1013 = vmul.f32 1.0, %v1012
      %v1014 = vrcp.pop %v995
      %v1015 = vmul.f32 1.0, %v1014
      %v1016 = vrcp.pop %v996
      %v1017 = vmul.f32 1.0, %v1016
      %v1018 = vrcp.pop %v997
      %v1019 = vmul.f32 1.0, %v1018
      %v1020 = vrcp.pop %v998
      %v1021 = vmul.f32 1.0, %v1020
      %v1022 = vrcp.pop %v999
      %v1023 = vmul.f32 1.0, %v1022
      %v1024 = vrcp.pop %v1000
      %v1025 = vmul.f32 1.0, %v1024
      %v1026 = vrcp.pop %v1001
      %v1027 = vmul.f32 1.0, %v1026
      %v1028 = vrcp.pop %v1002
      %v1029 = vmul.f32 1.0, %v1028
      %v1030 = vrcp.pop %v1003
      %v1031 = vmul.f32 1.0, %v1030
      %v1032 = vrcp.pop %v1004
      %v1033 = vmul.f32 1.0, %v1032
      %v1034 = vrcp.pop %v1005
      %v1035 = vmul.f32 1.0, %v1034
      %v1036 = vrcp.pop %v1006
      %v1037 = vmul.f32 1.0, %v1036
      %v1038 = vrcp.pop %v1007
      %v1039 = vmul.f32 1.0, %v1038
      %v1040 = vtanh.pop %v929
      %v1041 = vtanh.pop %v931
      %v1042 = vtanh.pop %v933
      %v1043 = vtanh.pop %v935
      %v1044 = vtanh.pop %v937
      %v1045 = vtanh.pop %v939
      %v1046 = vtanh.pop %v941
      %v1047 = vtanh.pop %v943
      %v1048 = vmul.f32 %v1009, 0.0
      %v1049 = vmul.f32 %v1013, 0.0
      %v1050 = vmul.f32 %v1017, 0.0
      %v1051 = vmul.f32 %v1021, 0.0
      %v1052 = vmul.f32 %v1025, 0.0
      %v1053 = vmul.f32 %v1029, 0.0
      %v1054 = vmul.f32 %v1033, 0.0
      %v1055 = vmul.f32 %v1037, 0.0
      %1064 = vrot.lane.b32.xlu0 %v1040, 64
      %v1065 = vpop.permute.xlu0 %1064
      %1066 = vrot.lane.b32.xlu0 %v1041, 64
      %v1067 = vpop.permute.xlu0 %1066
      %1068 = vrot.lane.b32.xlu0 %v1042, 64
      %v1069 = vpop.permute.xlu0 %1068
      %1070 = vrot.lane.b32.xlu0 %v1043, 64
      %v1071 = vpop.permute.xlu0 %1070
      %1072 = vrot.lane.b32.xlu0 %v1044, 64
      %v1073 = vpop.permute.xlu0 %1072
      %1074 = vrot.lane.b32.xlu0 %v1045, 64
      %v1075 = vpop.permute.xlu0 %1074
      %1076 = vrot.lane.b32.xlu0 %v1046, 64
      %v1077 = vpop.permute.xlu0 %1076
      %1078 = vrot.lane.b32.xlu0 %v1047, 64
      %v1079 = vpop.permute.xlu0 %1078
      %v1088 = vmul.f32 %v1009, %v1065
      %v1089 = vmul.f32 %v1013, %v1067
      %v1090 = vmul.f32 %v1017, %v1069
      %v1091 = vmul.f32 %v1021, %v1071
      %v1092 = vmul.f32 %v1025, %v1073
      %v1093 = vmul.f32 %v1029, %v1075
      %v1094 = vmul.f32 %v1033, %v1077
      %v1095 = vmul.f32 %v1037, %v1079
      %1104 = vrot.lane.b32.xlu0 %v1088, 64
      %v1105 = vpop.permute.xlu0 %1104
      %1106 = vrot.lane.b32.xlu0 %v1089, 64
      %v1107 = vpop.permute.xlu0 %1106
      %1108 = vrot.lane.b32.xlu0 %v1090, 64
      %v1109 = vpop.permute.xlu0 %1108
      %1110 = vrot.lane.b32.xlu0 %v1091, 64
      %v1111 = vpop.permute.xlu0 %1110
      %1112 = vrot.lane.b32.xlu0 %v1092, 64
      %v1113 = vpop.permute.xlu0 %1112
      %1114 = vrot.lane.b32.xlu0 %v1093, 64
      %v1115 = vpop.permute.xlu0 %1114
      %1116 = vrot.lane.b32.xlu0 %v1094, 64
      %v1117 = vpop.permute.xlu0 %1116
      %1118 = vrot.lane.b32.xlu0 %v1095, 64
      %v1119 = vpop.permute.xlu0 %1118
      %v1128 = vadd.f32 %v1048, %v1105
      %v1129 = vadd.f32 %v1049, %v1107
      %v1130 = vadd.f32 %v1050, %v1109
      %v1131 = vadd.f32 %v1051, %v1111
      %v1132 = vadd.f32 %v1052, %v1113
      %v1133 = vadd.f32 %v1053, %v1115
      %v1134 = vadd.f32 %v1054, %v1117
      %v1135 = vadd.f32 %v1055, %v1119
      %v1136 = vtanh.pop %v1128
      %v1137 = vtanh.pop %v1129
      %v1138 = vtanh.pop %v1130
      %v1139 = vtanh.pop %v1131
      %v1140 = vtanh.pop %v1132
      %v1141 = vtanh.pop %v1133
      %v1142 = vtanh.pop %v1134
      %v1143 = vtanh.pop %v1135
      %1152 = vrot.lane.b32.xlu0 %v1136, 64
      %v1153 = vpop.permute.xlu0 %1152
      %1154 = vrot.lane.b32.xlu0 %v1137, 64
      %v1155 = vpop.permute.xlu0 %1154
      %1156 = vrot.lane.b32.xlu0 %v1138, 64
      %v1157 = vpop.permute.xlu0 %1156
      %1158 = vrot.lane.b32.xlu0 %v1139, 64
      %v1159 = vpop.permute.xlu0 %1158
      %1160 = vrot.lane.b32.xlu0 %v1140, 64
      %v1161 = vpop.permute.xlu0 %1160
      %1162 = vrot.lane.b32.xlu0 %v1141, 64
      %v1163 = vpop.permute.xlu0 %1162
      %1164 = vrot.lane.b32.xlu0 %v1142, 64
      %v1165 = vpop.permute.xlu0 %1164
      %1166 = vrot.lane.b32.xlu0 %v1143, 64
      %v1167 = vpop.permute.xlu0 %1166
      %v1176 = vmul.f32 %v1011, %v1153
      %v1177 = vmul.f32 %v1015, %v1155
      %v1178 = vmul.f32 %v1019, %v1157
      %v1179 = vmul.f32 %v1023, %v1159
      %v1180 = vmul.f32 %v1027, %v1161
      %v1181 = vmul.f32 %v1031, %v1163
      %v1182 = vmul.f32 %v1035, %v1165
      %v1183 = vmul.f32 %v1039, %v1167
      %v1184 = vsel %vm421, %v912, %v726
      %v1185 = vsel %vm422, %v913, %v727
      %v1186 = vsel %vm421, %v914, %v728
      %v1187 = vsel %vm422, %v915, %v729
      %v1188 = vsel %vm421, %v916, %v730
      %v1189 = vsel %vm422, %v917, %v731
      %v1190 = vsel %vm421, %v918, %v732
      %v1191 = vsel %vm422, %v919, %v733
      %v1192 = vsel %vm421, %v920, %v734
      %v1193 = vsel %vm422, %v921, %v735
      %v1194 = vsel %vm421, %v922, %v736
      %v1195 = vsel %vm422, %v923, %v737
      %v1196 = vsel %vm421, %v924, %v738
      %v1197 = vsel %vm422, %v925, %v739
      %v1198 = vsel %vm421, %v926, %v740
      %v1199 = vsel %vm422, %v927, %v741
      %v1200 = vpack.c.bf16 %v1177, %v1176
      %v1201 = vpack.c.bf16 %v1179, %v1178
      %v1202 = vpack.c.bf16 %v1181, %v1180
      %v1203 = vpack.c.bf16 %v1183, %v1182
      %v1212 = vunpack.c.l.b16 %v466
      %v1213 = vunpack.c.h.b16 %v466
      %v1214 = vunpack.c.l.b16 %v467
      %v1215 = vunpack.c.h.b16 %v467
      %v1216 = vunpack.c.l.b16 %v468
      %v1217 = vunpack.c.h.b16 %v468
      %v1218 = vunpack.c.l.b16 %v469
      %v1219 = vunpack.c.h.b16 %v469
      %v1220 = vunpack.c.l.b16 %v470
      %v1221 = vunpack.c.h.b16 %v470
      %v1222 = vunpack.c.l.b16 %v471
      %v1223 = vunpack.c.h.b16 %v471
      %v1224 = vunpack.c.l.b16 %v472
      %v1225 = vunpack.c.h.b16 %v472
      %v1226 = vunpack.c.l.b16 %v473
      %v1227 = vunpack.c.h.b16 %v473
      %v1228 = vpack.c.b16 %v1214, %v1212
      %v1229 = vpack.c.b16 %v1215, %v1213
      %v1230 = vpack.c.b16 %v1218, %v1216
      %v1231 = vpack.c.b16 %v1219, %v1217
      %v1232 = vpack.c.b16 %v1222, %v1220
      %v1233 = vpack.c.b16 %v1223, %v1221
      %v1234 = vpack.c.b16 %v1226, %v1224
      %v1235 = vpack.c.b16 %v1227, %v1225
      %vm1244 = vcmask 523264
      %v1246 = vsel %vm1244, %v1200, 0
      %v1249 = vsel %vm1244, %v1201, 0
      %v1252 = vsel %vm1244, %v1202, 0
      %v1255 = vsel %vm1244, %v1203, 0
      %1257 = vmatprep.subr.bf16.mxu0 %v1229
      %1258 = vmatpush1.bf16.msra.mxu0 %v1228
      %1259 = vmatprep.subr.bf16.mxu0 %v1231
      %1260 = vmatpush1.bf16.msra.mxu0 %v1230
      %1261 = vmatprep.subr.bf16.mxu0 %v1233
      %1262 = vmatpush1.bf16.msra.mxu0 %v1232
      %1263 = vmatprep.subr.bf16.mxu0 %v1235
      %1264 = vmatpush1.bf16.msra.mxu0 %v1234
      %1265 = vmatprep.subr.bf16.mxu0 0
      %1266 = vmatpush1.bf16.msra.mxu0 0
      %1267 = vmatprep.subr.bf16.mxu0 0
      %1268 = vmatpush1.bf16.msra.mxu0 0
      %1269 = vmatprep.subr.bf16.mxu0 0
      %1270 = vmatpush1.bf16.msra.mxu0 0
      %1271 = vmatprep.subr.bf16.mxu0 0
      %1272 = vmatpush1.bf16.msra.mxu0 0
      %1273 = vmatprep.subr.bf16.mxu0 0
      %1274 = vmatpush1.bf16.msra.mxu0 0
      %1275 = vmatprep.subr.bf16.mxu0 0
      %1276 = vmatpush1.bf16.msra.mxu0 0
      %1277 = vmatprep.subr.bf16.mxu0 0
      %1278 = vmatpush1.bf16.msra.mxu0 0
      %1279 = vmatprep.subr.bf16.mxu0 0
      %1280 = vmatpush1.bf16.msra.mxu0 0
      %1281 = vmatprep.subr.bf16.mxu0 0
      %1282 = vmatpush1.bf16.msra.mxu0 0
      %1283 = vmatprep.subr.bf16.mxu0 0
      %1284 = vmatpush1.bf16.msra.mxu0 0
      %1285 = vmatprep.subr.bf16.mxu0 0
      %1286 = vmatpush1.bf16.msra.mxu0 0
      %1287 = vmatprep.subr.bf16.mxu0 0
      %1288 = vmatpush1.bf16.msra.mxu0 0
      %1289 = vmatprep.mubr.bf16.mxu0 0
      %1290 = vmatmul.mubr.bf16.gmra.mrb[0].mxu0 %v1246
      %v1291 = vpop.f32.mrb[0].mxu0
      %v1292 = vadd.f32 0.0, %v1291
      %v1293 = vpop.f32.mrb[0].mxu0
      %v1294 = vadd.f32 0.0, %v1293
      %v1295 = vpop.f32.mrb[0].mxu0
      %v1296 = vadd.f32 0.0, %v1295
      %v1297 = vpop.f32.mrb[0].mxu0
      %v1298 = vadd.f32 0.0, %v1297
      %1299 = vmatprep.mubr.bf16.mxu0 0
      %1300 = vmatmul.mubr.bf16.gmra.mrb[0].mxu0 %v1249
      %v1301 = vpop.f32.mrb[0].mxu0
      %v1302 = vadd.f32 0.0, %v1301
      %v1303 = vpop.f32.mrb[0].mxu0
      %v1304 = vadd.f32 0.0, %v1303
      %v1305 = vpop.f32.mrb[0].mxu0
      %v1306 = vadd.f32 0.0, %v1305
      %v1307 = vpop.f32.mrb[0].mxu0
      %v1308 = vadd.f32 0.0, %v1307
      %1309 = vmatprep.mubr.bf16.mxu0 0
      %1310 = vmatmul.mubr.bf16.gmra.mrb[0].mxu0 %v1252
      %v1311 = vpop.f32.mrb[0].mxu0
      %v1312 = vadd.f32 0.0, %v1311
      %v1313 = vpop.f32.mrb[0].mxu0
      %v1314 = vadd.f32 0.0, %v1313
      %v1315 = vpop.f32.mrb[0].mxu0
      %v1316 = vadd.f32 0.0, %v1315
      %v1317 = vpop.f32.mrb[0].mxu0
      %v1318 = vadd.f32 0.0, %v1317
      %1319 = vmatprep.mubr.bf16.mxu0 0
      %1320 = vmatmul.mubr.bf16.gmra.mrb[0].mxu0 %v1255
      %v1321 = vpop.f32.mrb[0].mxu0
      %v1322 = vadd.f32 0.0, %v1321
      %v1323 = vpop.f32.mrb[0].mxu0
      %v1324 = vadd.f32 0.0, %v1323
      %v1325 = vpop.f32.mrb[0].mxu0
      %v1326 = vadd.f32 0.0, %v1325
      %v1327 = vpop.f32.mrb[0].mxu0
      %v1328 = vadd.f32 0.0, %v1327
      %1329 = vdwg.mxu0
      %v1330 = vadd.f32 %v1184, %v1292
      %v1331 = vadd.f32 %v1185, %v1294
      %v1332 = vadd.f32 %v1186, %v1296
      %v1333 = vadd.f32 %v1187, %v1298
      %v1334 = vadd.f32 %v1188, %v1302
      %v1335 = vadd.f32 %v1189, %v1304
      %v1336 = vadd.f32 %v1190, %v1306
      %v1337 = vadd.f32 %v1191, %v1308
      %v1338 = vadd.f32 %v1192, %v1312
      %v1339 = vadd.f32 %v1193, %v1314
      %v1340 = vadd.f32 %v1194, %v1316
      %v1341 = vadd.f32 %v1195, %v1318
      %v1342 = vadd.f32 %v1196, %v1322
      %v1343 = vadd.f32 %v1197, %v1324
      %v1344 = vadd.f32 %v1198, %v1326
      %v1345 = vadd.f32 %v1199, %v1328
      %v1346 = vxor.u32 %v1330, 2147483648
      %v1347 = vxor.u32 %v1331, 2147483648
      %v1348 = vxor.u32 %v1332, 2147483648
      %v1349 = vxor.u32 %v1333, 2147483648
      %v1350 = vxor.u32 %v1334, 2147483648
      %v1351 = vxor.u32 %v1335, 2147483648
      %v1352 = vxor.u32 %v1336, 2147483648
      %v1353 = vxor.u32 %v1337, 2147483648
      %v1354 = vxor.u32 %v1338, 2147483648
      %v1355 = vxor.u32 %v1339, 2147483648
      %v1356 = vxor.u32 %v1340, 2147483648
      %v1357 = vxor.u32 %v1341, 2147483648
      %v1358 = vxor.u32 %v1342, 2147483648
      %v1359 = vxor.u32 %v1343, 2147483648
      %v1360 = vxor.u32 %v1344, 2147483648
      %v1361 = vxor.u32 %v1345, 2147483648
      %v1362 = vmul.f32 %v1346, 1.442695
      %v1363 = vpow.pop %v1362
      %v1364 = vmul.f32 %v1347, 1.442695
      %v1365 = vpow.pop %v1364
      %v1366 = vmul.f32 %v1348, 1.442695
      %v1367 = vpow.pop %v1366
      %v1368 = vmul.f32 %v1349, 1.442695
      %v1369 = vpow.pop %v1368
      %v1370 = vmul.f32 %v1350, 1.442695
      %v1371 = vpow.pop %v1370
      %v1372 = vmul.f32 %v1351, 1.442695
      %v1373 = vpow.pop %v1372
      %v1374 = vmul.f32 %v1352, 1.442695
      %v1375 = vpow.pop %v1374
      %v1376 = vmul.f32 %v1353, 1.442695
      %v1377 = vpow.pop %v1376
      %v1378 = vmul.f32 %v1354, 1.442695
      %v1379 = vpow.pop %v1378
      %v1380 = vmul.f32 %v1355, 1.442695
      %v1381 = vpow.pop %v1380
      %v1382 = vmul.f32 %v1356, 1.442695
      %v1383 = vpow.pop %v1382
      %v1384 = vmul.f32 %v1357, 1.442695
      %v1385 = vpow.pop %v1384
      %v1386 = vmul.f32 %v1358, 1.442695
      %v1387 = vpow.pop %v1386
      %v1388 = vmul.f32 %v1359, 1.442695
      %v1389 = vpow.pop %v1388
      %v1390 = vmul.f32 %v1360, 1.442695
      %v1391 = vpow.pop %v1390
      %v1392 = vmul.f32 %v1361, 1.442695
      %v1393 = vpow.pop %v1392
      %v1394 = vadd.f32 %v1363, 1.0
      %v1395 = vadd.f32 %v1365, 1.0
      %v1396 = vadd.f32 %v1367, 1.0
      %v1397 = vadd.f32 %v1369, 1.0
      %v1398 = vadd.f32 %v1371, 1.0
      %v1399 = vadd.f32 %v1373, 1.0
      %v1400 = vadd.f32 %v1375, 1.0
      %v1401 = vadd.f32 %v1377, 1.0
      %v1402 = vadd.f32 %v1379, 1.0
      %v1403 = vadd.f32 %v1381, 1.0
      %v1404 = vadd.f32 %v1383, 1.0
      %v1405 = vadd.f32 %v1385, 1.0
      %v1406 = vadd.f32 %v1387, 1.0
      %v1407 = vadd.f32 %v1389, 1.0
      %v1408 = vadd.f32 %v1391, 1.0
      %v1409 = vadd.f32 %v1393, 1.0
      %v1410 = vrcp.pop %v1394
      %v1411 = vmul.f32 1.0, %v1410
      %v1412 = vrcp.pop %v1395
      %v1413 = vmul.f32 1.0, %v1412
      %v1414 = vrcp.pop %v1396
      %v1415 = vmul.f32 1.0, %v1414
      %v1416 = vrcp.pop %v1397
      %v1417 = vmul.f32 1.0, %v1416
      %v1418 = vrcp.pop %v1398
      %v1419 = vmul.f32 1.0, %v1418
      %v1420 = vrcp.pop %v1399
      %v1421 = vmul.f32 1.0, %v1420
      %v1422 = vrcp.pop %v1400
      %v1423 = vmul.f32 1.0, %v1422
      %v1424 = vrcp.pop %v1401
      %v1425 = vmul.f32 1.0, %v1424
      %v1426 = vrcp.pop %v1402
      %v1427 = vmul.f32 1.0, %v1426
      %v1428 = vrcp.pop %v1403
      %v1429 = vmul.f32 1.0, %v1428
      %v1430 = vrcp.pop %v1404
      %v1431 = vmul.f32 1.0, %v1430
      %v1432 = vrcp.pop %v1405
      %v1433 = vmul.f32 1.0, %v1432
      %v1434 = vrcp.pop %v1406
      %v1435 = vmul.f32 1.0, %v1434
      %v1436 = vrcp.pop %v1407
      %v1437 = vmul.f32 1.0, %v1436
      %v1438 = vrcp.pop %v1408
      %v1439 = vmul.f32 1.0, %v1438
      %v1440 = vrcp.pop %v1409
      %v1441 = vmul.f32 1.0, %v1440
      %v1442 = vtanh.pop %v1331
      %v1443 = vtanh.pop %v1333
      %v1444 = vtanh.pop %v1335
      %v1445 = vtanh.pop %v1337
      %v1446 = vtanh.pop %v1339
      %v1447 = vtanh.pop %v1341
      %v1448 = vtanh.pop %v1343
      %v1449 = vtanh.pop %v1345
      %v1450 = vmul.f32 %v1411, %v1128
      %v1451 = vmul.f32 %v1415, %v1129
      %v1452 = vmul.f32 %v1419, %v1130
      %v1453 = vmul.f32 %v1423, %v1131
      %v1454 = vmul.f32 %v1427, %v1132
      %v1455 = vmul.f32 %v1431, %v1133
      %v1456 = vmul.f32 %v1435, %v1134
      %v1457 = vmul.f32 %v1439, %v1135
      %1466 = vrot.lane.b32.xlu0 %v1442, 64
      %v1467 = vpop.permute.xlu0 %1466
      %1468 = vrot.lane.b32.xlu0 %v1443, 64
      %v1469 = vpop.permute.xlu0 %1468
      %1470 = vrot.lane.b32.xlu0 %v1444, 64
      %v1471 = vpop.permute.xlu0 %1470
      %1472 = vrot.lane.b32.xlu0 %v1445, 64
      %v1473 = vpop.permute.xlu0 %1472
      %1474 = vrot.lane.b32.xlu0 %v1446, 64
      %v1475 = vpop.permute.xlu0 %1474
      %1476 = vrot.lane.b32.xlu0 %v1447, 64
      %v1477 = vpop.permute.xlu0 %1476
      %1478 = vrot.lane.b32.xlu0 %v1448, 64
      %v1479 = vpop.permute.xlu0 %1478
      %1480 = vrot.lane.b32.xlu0 %v1449, 64
      %v1481 = vpop.permute.xlu0 %1480
      %v1490 = vmul.f32 %v1411, %v1467
      %v1491 = vmul.f32 %v1415, %v1469
      %v1492 = vmul.f32 %v1419, %v1471
      %v1493 = vmul.f32 %v1423, %v1473
      %v1494 = vmul.f32 %v1427, %v1475
      %v1495 = vmul.f32 %v1431, %v1477
      %v1496 = vmul.f32 %v1435, %v1479
      %v1497 = vmul.f32 %v1439, %v1481
      %1506 = vrot.lane.b32.xlu0 %v1490, 64
      %v1507 = vpop.permute.xlu0 %1506
      %1508 = vrot.lane.b32.xlu0 %v1491, 64
      %v1509 = vpop.permute.xlu0 %1508
      %1510 = vrot.lane.b32.xlu0 %v1492, 64
      %v1511 = vpop.permute.xlu0 %1510
      %1512 = vrot.lane.b32.xlu0 %v1493, 64
      %v1513 = vpop.permute.xlu0 %1512
      %1514 = vrot.lane.b32.xlu0 %v1494, 64
      %v1515 = vpop.permute.xlu0 %1514
      %1516 = vrot.lane.b32.xlu0 %v1495, 64
      %v1517 = vpop.permute.xlu0 %1516
      %1518 = vrot.lane.b32.xlu0 %v1496, 64
      %v1519 = vpop.permute.xlu0 %1518
      %1520 = vrot.lane.b32.xlu0 %v1497, 64
      %v1521 = vpop.permute.xlu0 %1520
      %v1530 = vadd.f32 %v1450, %v1507
      %v1531 = vadd.f32 %v1451, %v1509
      %v1532 = vadd.f32 %v1452, %v1511
      %v1533 = vadd.f32 %v1453, %v1513
      %v1534 = vadd.f32 %v1454, %v1515
      %v1535 = vadd.f32 %v1455, %v1517
      %v1536 = vadd.f32 %v1456, %v1519
      %v1537 = vadd.f32 %v1457, %v1521
      %v1538 = vtanh.pop %v1530
      %v1539 = vtanh.pop %v1531
      %v1540 = vtanh.pop %v1532
      %v1541 = vtanh.pop %v1533
      %v1542 = vtanh.pop %v1534
      %v1543 = vtanh.pop %v1535
      %v1544 = vtanh.pop %v1536
      %v1545 = vtanh.pop %v1537
      %1554 = vrot.lane.b32.xlu0 %v1538, 64
      %v1555 = vpop.permute.xlu0 %1554
      %1556 = vrot.lane.b32.xlu0 %v1539, 64
      %v1557 = vpop.permute.xlu0 %1556
      %1558 = vrot.lane.b32.xlu0 %v1540, 64
      %v1559 = vpop.permute.xlu0 %1558
      %1560 = vrot.lane.b32.xlu0 %v1541, 64
      %v1561 = vpop.permute.xlu0 %1560
      %1562 = vrot.lane.b32.xlu0 %v1542, 64
      %v1563 = vpop.permute.xlu0 %1562
      %1564 = vrot.lane.b32.xlu0 %v1543, 64
      %v1565 = vpop.permute.xlu0 %1564
      %1566 = vrot.lane.b32.xlu0 %v1544, 64
      %v1567 = vpop.permute.xlu0 %1566
      %1568 = vrot.lane.b32.xlu0 %v1545, 64
      %v1569 = vpop.permute.xlu0 %1568
      %v1578 = vmul.f32 %v1413, %v1555
      %v1579 = vmul.f32 %v1417, %v1557
      %v1580 = vmul.f32 %v1421, %v1559
      %v1581 = vmul.f32 %v1425, %v1561
      %v1582 = vmul.f32 %v1429, %v1563
      %v1583 = vmul.f32 %v1433, %v1565
      %v1584 = vmul.f32 %v1437, %v1567
      %v1585 = vmul.f32 %v1441, %v1569
      %v1586 = vsel %vm423, %v1176, %v1578
      %v1587 = vsel %vm423, %v1177, %v1579
      %v1588 = vsel %vm423, %v1178, %v1580
      %v1589 = vsel %vm423, %v1179, %v1581
      %v1590 = vsel %vm423, %v1180, %v1582
      %v1591 = vsel %vm423, %v1181, %v1583
      %v1592 = vsel %vm423, %v1182, %v1584
      %v1593 = vsel %vm423, %v1183, %v1585
      %v1594 = vsel %vm423, %v1578, %v1176
      %v1595 = vsel %vm423, %v1579, %v1177
      %v1596 = vsel %vm423, %v1580, %v1178
      %v1597 = vsel %vm423, %v1581, %v1179
      %v1598 = vsel %vm423, %v1582, %v1180
      %v1599 = vsel %vm423, %v1583, %v1181
      %v1600 = vsel %vm423, %v1584, %v1182
      %v1601 = vsel %vm423, %v1585, %v1183
      %v1602 = vpack.c.bf16 %v1587, %v1586
      %v1603 = vpack.c.bf16 %v1589, %v1588
      %v1604 = vpack.c.bf16 %v1591, %v1590
      %v1605 = vpack.c.bf16 %v1593, %v1592
      %v1607 = vlaneseq
      %v1608 = vshrl.u32 %v1607, 7
      %v1609 = vsub.s32 0, %v1608
      %v1610 = vrot.slane %v482, %v1609
      %v1611 = vlaneseq
      %v1612 = vshrl.u32 %v1611, 7
      %v1613 = vsub.s32 1, %v1612
      %v1614 = vrot.slane %v482, %v1613
      %v1625 = vunpack.c.l.b16 %v474
      %v1626 = vunpack.c.h.b16 %v474
      %v1627 = vunpack.c.l.b16 %v475
      %v1628 = vunpack.c.h.b16 %v475
      %v1629 = vunpack.c.l.b16 %v476
      %v1630 = vunpack.c.h.b16 %v476
      %v1631 = vunpack.c.l.b16 %v477
      %v1632 = vunpack.c.h.b16 %v477
      %v1633 = vunpack.c.l.b16 %v478
      %v1634 = vunpack.c.h.b16 %v478
      %v1635 = vunpack.c.l.b16 %v479
      %v1636 = vunpack.c.h.b16 %v479
      %v1637 = vunpack.c.l.b16 %v480
      %v1638 = vunpack.c.h.b16 %v480
      %v1639 = vunpack.c.l.b16 %v481
      %v1640 = vunpack.c.h.b16 %v481
      %v1641 = vpack.c.b16 %v1627, %v1625
      %v1642 = vpack.c.b16 %v1628, %v1626
      %v1643 = vpack.c.b16 %v1631, %v1629
      %v1644 = vpack.c.b16 %v1632, %v1630
      %v1645 = vpack.c.b16 %v1635, %v1633
      %v1646 = vpack.c.b16 %v1636, %v1634
      %v1647 = vpack.c.b16 %v1639, %v1637
      %v1648 = vpack.c.b16 %v1640, %v1638
      %v1658 = vsel %vm1244, %v1602, 0
      %v1661 = vsel %vm1244, %v1603, 0
      %v1664 = vsel %vm1244, %v1604, 0
      %v1667 = vsel %vm1244, %v1605, 0
      %1669 = vmatprep.subr.bf16.mxu0 %v1642
      %1670 = vmatpush1.bf16.msra.mxu0 %v1641
      %1671 = vmatprep.subr.bf16.mxu0 %v1644
      %1672 = vmatpush1.bf16.msra.mxu0 %v1643
      %1673 = vmatprep.subr.bf16.mxu0 %v1646
      %1674 = vmatpush1.bf16.msra.mxu0 %v1645
      %1675 = vmatprep.subr.bf16.mxu0 %v1648
      %1676 = vmatpush1.bf16.msra.mxu0 %v1647
      %1677 = vmatprep.subr.bf16.mxu0 0
      %1678 = vmatpush1.bf16.msra.mxu0 0
      %1679 = vmatprep.subr.bf16.mxu0 0
      %1680 = vmatpush1.bf16.msra.mxu0 0
      %1681 = vmatprep.subr.bf16.mxu0 0
      %1682 = vmatpush1.bf16.msra.mxu0 0
      %1683 = vmatprep.subr.bf16.mxu0 0
      %1684 = vmatpush1.bf16.msra.mxu0 0
      %1685 = vmatprep.subr.bf16.mxu0 0
      %1686 = vmatpush1.bf16.msra.mxu0 0
      %1687 = vmatprep.subr.bf16.mxu0 0
      %1688 = vmatpush1.bf16.msra.mxu0 0
      %1689 = vmatprep.subr.bf16.mxu0 0
      %1690 = vmatpush1.bf16.msra.mxu0 0
      %1691 = vmatprep.subr.bf16.mxu0 0
      %1692 = vmatpush1.bf16.msra.mxu0 0
      %1693 = vmatprep.subr.bf16.mxu0 0
      %1694 = vmatpush1.bf16.msra.mxu0 0
      %1695 = vmatprep.subr.bf16.mxu0 0
      %1696 = vmatpush1.bf16.msra.mxu0 0
      %1697 = vmatprep.subr.bf16.mxu0 0
      %1698 = vmatpush1.bf16.msra.mxu0 0
      %1699 = vmatprep.subr.bf16.mxu0 0
      %1700 = vmatpush1.bf16.msra.mxu0 0
      %1701 = vmatprep.mubr.bf16.mxu0 0
      %1702 = vmatmul.mubr.bf16.gmra.mrb[0].mxu0 %v1658
      %v1703 = vpop.f32.mrb[0].mxu0
      %v1704 = vadd.f32 %v1610, %v1703
      %v1705 = vpop.f32.mrb[0].mxu0
      %v1706 = vadd.f32 %v1614, %v1705
      %v1707 = vpop.f32.mrb[0].mxu0
      %v1708 = vadd.f32 %v1610, %v1707
      %v1709 = vpop.f32.mrb[0].mxu0
      %v1710 = vadd.f32 %v1614, %v1709
      %1711 = vmatprep.mubr.bf16.mxu0 0
      %1712 = vmatmul.mubr.bf16.gmra.mrb[0].mxu0 %v1661
      %v1713 = vpop.f32.mrb[0].mxu0
      %v1714 = vadd.f32 %v1610, %v1713
      %v1715 = vpop.f32.mrb[0].mxu0
      %v1716 = vadd.f32 %v1614, %v1715
      %v1717 = vpop.f32.mrb[0].mxu0
      %v1718 = vadd.f32 %v1610, %v1717
      %v1719 = vpop.f32.mrb[0].mxu0
      %v1720 = vadd.f32 %v1614, %v1719
      %1721 = vmatprep.mubr.bf16.mxu0 0
      %1722 = vmatmul.mubr.bf16.gmra.mrb[0].mxu0 %v1664
      %v1723 = vpop.f32.mrb[0].mxu0
      %v1724 = vadd.f32 %v1610, %v1723
      %v1725 = vpop.f32.mrb[0].mxu0
      %v1726 = vadd.f32 %v1614, %v1725
      %v1727 = vpop.f32.mrb[0].mxu0
      %v1728 = vadd.f32 %v1610, %v1727
      %v1729 = vpop.f32.mrb[0].mxu0
      %v1730 = vadd.f32 %v1614, %v1729
      %1731 = vmatprep.mubr.bf16.mxu0 0
      %1732 = vmatmul.mubr.bf16.gmra.mrb[0].mxu0 %v1667
      %v1733 = vpop.f32.mrb[0].mxu0
      %v1734 = vadd.f32 %v1610, %v1733
      %v1735 = vpop.f32.mrb[0].mxu0
      %v1736 = vadd.f32 %v1614, %v1735
      %v1737 = vpop.f32.mrb[0].mxu0
      %v1738 = vadd.f32 %v1610, %v1737
      %v1739 = vpop.f32.mrb[0].mxu0
      %v1740 = vadd.f32 %v1614, %v1739
      %1741 = vdwg.mxu0
      %v1742 = vpack.c.bf16 %v1595, %v1594
      %v1743 = vpack.c.bf16 %v1597, %v1596
      %v1744 = vpack.c.bf16 %v1599, %v1598
      %v1745 = vpack.c.bf16 %v1601, %v1600
      %v1747 = vsel %vm1244, %v1742, 0
      %v1750 = vsel %vm1244, %v1743, 0
      %v1753 = vsel %vm1244, %v1744, 0
      %v1756 = vsel %vm1244, %v1745, 0
      %1758 = vmatprep.subr.bf16.mxu0 %v1642
      %1759 = vmatpush1.bf16.msra.mxu0 %v1641
      %1760 = vmatprep.subr.bf16.mxu0 %v1644
      %1761 = vmatpush1.bf16.msra.mxu0 %v1643
      %1762 = vmatprep.subr.bf16.mxu0 %v1646
      %1763 = vmatpush1.bf16.msra.mxu0 %v1645
      %1764 = vmatprep.subr.bf16.mxu0 %v1648
      %1765 = vmatpush1.bf16.msra.mxu0 %v1647
      %1766 = vmatprep.subr.bf16.mxu0 0
      %1767 = vmatpush1.bf16.msra.mxu0 0
      %1768 = vmatprep.subr.bf16.mxu0 0
      %1769 = vmatpush1.bf16.msra.mxu0 0
      %1770 = vmatprep.subr.bf16.mxu0 0
      %1771 = vmatpush1.bf16.msra.mxu0 0
      %1772 = vmatprep.subr.bf16.mxu0 0
      %1773 = vmatpush1.bf16.msra.mxu0 0
      %1774 = vmatprep.subr.bf16.mxu0 0
      %1775 = vmatpush1.bf16.msra.mxu0 0
      %1776 = vmatprep.subr.bf16.mxu0 0
      %1777 = vmatpush1.bf16.msra.mxu0 0
      %1778 = vmatprep.subr.bf16.mxu0 0
      %1779 = vmatpush1.bf16.msra.mxu0 0
      %1780 = vmatprep.subr.bf16.mxu0 0
      %1781 = vmatpush1.bf16.msra.mxu0 0
      %1782 = vmatprep.subr.bf16.mxu0 0
      %1783 = vmatpush1.bf16.msra.mxu0 0
      %1784 = vmatprep.subr.bf16.mxu0 0
      %1785 = vmatpush1.bf16.msra.mxu0 0
      %1786 = vmatprep.subr.bf16.mxu0 0
      %1787 = vmatpush1.bf16.msra.mxu0 0
      %1788 = vmatprep.subr.bf16.mxu0 0
      %1789 = vmatpush1.bf16.msra.mxu0 0
      %1790 = vmatprep.mubr.bf16.mxu0 0
      %1791 = vmatmul.mubr.bf16.gmra.mrb[0].mxu0 %v1747
      %v1792 = vpop.f32.mrb[0].mxu0
      %v1793 = vadd.f32 %v1610, %v1792
      %v1794 = vpop.f32.mrb[0].mxu0
      %v1795 = vadd.f32 %v1614, %v1794
      %v1796 = vpop.f32.mrb[0].mxu0
      %v1797 = vadd.f32 %v1610, %v1796
      %v1798 = vpop.f32.mrb[0].mxu0
      %v1799 = vadd.f32 %v1614, %v1798
      %1800 = vmatprep.mubr.bf16.mxu0 0
      %1801 = vmatmul.mubr.bf16.gmra.mrb[0].mxu0 %v1750
      %v1802 = vpop.f32.mrb[0].mxu0
      %v1803 = vadd.f32 %v1610, %v1802
      %v1804 = vpop.f32.mrb[0].mxu0
      %v1805 = vadd.f32 %v1614, %v1804
      %v1806 = vpop.f32.mrb[0].mxu0
      %v1807 = vadd.f32 %v1610, %v1806
      %v1808 = vpop.f32.mrb[0].mxu0
      %v1809 = vadd.f32 %v1614, %v1808
      %1810 = vmatprep.mubr.bf16.mxu0 0
      %1811 = vmatmul.mubr.bf16.gmra.mrb[0].mxu0 %v1753
      %v1812 = vpop.f32.mrb[0].mxu0
      %v1813 = vadd.f32 %v1610, %v1812
      %v1814 = vpop.f32.mrb[0].mxu0
      %v1815 = vadd.f32 %v1614, %v1814
      %v1816 = vpop.f32.mrb[0].mxu0
      %v1817 = vadd.f32 %v1610, %v1816
      %v1818 = vpop.f32.mrb[0].mxu0
      %v1819 = vadd.f32 %v1614, %v1818
      %1820 = vmatprep.mubr.bf16.mxu0 0
      %1821 = vmatmul.mubr.bf16.gmra.mrb[0].mxu0 %v1756
      %v1822 = vpop.f32.mrb[0].mxu0
      %v1823 = vadd.f32 %v1610, %v1822
      %v1824 = vpop.f32.mrb[0].mxu0
      %v1825 = vadd.f32 %v1614, %v1824
      %v1826 = vpop.f32.mrb[0].mxu0
      %v1827 = vadd.f32 %v1610, %v1826
      %v1828 = vpop.f32.mrb[0].mxu0
      %v1829 = vadd.f32 %v1614, %v1828
      %1830 = vdwg.mxu0
      %v1831 = vsel %vm421, %v1704, %v1793
      %v1832 = vsel %vm422, %v1706, %v1795
      %v1833 = vsel %vm421, %v1708, %v1797
      %v1834 = vsel %vm422, %v1710, %v1799
      %v1835 = vsel %vm421, %v1714, %v1803
      %v1836 = vsel %vm422, %v1716, %v1805
      %v1837 = vsel %vm421, %v1718, %v1807
      %v1838 = vsel %vm422, %v1720, %v1809
      %v1839 = vsel %vm421, %v1724, %v1813
      %v1840 = vsel %vm422, %v1726, %v1815
      %v1841 = vsel %vm421, %v1728, %v1817
      %v1842 = vsel %vm422, %v1730, %v1819
      %v1843 = vsel %vm421, %v1734, %v1823
      %v1844 = vsel %vm422, %v1736, %v1825
      %v1845 = vsel %vm421, %v1738, %v1827
      %v1846 = vsel %vm422, %v1740, %v1829
      %v1847 = vxor.u32 %v1831, 2147483648
      %v1848 = vxor.u32 %v1832, 2147483648
      %v1849 = vxor.u32 %v1833, 2147483648
      %v1850 = vxor.u32 %v1834, 2147483648
      %v1851 = vxor.u32 %v1835, 2147483648
      %v1852 = vxor.u32 %v1836, 2147483648
      %v1853 = vxor.u32 %v1837, 2147483648
      %v1854 = vxor.u32 %v1838, 2147483648
      %v1855 = vxor.u32 %v1839, 2147483648
      %v1856 = vxor.u32 %v1840, 2147483648
      %v1857 = vxor.u32 %v1841, 2147483648
      %v1858 = vxor.u32 %v1842, 2147483648
      %v1859 = vxor.u32 %v1843, 2147483648
      %v1860 = vxor.u32 %v1844, 2147483648
      %v1861 = vxor.u32 %v1845, 2147483648
      %v1862 = vxor.u32 %v1846, 2147483648
      %v1863 = vmul.f32 %v1847, 1.442695
      %v1864 = vpow.pop %v1863
      %v1865 = vmul.f32 %v1848, 1.442695
      %v1866 = vpow.pop %v1865
      %v1867 = vmul.f32 %v1849, 1.442695
      %v1868 = vpow.pop %v1867
      %v1869 = vmul.f32 %v1850, 1.442695
      %v1870 = vpow.pop %v1869
      %v1871 = vmul.f32 %v1851, 1.442695
      %v1872 = vpow.pop %v1871
      %v1873 = vmul.f32 %v1852, 1.442695
      %v1874 = vpow.pop %v1873
      %v1875 = vmul.f32 %v1853, 1.442695
      %v1876 = vpow.pop %v1875
      %v1877 = vmul.f32 %v1854, 1.442695
      %v1878 = vpow.pop %v1877
      %v1879 = vmul.f32 %v1855, 1.442695
      %v1880 = vpow.pop %v1879
      %v1881 = vmul.f32 %v1856, 1.442695
      %v1882 = vpow.pop %v1881
      %v1883 = vmul.f32 %v1857, 1.442695
      %v1884 = vpow.pop %v1883
      %v1885 = vmul.f32 %v1858, 1.442695
      %v1886 = vpow.pop %v1885
      %v1887 = vmul.f32 %v1859, 1.442695
      %v1888 = vpow.pop %v1887
      %v1889 = vmul.f32 %v1860, 1.442695
      %v1890 = vpow.pop %v1889
      %v1891 = vmul.f32 %v1861, 1.442695
      %v1892 = vpow.pop %v1891
      %v1893 = vmul.f32 %v1862, 1.442695
      %v1894 = vpow.pop %v1893
      %v1895 = vadd.f32 %v1864, 1.0
      %v1896 = vadd.f32 %v1866, 1.0
      %v1897 = vadd.f32 %v1868, 1.0
      %v1898 = vadd.f32 %v1870, 1.0
      %v1899 = vadd.f32 %v1872, 1.0
      %v1900 = vadd.f32 %v1874, 1.0
      %v1901 = vadd.f32 %v1876, 1.0
      %v1902 = vadd.f32 %v1878, 1.0
      %v1903 = vadd.f32 %v1880, 1.0
      %v1904 = vadd.f32 %v1882, 1.0
      %v1905 = vadd.f32 %v1884, 1.0
      %v1906 = vadd.f32 %v1886, 1.0
      %v1907 = vadd.f32 %v1888, 1.0
      %v1908 = vadd.f32 %v1890, 1.0
      %v1909 = vadd.f32 %v1892, 1.0
      %v1910 = vadd.f32 %v1894, 1.0
      %v1911 = vrcp.pop %v1895
      %v1912 = vmul.f32 1.0, %v1911
      %v1913 = vrcp.pop %v1896
      %v1914 = vmul.f32 1.0, %v1913
      %v1915 = vrcp.pop %v1897
      %v1916 = vmul.f32 1.0, %v1915
      %v1917 = vrcp.pop %v1898
      %v1918 = vmul.f32 1.0, %v1917
      %v1919 = vrcp.pop %v1899
      %v1920 = vmul.f32 1.0, %v1919
      %v1921 = vrcp.pop %v1900
      %v1922 = vmul.f32 1.0, %v1921
      %v1923 = vrcp.pop %v1901
      %v1924 = vmul.f32 1.0, %v1923
      %v1925 = vrcp.pop %v1902
      %v1926 = vmul.f32 1.0, %v1925
      %v1927 = vrcp.pop %v1903
      %v1928 = vmul.f32 1.0, %v1927
      %v1929 = vrcp.pop %v1904
      %v1930 = vmul.f32 1.0, %v1929
      %v1931 = vrcp.pop %v1905
      %v1932 = vmul.f32 1.0, %v1931
      %v1933 = vrcp.pop %v1906
      %v1934 = vmul.f32 1.0, %v1933
      %v1935 = vrcp.pop %v1907
      %v1936 = vmul.f32 1.0, %v1935
      %v1937 = vrcp.pop %v1908
      %v1938 = vmul.f32 1.0, %v1937
      %v1939 = vrcp.pop %v1909
      %v1940 = vmul.f32 1.0, %v1939
      %v1941 = vrcp.pop %v1910
      %v1942 = vmul.f32 1.0, %v1941
      %v1943 = vtanh.pop %v1832
      %v1944 = vtanh.pop %v1834
      %v1945 = vtanh.pop %v1836
      %v1946 = vtanh.pop %v1838
      %v1947 = vtanh.pop %v1840
      %v1948 = vtanh.pop %v1842
      %v1949 = vtanh.pop %v1844
      %v1950 = vtanh.pop %v1846
      %v1951 = vmul.f32 %v1912, 0.0
      %v1952 = vmul.f32 %v1916, 0.0
      %v1953 = vmul.f32 %v1920, 0.0
      %v1954 = vmul.f32 %v1924, 0.0
      %v1955 = vmul.f32 %v1928, 0.0
      %v1956 = vmul.f32 %v1932, 0.0
      %v1957 = vmul.f32 %v1936, 0.0
      %v1958 = vmul.f32 %v1940, 0.0
      %1967 = vrot.lane.b32.xlu0 %v1943, 64
      %v1968 = vpop.permute.xlu0 %1967
      %1969 = vrot.lane.b32.xlu0 %v1944, 64
      %v1970 = vpop.permute.xlu0 %1969
      %1971 = vrot.lane.b32.xlu0 %v1945, 64
      %v1972 = vpop.permute.xlu0 %1971
      %1973 = vrot.lane.b32.xlu0 %v1946, 64
      %v1974 = vpop.permute.xlu0 %1973
      %1975 = vrot.lane.b32.xlu0 %v1947, 64
      %v1976 = vpop.permute.xlu0 %1975
      %1977 = vrot.lane.b32.xlu0 %v1948, 64
      %v1978 = vpop.permute.xlu0 %1977
      %1979 = vrot.lane.b32.xlu0 %v1949, 64
      %v1980 = vpop.permute.xlu0 %1979
      %1981 = vrot.lane.b32.xlu0 %v1950, 64
      %v1982 = vpop.permute.xlu0 %1981
      %v1991 = vmul.f32 %v1912, %v1968
      %v1992 = vmul.f32 %v1916, %v1970
      %v1993 = vmul.f32 %v1920, %v1972
      %v1994 = vmul.f32 %v1924, %v1974
      %v1995 = vmul.f32 %v1928, %v1976
      %v1996 = vmul.f32 %v1932, %v1978
      %v1997 = vmul.f32 %v1936, %v1980
      %v1998 = vmul.f32 %v1940, %v1982
      %2007 = vrot.lane.b32.xlu0 %v1991, 64
      %v2008 = vpop.permute.xlu0 %2007
      %2009 = vrot.lane.b32.xlu0 %v1992, 64
      %v2010 = vpop.permute.xlu0 %2009
      %2011 = vrot.lane.b32.xlu0 %v1993, 64
      %v2012 = vpop.permute.xlu0 %2011
      %2013 = vrot.lane.b32.xlu0 %v1994, 64
      %v2014 = vpop.permute.xlu0 %2013
      %2015 = vrot.lane.b32.xlu0 %v1995, 64
      %v2016 = vpop.permute.xlu0 %2015
      %2017 = vrot.lane.b32.xlu0 %v1996, 64
      %v2018 = vpop.permute.xlu0 %2017
      %2019 = vrot.lane.b32.xlu0 %v1997, 64
      %v2020 = vpop.permute.xlu0 %2019
      %2021 = vrot.lane.b32.xlu0 %v1998, 64
      %v2022 = vpop.permute.xlu0 %2021
      %v2031 = vadd.f32 %v1951, %v2008
      %v2032 = vadd.f32 %v1952, %v2010
      %v2033 = vadd.f32 %v1953, %v2012
      %v2034 = vadd.f32 %v1954, %v2014
      %v2035 = vadd.f32 %v1955, %v2016
      %v2036 = vadd.f32 %v1956, %v2018
      %v2037 = vadd.f32 %v1957, %v2020
      %v2038 = vadd.f32 %v1958, %v2022
      %v2039 = vtanh.pop %v2031
      %v2040 = vtanh.pop %v2032
      %v2041 = vtanh.pop %v2033
      %v2042 = vtanh.pop %v2034
      %v2043 = vtanh.pop %v2035
      %v2044 = vtanh.pop %v2036
      %v2045 = vtanh.pop %v2037
      %v2046 = vtanh.pop %v2038
      %2055 = vrot.lane.b32.xlu0 %v2039, 64
      %v2056 = vpop.permute.xlu0 %2055
      %2057 = vrot.lane.b32.xlu0 %v2040, 64
      %v2058 = vpop.permute.xlu0 %2057
      %2059 = vrot.lane.b32.xlu0 %v2041, 64
      %v2060 = vpop.permute.xlu0 %2059
      %2061 = vrot.lane.b32.xlu0 %v2042, 64
      %v2062 = vpop.permute.xlu0 %2061
      %2063 = vrot.lane.b32.xlu0 %v2043, 64
      %v2064 = vpop.permute.xlu0 %2063
      %2065 = vrot.lane.b32.xlu0 %v2044, 64
      %v2066 = vpop.permute.xlu0 %2065
      %2067 = vrot.lane.b32.xlu0 %v2045, 64
      %v2068 = vpop.permute.xlu0 %2067
      %2069 = vrot.lane.b32.xlu0 %v2046, 64
      %v2070 = vpop.permute.xlu0 %2069
      %v2079 = vmul.f32 %v1914, %v2056
      %v2080 = vmul.f32 %v1918, %v2058
      %v2081 = vmul.f32 %v1922, %v2060
      %v2082 = vmul.f32 %v1926, %v2062
      %v2083 = vmul.f32 %v1930, %v2064
      %v2084 = vmul.f32 %v1934, %v2066
      %v2085 = vmul.f32 %v1938, %v2068
      %v2086 = vmul.f32 %v1942, %v2070
      %v2087 = vsel %vm421, %v1793, %v1704
      %v2088 = vsel %vm422, %v1795, %v1706
      %v2089 = vsel %vm421, %v1797, %v1708
      %v2090 = vsel %vm422, %v1799, %v1710
      %v2091 = vsel %vm421, %v1803, %v1714
      %v2092 = vsel %vm422, %v1805, %v1716
      %v2093 = vsel %vm421, %v1807, %v1718
      %v2094 = vsel %vm422, %v1809, %v1720
      %v2095 = vsel %vm421, %v1813, %v1724
      %v2096 = vsel %vm422, %v1815, %v1726
      %v2097 = vsel %vm421, %v1817, %v1728
      %v2098 = vsel %vm422, %v1819, %v1730
      %v2099 = vsel %vm421, %v1823, %v1734
      %v2100 = vsel %vm422, %v1825, %v1736
      %v2101 = vsel %vm421, %v1827, %v1738
      %v2102 = vsel %vm422, %v1829, %v1740
      %v2103 = vpack.c.bf16 %v2080, %v2079
      %v2104 = vpack.c.bf16 %v2082, %v2081
      %v2105 = vpack.c.bf16 %v2084, %v2083
      %v2106 = vpack.c.bf16 %v2086, %v2085
      %v2115 = vunpack.c.l.b16 %v483
      %v2116 = vunpack.c.h.b16 %v483
      %v2117 = vunpack.c.l.b16 %v484
      %v2118 = vunpack.c.h.b16 %v484
      %v2119 = vunpack.c.l.b16 %v485
      %v2120 = vunpack.c.h.b16 %v485
      %v2121 = vunpack.c.l.b16 %v486
      %v2122 = vunpack.c.h.b16 %v486
      %v2123 = vunpack.c.l.b16 %v487
      %v2124 = vunpack.c.h.b16 %v487
      %v2125 = vunpack.c.l.b16 %v488
      %v2126 = vunpack.c.h.b16 %v488
      %v2127 = vunpack.c.l.b16 %v489
      %v2128 = vunpack.c.h.b16 %v489
      %v2129 = vunpack.c.l.b16 %v490
      %v2130 = vunpack.c.h.b16 %v490
      %v2131 = vpack.c.b16 %v2117, %v2115
      %v2132 = vpack.c.b16 %v2118, %v2116
      %v2133 = vpack.c.b16 %v2121, %v2119
      %v2134 = vpack.c.b16 %v2122, %v2120
      %v2135 = vpack.c.b16 %v2125, %v2123
      %v2136 = vpack.c.b16 %v2126, %v2124
      %v2137 = vpack.c.b16 %v2129, %v2127
      %v2138 = vpack.c.b16 %v2130, %v2128
      %v2148 = vsel %vm1244, %v2103, 0
      %v2151 = vsel %vm1244, %v2104, 0
      %v2154 = vsel %vm1244, %v2105, 0
      %v2157 = vsel %vm1244, %v2106, 0
      %2159 = vmatprep.subr.bf16.mxu0 %v2132
      %2160 = vmatpush1.bf16.msra.mxu0 %v2131
      %2161 = vmatprep.subr.bf16.mxu0 %v2134
      %2162 = vmatpush1.bf16.msra.mxu0 %v2133
      %2163 = vmatprep.subr.bf16.mxu0 %v2136
      %2164 = vmatpush1.bf16.msra.mxu0 %v2135
      %2165 = vmatprep.subr.bf16.mxu0 %v2138
      %2166 = vmatpush1.bf16.msra.mxu0 %v2137
      %2167 = vmatprep.subr.bf16.mxu0 0
      %2168 = vmatpush1.bf16.msra.mxu0 0
      %2169 = vmatprep.subr.bf16.mxu0 0
      %2170 = vmatpush1.bf16.msra.mxu0 0
      %2171 = vmatprep.subr.bf16.mxu0 0
      %2172 = vmatpush1.bf16.msra.mxu0 0
      %2173 = vmatprep.subr.bf16.mxu0 0
      %2174 = vmatpush1.bf16.msra.mxu0 0
      %2175 = vmatprep.subr.bf16.mxu0 0
      %2176 = vmatpush1.bf16.msra.mxu0 0
      %2177 = vmatprep.subr.bf16.mxu0 0
      %2178 = vmatpush1.bf16.msra.mxu0 0
      %2179 = vmatprep.subr.bf16.mxu0 0
      %2180 = vmatpush1.bf16.msra.mxu0 0
      %2181 = vmatprep.subr.bf16.mxu0 0
      %2182 = vmatpush1.bf16.msra.mxu0 0
      %2183 = vmatprep.subr.bf16.mxu0 0
      %2184 = vmatpush1.bf16.msra.mxu0 0
      %2185 = vmatprep.subr.bf16.mxu0 0
      %2186 = vmatpush1.bf16.msra.mxu0 0
      %2187 = vmatprep.subr.bf16.mxu0 0
      %2188 = vmatpush1.bf16.msra.mxu0 0
      %2189 = vmatprep.subr.bf16.mxu0 0
      %2190 = vmatpush1.bf16.msra.mxu0 0
      %2191 = vmatprep.mubr.bf16.mxu0 0
      %2192 = vmatmul.mubr.bf16.gmra.mrb[0].mxu0 %v2148
      %v2193 = vpop.f32.mrb[0].mxu0
      %v2194 = vadd.f32 0.0, %v2193
      %v2195 = vpop.f32.mrb[0].mxu0
      %v2196 = vadd.f32 0.0, %v2195
      %v2197 = vpop.f32.mrb[0].mxu0
      %v2198 = vadd.f32 0.0, %v2197
      %v2199 = vpop.f32.mrb[0].mxu0
      %v2200 = vadd.f32 0.0, %v2199
      %2201 = vmatprep.mubr.bf16.mxu0 0
      %2202 = vmatmul.mubr.bf16.gmra.mrb[0].mxu0 %v2151
      %v2203 = vpop.f32.mrb[0].mxu0
      %v2204 = vadd.f32 0.0, %v2203
      %v2205 = vpop.f32.mrb[0].mxu0
      %v2206 = vadd.f32 0.0, %v2205
      %v2207 = vpop.f32.mrb[0].mxu0
      %v2208 = vadd.f32 0.0, %v2207
      %v2209 = vpop.f32.mrb[0].mxu0
      %v2210 = vadd.f32 0.0, %v2209
      %2211 = vmatprep.mubr.bf16.mxu0 0
      %2212 = vmatmul.mubr.bf16.gmra.mrb[0].mxu0 %v2154
      %v2213 = vpop.f32.mrb[0].mxu0
      %v2214 = vadd.f32 0.0, %v2213
      %v2215 = vpop.f32.mrb[0].mxu0
      %v2216 = vadd.f32 0.0, %v2215
      %v2217 = vpop.f32.mrb[0].mxu0
      %v2218 = vadd.f32 0.0, %v2217
      %v2219 = vpop.f32.mrb[0].mxu0
      %v2220 = vadd.f32 0.0, %v2219
      %2221 = vmatprep.mubr.bf16.mxu0 0
      %2222 = vmatmul.mubr.bf16.gmra.mrb[0].mxu0 %v2157
      %v2223 = vpop.f32.mrb[0].mxu0
      %v2224 = vadd.f32 0.0, %v2223
      %v2225 = vpop.f32.mrb[0].mxu0
      %v2226 = vadd.f32 0.0, %v2225
      %v2227 = vpop.f32.mrb[0].mxu0
      %v2228 = vadd.f32 0.0, %v2227
      %v2229 = vpop.f32.mrb[0].mxu0
      %v2230 = vadd.f32 0.0, %v2229
      %2231 = vdwg.mxu0
      %v2232 = vadd.f32 %v2087, %v2194
      %v2233 = vadd.f32 %v2088, %v2196
      %v2234 = vadd.f32 %v2089, %v2198
      %v2235 = vadd.f32 %v2090, %v2200
      %v2236 = vadd.f32 %v2091, %v2204
      %v2237 = vadd.f32 %v2092, %v2206
      %v2238 = vadd.f32 %v2093, %v2208
      %v2239 = vadd.f32 %v2094, %v2210
      %v2240 = vadd.f32 %v2095, %v2214
      %v2241 = vadd.f32 %v2096, %v2216
      %v2242 = vadd.f32 %v2097, %v2218
      %v2243 = vadd.f32 %v2098, %v2220
      %v2244 = vadd.f32 %v2099, %v2224
      %v2245 = vadd.f32 %v2100, %v2226
      %v2246 = vadd.f32 %v2101, %v2228
      %v2247 = vadd.f32 %v2102, %v2230
      %v2248 = vxor.u32 %v2232, 2147483648
      %v2249 = vxor.u32 %v2233, 2147483648
      %v2250 = vxor.u32 %v2234, 2147483648
      %v2251 = vxor.u32 %v2235, 2147483648
      %v2252 = vxor.u32 %v2236, 2147483648
      %v2253 = vxor.u32 %v2237, 2147483648
      %v2254 = vxor.u32 %v2238, 2147483648
      %v2255 = vxor.u32 %v2239, 2147483648
      %v2256 = vxor.u32 %v2240, 2147483648
      %v2257 = vxor.u32 %v2241, 2147483648
      %v2258 = vxor.u32 %v2242, 2147483648
      %v2259 = vxor.u32 %v2243, 2147483648
      %v2260 = vxor.u32 %v2244, 2147483648
      %v2261 = vxor.u32 %v2245, 2147483648
      %v2262 = vxor.u32 %v2246, 2147483648
      %v2263 = vxor.u32 %v2247, 2147483648
      %v2264 = vmul.f32 %v2248, 1.442695
      %v2265 = vpow.pop %v2264
      %v2266 = vmul.f32 %v2249, 1.442695
      %v2267 = vpow.pop %v2266
      %v2268 = vmul.f32 %v2250, 1.442695
      %v2269 = vpow.pop %v2268
      %v2270 = vmul.f32 %v2251, 1.442695
      %v2271 = vpow.pop %v2270
      %v2272 = vmul.f32 %v2252, 1.442695
      %v2273 = vpow.pop %v2272
      %v2274 = vmul.f32 %v2253, 1.442695
      %v2275 = vpow.pop %v2274
      %v2276 = vmul.f32 %v2254, 1.442695
      %v2277 = vpow.pop %v2276
      %v2278 = vmul.f32 %v2255, 1.442695
      %v2279 = vpow.pop %v2278
      %v2280 = vmul.f32 %v2256, 1.442695
      %v2281 = vpow.pop %v2280
      %v2282 = vmul.f32 %v2257, 1.442695
      %v2283 = vpow.pop %v2282
      %v2284 = vmul.f32 %v2258, 1.442695
      %v2285 = vpow.pop %v2284
      %v2286 = vmul.f32 %v2259, 1.442695
      %v2287 = vpow.pop %v2286
      %v2288 = vmul.f32 %v2260, 1.442695
      %v2289 = vpow.pop %v2288
      %v2290 = vmul.f32 %v2261, 1.442695
      %v2291 = vpow.pop %v2290
      %v2292 = vmul.f32 %v2262, 1.442695
      %v2293 = vpow.pop %v2292
      %v2294 = vmul.f32 %v2263, 1.442695
      %v2295 = vpow.pop %v2294
      %v2296 = vadd.f32 %v2265, 1.0
      %v2297 = vadd.f32 %v2267, 1.0
      %v2298 = vadd.f32 %v2269, 1.0
      %v2299 = vadd.f32 %v2271, 1.0
      %v2300 = vadd.f32 %v2273, 1.0
      %v2301 = vadd.f32 %v2275, 1.0
      %v2302 = vadd.f32 %v2277, 1.0
      %v2303 = vadd.f32 %v2279, 1.0
      %v2304 = vadd.f32 %v2281, 1.0
      %v2305 = vadd.f32 %v2283, 1.0
      %v2306 = vadd.f32 %v2285, 1.0
      %v2307 = vadd.f32 %v2287, 1.0
      %v2308 = vadd.f32 %v2289, 1.0
      %v2309 = vadd.f32 %v2291, 1.0
      %v2310 = vadd.f32 %v2293, 1.0
      %v2311 = vadd.f32 %v2295, 1.0
      %v2312 = vrcp.pop %v2296
      %v2313 = vmul.f32 1.0, %v2312
      %v2314 = vrcp.pop %v2297
      %v2315 = vmul.f32 1.0, %v2314
      %v2316 = vrcp.pop %v2298
      %v2317 = vmul.f32 1.0, %v2316
      %v2318 = vrcp.pop %v2299
      %v2319 = vmul.f32 1.0, %v2318
      %v2320 = vrcp.pop %v2300
      %v2321 = vmul.f32 1.0, %v2320
      %v2322 = vrcp.pop %v2301
      %v2323 = vmul.f32 1.0, %v2322
      %v2324 = vrcp.pop %v2302
      %v2325 = vmul.f32 1.0, %v2324
      %v2326 = vrcp.pop %v2303
      %v2327 = vmul.f32 1.0, %v2326
      %v2328 = vrcp.pop %v2304
      %v2329 = vmul.f32 1.0, %v2328
      %v2330 = vrcp.pop %v2305
      %v2331 = vmul.f32 1.0, %v2330
      %v2332 = vrcp.pop %v2306
      %v2333 = vmul.f32 1.0, %v2332
      %v2334 = vrcp.pop %v2307
      %v2335 = vmul.f32 1.0, %v2334
      %v2336 = vrcp.pop %v2308
      %v2337 = vmul.f32 1.0, %v2336
      %v2338 = vrcp.pop %v2309
      %v2339 = vmul.f32 1.0, %v2338
      %v2340 = vrcp.pop %v2310
      %v2341 = vmul.f32 1.0, %v2340
      %v2342 = vrcp.pop %v2311
      %v2343 = vmul.f32 1.0, %v2342
      %v2344 = vtanh.pop %v2233
      %v2345 = vtanh.pop %v2235
      %v2346 = vtanh.pop %v2237
      %v2347 = vtanh.pop %v2239
      %v2348 = vtanh.pop %v2241
      %v2349 = vtanh.pop %v2243
      %v2350 = vtanh.pop %v2245
      %v2351 = vtanh.pop %v2247
      %v2352 = vmul.f32 %v2313, %v2031
      %v2353 = vmul.f32 %v2317, %v2032
      %v2354 = vmul.f32 %v2321, %v2033
      %v2355 = vmul.f32 %v2325, %v2034
      %v2356 = vmul.f32 %v2329, %v2035
      %v2357 = vmul.f32 %v2333, %v2036
      %v2358 = vmul.f32 %v2337, %v2037
      %v2359 = vmul.f32 %v2341, %v2038
      %2368 = vrot.lane.b32.xlu0 %v2344, 64
      %v2369 = vpop.permute.xlu0 %2368
      %2370 = vrot.lane.b32.xlu0 %v2345, 64
      %v2371 = vpop.permute.xlu0 %2370
      %2372 = vrot.lane.b32.xlu0 %v2346, 64
      %v2373 = vpop.permute.xlu0 %2372
      %2374 = vrot.lane.b32.xlu0 %v2347, 64
      %v2375 = vpop.permute.xlu0 %2374
      %2376 = vrot.lane.b32.xlu0 %v2348, 64
      %v2377 = vpop.permute.xlu0 %2376
      %2378 = vrot.lane.b32.xlu0 %v2349, 64
      %v2379 = vpop.permute.xlu0 %2378
      %2380 = vrot.lane.b32.xlu0 %v2350, 64
      %v2381 = vpop.permute.xlu0 %2380
      %2382 = vrot.lane.b32.xlu0 %v2351, 64
      %v2383 = vpop.permute.xlu0 %2382
      %v2392 = vmul.f32 %v2313, %v2369
      %v2393 = vmul.f32 %v2317, %v2371
      %v2394 = vmul.f32 %v2321, %v2373
      %v2395 = vmul.f32 %v2325, %v2375
      %v2396 = vmul.f32 %v2329, %v2377
      %v2397 = vmul.f32 %v2333, %v2379
      %v2398 = vmul.f32 %v2337, %v2381
      %v2399 = vmul.f32 %v2341, %v2383
      %2408 = vrot.lane.b32.xlu0 %v2392, 64
      %v2409 = vpop.permute.xlu0 %2408
      %2410 = vrot.lane.b32.xlu0 %v2393, 64
      %v2411 = vpop.permute.xlu0 %2410
      %2412 = vrot.lane.b32.xlu0 %v2394, 64
      %v2413 = vpop.permute.xlu0 %2412
      %2414 = vrot.lane.b32.xlu0 %v2395, 64
      %v2415 = vpop.permute.xlu0 %2414
      %2416 = vrot.lane.b32.xlu0 %v2396, 64
      %v2417 = vpop.permute.xlu0 %2416
      %2418 = vrot.lane.b32.xlu0 %v2397, 64
      %v2419 = vpop.permute.xlu0 %2418
      %2420 = vrot.lane.b32.xlu0 %v2398, 64
      %v2421 = vpop.permute.xlu0 %2420
      %2422 = vrot.lane.b32.xlu0 %v2399, 64
      %v2423 = vpop.permute.xlu0 %2422
      %v2432 = vadd.f32 %v2352, %v2409
      %v2433 = vadd.f32 %v2353, %v2411
      %v2434 = vadd.f32 %v2354, %v2413
      %v2435 = vadd.f32 %v2355, %v2415
      %v2436 = vadd.f32 %v2356, %v2417
      %v2437 = vadd.f32 %v2357, %v2419
      %v2438 = vadd.f32 %v2358, %v2421
      %v2439 = vadd.f32 %v2359, %v2423
      %v2440 = vtanh.pop %v2432
      %v2441 = vtanh.pop %v2433
      %v2442 = vtanh.pop %v2434
      %v2443 = vtanh.pop %v2435
      %v2444 = vtanh.pop %v2436
      %v2445 = vtanh.pop %v2437
      %v2446 = vtanh.pop %v2438
      %v2447 = vtanh.pop %v2439
      %2456 = vrot.lane.b32.xlu0 %v2440, 64
      %v2457 = vpop.permute.xlu0 %2456
      %2458 = vrot.lane.b32.xlu0 %v2441, 64
      %v2459 = vpop.permute.xlu0 %2458
      %2460 = vrot.lane.b32.xlu0 %v2442, 64
      %v2461 = vpop.permute.xlu0 %2460
      %2462 = vrot.lane.b32.xlu0 %v2443, 64
      %v2463 = vpop.permute.xlu0 %2462
      %2464 = vrot.lane.b32.xlu0 %v2444, 64
      %v2465 = vpop.permute.xlu0 %2464
      %2466 = vrot.lane.b32.xlu0 %v2445, 64
      %v2467 = vpop.permute.xlu0 %2466
      %2468 = vrot.lane.b32.xlu0 %v2446, 64
      %v2469 = vpop.permute.xlu0 %2468
      %2470 = vrot.lane.b32.xlu0 %v2447, 64
      %v2471 = vpop.permute.xlu0 %2470
      %v2480 = vmul.f32 %v2315, %v2457
      %v2481 = vmul.f32 %v2319, %v2459
      %v2482 = vmul.f32 %v2323, %v2461
      %v2483 = vmul.f32 %v2327, %v2463
      %v2484 = vmul.f32 %v2331, %v2465
      %v2485 = vmul.f32 %v2335, %v2467
      %v2486 = vmul.f32 %v2339, %v2469
      %v2487 = vmul.f32 %v2343, %v2471
      %v2488 = vsel %vm423, %v2079, %v2480
      %v2489 = vsel %vm423, %v2080, %v2481
      %v2490 = vsel %vm423, %v2081, %v2482
      %v2491 = vsel %vm423, %v2082, %v2483
      %v2492 = vsel %vm423, %v2083, %v2484
      %v2493 = vsel %vm423, %v2084, %v2485
      %v2494 = vsel %vm423, %v2085, %v2486
      %v2495 = vsel %vm423, %v2086, %v2487
      %v2496 = vsel %vm423, %v2480, %v2079
      %v2497 = vsel %vm423, %v2481, %v2080
      %v2498 = vsel %vm423, %v2482, %v2081
      %v2499 = vsel %vm423, %v2483, %v2082
      %v2500 = vsel %vm423, %v2484, %v2083
      %v2501 = vsel %vm423, %v2485, %v2084
      %v2502 = vsel %vm423, %v2486, %v2085
      %v2503 = vsel %vm423, %v2487, %v2086
      %v2504 = vld [vmem:[%s8] sm:$0xf]
      %v2505 = vld [vmem:[%s8 + $0x4] sm:$0xf]
      %v2506 = vld [vmem:[%s8 + $0x8] sm:$0xf]
      %v2507 = vld [vmem:[%s8 + $0xc] sm:$0xf]
      %v2508 = vld [vmem:[%s8 + $0x10] sm:$0xf]
      %v2509 = vld [vmem:[%s8 + $0x14] sm:$0xf]
      %v2510 = vld [vmem:[%s8 + $0x18] sm:$0xf]
      %v2511 = vld [vmem:[%s8 + $0x1c] sm:$0xf]
      %v2512 = vld [vmem:[%s9] sm:$0x1]
      %v2513 = vld [vmem:[%s10] sm:$0x1]
      %v2514 = vpack.c.bf16 %v2489, %v2488
      %v2515 = vpack.c.bf16 %v2491, %v2490
      %v2516 = vpack.c.bf16 %v2493, %v2492
      %v2517 = vpack.c.bf16 %v2495, %v2494
      %v2519 = vlaneseq
      %v2520 = vshrl.u32 %v2519, 7
      %v2521 = vsub.s32 0, %v2520
      %v2522 = vrot.slane %v2512, %v2521
      %v2532 = vunpack.c.l.b16 %v2504
      %v2533 = vunpack.c.l.b16 %v2505
      %v2534 = vunpack.c.l.b16 %v2506
      %v2535 = vunpack.c.l.b16 %v2507
      %v2536 = vunpack.c.l.b16 %v2508
      %v2537 = vunpack.c.l.b16 %v2509
      %v2538 = vunpack.c.l.b16 %v2510
      %v2539 = vunpack.c.l.b16 %v2511
      %v2540 = vpack.c.b16 %v2533, %v2532
      %v2541 = vpack.c.b16 %v2535, %v2534
      %v2542 = vpack.c.b16 %v2537, %v2536
      %v2543 = vpack.c.b16 %v2539, %v2538
      %v2549 = vsel %vm1244, %v2514, 0
      %v2552 = vsel %vm1244, %v2515, 0
      %v2555 = vsel %vm1244, %v2516, 0
      %v2558 = vsel %vm1244, %v2517, 0
      %2560 = vmatprep.subr.bf16.mxu0 0
      %2561 = vmatpush1.bf16.msra.mxu0 %v2540
      %2562 = vmatprep.subr.bf16.mxu0 0
      %2563 = vmatpush1.bf16.msra.mxu0 %v2541
      %2564 = vmatprep.subr.bf16.mxu0 0
      %2565 = vmatpush1.bf16.msra.mxu0 %v2542
      %2566 = vmatprep.subr.bf16.mxu0 0
      %2567 = vmatpush1.bf16.msra.mxu0 %v2543
      %2568 = vmatprep.subr.bf16.mxu0 0
      %2569 = vmatpush1.bf16.msra.mxu0 0
      %2570 = vmatprep.subr.bf16.mxu0 0
      %2571 = vmatpush1.bf16.msra.mxu0 0
      %2572 = vmatprep.subr.bf16.mxu0 0
      %2573 = vmatpush1.bf16.msra.mxu0 0
      %2574 = vmatprep.subr.bf16.mxu0 0
      %2575 = vmatpush1.bf16.msra.mxu0 0
      %2576 = vmatprep.subr.bf16.mxu0 0
      %2577 = vmatpush1.bf16.msra.mxu0 0
      %2578 = vmatprep.subr.bf16.mxu0 0
      %2579 = vmatpush1.bf16.msra.mxu0 0
      %2580 = vmatprep.subr.bf16.mxu0 0
      %2581 = vmatpush1.bf16.msra.mxu0 0
      %2582 = vmatprep.subr.bf16.mxu0 0
      %2583 = vmatpush1.bf16.msra.mxu0 0
      %2584 = vmatprep.subr.bf16.mxu0 0
      %2585 = vmatpush1.bf16.msra.mxu0 0
      %2586 = vmatprep.subr.bf16.mxu0 0
      %2587 = vmatpush1.bf16.msra.mxu0 0
      %2588 = vmatprep.subr.bf16.mxu0 0
      %2589 = vmatpush1.bf16.msra.mxu0 0
      %2590 = vmatprep.subr.bf16.mxu0 0
      %2591 = vmatpush1.bf16.msra.mxu0 0
      %2592 = vmatprep.mubr.bf16.mxu0 0
      %2593 = vmatmul.mubr.bf16.gmra.mrb[0].mxu0 %v2549
      %v2594 = vpop.f32.mrb[0].mxu0
      %v2595 = vadd.f32 %v2522, %v2594
      %v2596 = vpop.f32.mrb[0].mxu0
      %v2597 = vpop.f32.mrb[0].mxu0
      %v2598 = vadd.f32 %v2522, %v2597
      %v2599 = vpop.f32.mrb[0].mxu0
      %2600 = vmatprep.mubr.bf16.mxu0 0
      %2601 = vmatmul.mubr.bf16.gmra.mrb[0].mxu0 %v2552
      %v2602 = vpop.f32.mrb[0].mxu0
      %v2603 = vadd.f32 %v2522, %v2602
      %v2604 = vpop.f32.mrb[0].mxu0
      %v2605 = vpop.f32.mrb[0].mxu0
      %v2606 = vadd.f32 %v2522, %v2605
      %v2607 = vpop.f32.mrb[0].mxu0
      %2608 = vmatprep.mubr.bf16.mxu0 0
      %2609 = vmatmul.mubr.bf16.gmra.mrb[0].mxu0 %v2555
      %v2610 = vpop.f32.mrb[0].mxu0
      %v2611 = vadd.f32 %v2522, %v2610
      %v2612 = vpop.f32.mrb[0].mxu0
      %v2613 = vpop.f32.mrb[0].mxu0
      %v2614 = vadd.f32 %v2522, %v2613
      %v2615 = vpop.f32.mrb[0].mxu0
      %2616 = vmatprep.mubr.bf16.mxu0 0
      %2617 = vmatmul.mubr.bf16.gmra.mrb[0].mxu0 %v2558
      %v2618 = vpop.f32.mrb[0].mxu0
      %v2619 = vadd.f32 %v2522, %v2618
      %v2620 = vpop.f32.mrb[0].mxu0
      %v2621 = vpop.f32.mrb[0].mxu0
      %v2622 = vadd.f32 %v2522, %v2621
      %v2623 = vpop.f32.mrb[0].mxu0
      %2624 = vdwg.mxu0
      %v2625 = vtanh.pop %v2595
      %v2626 = vtanh.pop %v2598
      %v2627 = vtanh.pop %v2603
      %v2628 = vtanh.pop %v2606
      %v2629 = vtanh.pop %v2611
      %v2630 = vtanh.pop %v2614
      %v2631 = vtanh.pop %v2619
      %v2632 = vtanh.pop %v2622
      %v2634 = vlaneseq
      %v2635 = vshrl.u32 %v2634, 7
      %v2636 = vsub.s32 0, %v2635
      %v2637 = vrot.slane %v2513, %v2636
      %v2639 = vmul.f32 %v2625, %v2637
      %v2640 = vmul.f32 %v2626, %v2637
      %v2641 = vmul.f32 %v2627, %v2637
      %v2642 = vmul.f32 %v2628, %v2637
      %v2643 = vmul.f32 %v2629, %v2637
      %v2644 = vmul.f32 %v2630, %v2637
      %v2645 = vmul.f32 %v2631, %v2637
      %v2646 = vmul.f32 %v2632, %v2637
      %2647 = vadd.xlane.f32.xlu0 %v2639
      %v2648 = vpop.xlane.xlu0 %2647
      %2649 = vadd.xlane.f32.xlu0 %v2640
      %v2650 = vpop.xlane.xlu0 %2649
      %2651 = vadd.xlane.f32.xlu0 %v2641
      %v2652 = vpop.xlane.xlu0 %2651
      %2653 = vadd.xlane.f32.xlu0 %v2642
      %v2654 = vpop.xlane.xlu0 %2653
      %2655 = vadd.xlane.f32.xlu0 %v2643
      %v2656 = vpop.xlane.xlu0 %2655
      %2657 = vadd.xlane.f32.xlu0 %v2644
      %v2658 = vpop.xlane.xlu0 %2657
      %2659 = vadd.xlane.f32.xlu0 %v2645
      %v2660 = vpop.xlane.xlu0 %2659
      %2661 = vadd.xlane.f32.xlu0 %v2646
      %v2662 = vpop.xlane.xlu0 %2661
      %v2663 = vpack.c.bf16 %v2497, %v2496
      %v2664 = vpack.c.bf16 %v2499, %v2498
      %v2665 = vpack.c.bf16 %v2501, %v2500
      %v2666 = vpack.c.bf16 %v2503, %v2502
      %v2668 = vsel %vm1244, %v2663, 0
      %v2671 = vsel %vm1244, %v2664, 0
      %v2674 = vsel %vm1244, %v2665, 0
      %v2677 = vsel %vm1244, %v2666, 0
      %2679 = vmatprep.subr.bf16.mxu0 0
      %2680 = vmatpush1.bf16.msra.mxu0 %v2540
      %2681 = vmatprep.subr.bf16.mxu0 0
      %2682 = vmatpush1.bf16.msra.mxu0 %v2541
      %2683 = vmatprep.subr.bf16.mxu0 0
      %2684 = vmatpush1.bf16.msra.mxu0 %v2542
      %2685 = vmatprep.subr.bf16.mxu0 0
      %2686 = vmatpush1.bf16.msra.mxu0 %v2543
      %2687 = vmatprep.subr.bf16.mxu0 0
      %2688 = vmatpush1.bf16.msra.mxu0 0
      %2689 = vmatprep.subr.bf16.mxu0 0
      %2690 = vmatpush1.bf16.msra.mxu0 0
      %2691 = vmatprep.subr.bf16.mxu0 0
      %2692 = vmatpush1.bf16.msra.mxu0 0
      %2693 = vmatprep.subr.bf16.mxu0 0
      %2694 = vmatpush1.bf16.msra.mxu0 0
      %2695 = vmatprep.subr.bf16.mxu0 0
      %2696 = vmatpush1.bf16.msra.mxu0 0
      %2697 = vmatprep.subr.bf16.mxu0 0
      %2698 = vmatpush1.bf16.msra.mxu0 0
      %2699 = vmatprep.subr.bf16.mxu0 0
      %2700 = vmatpush1.bf16.msra.mxu0 0
      %2701 = vmatprep.subr.bf16.mxu0 0
      %2702 = vmatpush1.bf16.msra.mxu0 0
      %2703 = vmatprep.subr.bf16.mxu0 0
      %2704 = vmatpush1.bf16.msra.mxu0 0
      %2705 = vmatprep.subr.bf16.mxu0 0
      %2706 = vmatpush1.bf16.msra.mxu0 0
      %2707 = vmatprep.subr.bf16.mxu0 0
      %2708 = vmatpush1.bf16.msra.mxu0 0
      %2709 = vmatprep.subr.bf16.mxu0 0
      %2710 = vmatpush1.bf16.msra.mxu0 0
      %2711 = vmatprep.mubr.bf16.mxu0 0
      %2712 = vmatmul.mubr.bf16.gmra.mrb[0].mxu0 %v2668
      %v2713 = vpop.f32.mrb[0].mxu0
      %v2714 = vadd.f32 %v2522, %v2713
      %v2715 = vpop.f32.mrb[0].mxu0
      %v2716 = vpop.f32.mrb[0].mxu0
      %v2717 = vadd.f32 %v2522, %v2716
      %v2718 = vpop.f32.mrb[0].mxu0
      %2719 = vmatprep.mubr.bf16.mxu0 0
      %2720 = vmatmul.mubr.bf16.gmra.mrb[0].mxu0 %v2671
      %v2721 = vpop.f32.mrb[0].mxu0
      %v2722 = vadd.f32 %v2522, %v2721
      %v2723 = vpop.f32.mrb[0].mxu0
      %v2724 = vpop.f32.mrb[0].mxu0
      %v2725 = vadd.f32 %v2522, %v2724
      %v2726 = vpop.f32.mrb[0].mxu0
      %2727 = vmatprep.mubr.bf16.mxu0 0
      %2728 = vmatmul.mubr.bf16.gmra.mrb[0].mxu0 %v2674
      %v2729 = vpop.f32.mrb[0].mxu0
      %v2730 = vadd.f32 %v2522, %v2729
      %v2731 = vpop.f32.mrb[0].mxu0
      %v2732 = vpop.f32.mrb[0].mxu0
      %v2733 = vadd.f32 %v2522, %v2732
      %v2734 = vpop.f32.mrb[0].mxu0
      %2735 = vmatprep.mubr.bf16.mxu0 0
      %2736 = vmatmul.mubr.bf16.gmra.mrb[0].mxu0 %v2677
      %v2737 = vpop.f32.mrb[0].mxu0
      %v2738 = vadd.f32 %v2522, %v2737
      %v2739 = vpop.f32.mrb[0].mxu0
      %v2740 = vpop.f32.mrb[0].mxu0
      %v2741 = vadd.f32 %v2522, %v2740
      %v2742 = vpop.f32.mrb[0].mxu0
      %2743 = vdwg.mxu0
      %v2744 = vtanh.pop %v2714
      %v2745 = vtanh.pop %v2717
      %v2746 = vtanh.pop %v2722
      %v2747 = vtanh.pop %v2725
      %v2748 = vtanh.pop %v2730
      %v2749 = vtanh.pop %v2733
      %v2750 = vtanh.pop %v2738
      %v2751 = vtanh.pop %v2741
      %v2752 = vmul.f32 %v2744, %v2637
      %v2753 = vmul.f32 %v2745, %v2637
      %v2754 = vmul.f32 %v2746, %v2637
      %v2755 = vmul.f32 %v2747, %v2637
      %v2756 = vmul.f32 %v2748, %v2637
      %v2757 = vmul.f32 %v2749, %v2637
      %v2758 = vmul.f32 %v2750, %v2637
      %v2759 = vmul.f32 %v2751, %v2637
      %2760 = vadd.xlane.f32.xlu0 %v2752
      %v2761 = vpop.xlane.xlu0 %2760
      %2762 = vadd.xlane.f32.xlu0 %v2753
      %v2763 = vpop.xlane.xlu0 %2762
      %2764 = vadd.xlane.f32.xlu0 %v2754
      %v2765 = vpop.xlane.xlu0 %2764
      %2766 = vadd.xlane.f32.xlu0 %v2755
      %v2767 = vpop.xlane.xlu0 %2766
      %2768 = vadd.xlane.f32.xlu0 %v2756
      %v2769 = vpop.xlane.xlu0 %2768
      %2770 = vadd.xlane.f32.xlu0 %v2757
      %v2771 = vpop.xlane.xlu0 %2770
      %2772 = vadd.xlane.f32.xlu0 %v2758
      %v2773 = vpop.xlane.xlu0 %2772
      %2774 = vadd.xlane.f32.xlu0 %v2759
      %v2775 = vpop.xlane.xlu0 %2774
      %v2776 = vmax.f32 %v2648, %v2761
      %v2777 = vmax.f32 %v2650, %v2763
      %v2778 = vmax.f32 %v2652, %v2765
      %v2779 = vmax.f32 %v2654, %v2767
      %v2780 = vmax.f32 %v2656, %v2769
      %v2781 = vmax.f32 %v2658, %v2771
      %v2782 = vmax.f32 %v2660, %v2773
      %v2783 = vmax.f32 %v2662, %v2775
      %v2784 = vsub.f32 %v2648, %v2776
      %v2785 = vsub.f32 %v2650, %v2777
      %v2786 = vsub.f32 %v2652, %v2778
      %v2787 = vsub.f32 %v2654, %v2779
      %v2788 = vsub.f32 %v2656, %v2780
      %v2789 = vsub.f32 %v2658, %v2781
      %v2790 = vsub.f32 %v2660, %v2782
      %v2791 = vsub.f32 %v2662, %v2783
      %v2792 = vmul.f32 %v2784, 1.442695
      %v2793 = vpow.pop %v2792
      %v2794 = vmul.f32 %v2785, 1.442695
      %v2795 = vpow.pop %v2794
      %v2796 = vmul.f32 %v2786, 1.442695
      %v2797 = vpow.pop %v2796
      %v2798 = vmul.f32 %v2787, 1.442695
      %v2799 = vpow.pop %v2798
      %v2800 = vmul.f32 %v2788, 1.442695
      %v2801 = vpow.pop %v2800
      %v2802 = vmul.f32 %v2789, 1.442695
      %v2803 = vpow.pop %v2802
      %v2804 = vmul.f32 %v2790, 1.442695
      %v2805 = vpow.pop %v2804
      %v2806 = vmul.f32 %v2791, 1.442695
      %v2807 = vpow.pop %v2806
      %v2808 = vadd.f32 %v2793, 0.0
      %v2809 = vadd.f32 %v2795, 0.0
      %v2810 = vadd.f32 %v2797, 0.0
      %v2811 = vadd.f32 %v2799, 0.0
      %v2812 = vadd.f32 %v2801, 0.0
      %v2813 = vadd.f32 %v2803, 0.0
      %v2814 = vadd.f32 %v2805, 0.0
      %v2815 = vadd.f32 %v2807, 0.0
      %v2816 = vmul.f32 %v2793, %v2488
      %v2817 = vmul.f32 %v2795, %v2489
      %v2818 = vmul.f32 %v2797, %v2490
      %v2819 = vmul.f32 %v2799, %v2491
      %v2820 = vmul.f32 %v2801, %v2492
      %v2821 = vmul.f32 %v2803, %v2493
      %v2822 = vmul.f32 %v2805, %v2494
      %v2823 = vmul.f32 %v2807, %v2495
      %v2824 = vadd.f32 %v2816, 0.0
      %v2825 = vadd.f32 %v2817, 0.0
      %v2826 = vadd.f32 %v2818, 0.0
      %v2827 = vadd.f32 %v2819, 0.0
      %v2828 = vadd.f32 %v2820, 0.0
      %v2829 = vadd.f32 %v2821, 0.0
      %v2830 = vadd.f32 %v2822, 0.0
      %v2831 = vadd.f32 %v2823, 0.0
      %v2832 = vsub.f32 %v2761, %v2776
      %v2833 = vsub.f32 %v2763, %v2777
      %v2834 = vsub.f32 %v2765, %v2778
      %v2835 = vsub.f32 %v2767, %v2779
      %v2836 = vsub.f32 %v2769, %v2780
      %v2837 = vsub.f32 %v2771, %v2781
      %v2838 = vsub.f32 %v2773, %v2782
      %v2839 = vsub.f32 %v2775, %v2783
      %v2840 = vmul.f32 %v2832, 1.442695
      %v2841 = vpow.pop %v2840
      %v2842 = vmul.f32 %v2833, 1.442695
      %v2843 = vpow.pop %v2842
      %v2844 = vmul.f32 %v2834, 1.442695
      %v2845 = vpow.pop %v2844
      %v2846 = vmul.f32 %v2835, 1.442695
      %v2847 = vpow.pop %v2846
      %v2848 = vmul.f32 %v2836, 1.442695
      %v2849 = vpow.pop %v2848
      %v2850 = vmul.f32 %v2837, 1.442695
      %v2851 = vpow.pop %v2850
      %v2852 = vmul.f32 %v2838, 1.442695
      %v2853 = vpow.pop %v2852
      %v2854 = vmul.f32 %v2839, 1.442695
      %v2855 = vpow.pop %v2854
      %v2856 = vadd.f32 %v2808, %v2841
      %v2857 = vadd.f32 %v2809, %v2843
      %v2858 = vadd.f32 %v2810, %v2845
      %v2859 = vadd.f32 %v2811, %v2847
      %v2860 = vadd.f32 %v2812, %v2849
      %v2861 = vadd.f32 %v2813, %v2851
      %v2862 = vadd.f32 %v2814, %v2853
      %v2863 = vadd.f32 %v2815, %v2855
      %v2864 = vmul.f32 %v2841, %v2496
      %v2865 = vmul.f32 %v2843, %v2497
      %v2866 = vmul.f32 %v2845, %v2498
      %v2867 = vmul.f32 %v2847, %v2499
      %v2868 = vmul.f32 %v2849, %v2500
      %v2869 = vmul.f32 %v2851, %v2501
      %v2870 = vmul.f32 %v2853, %v2502
      %v2871 = vmul.f32 %v2855, %v2503
      %v2872 = vadd.f32 %v2824, %v2864
      %v2873 = vadd.f32 %v2825, %v2865
      %v2874 = vadd.f32 %v2826, %v2866
      %v2875 = vadd.f32 %v2827, %v2867
      %v2876 = vadd.f32 %v2828, %v2868
      %v2877 = vadd.f32 %v2829, %v2869
      %v2878 = vadd.f32 %v2830, %v2870
      %v2879 = vadd.f32 %v2831, %v2871
      %v2880 = vrcp.pop %v2856
      %v2881 = vrcp.pop %v2857
      %v2882 = vrcp.pop %v2858
      %v2883 = vrcp.pop %v2859
      %v2884 = vrcp.pop %v2860
      %v2885 = vrcp.pop %v2861
      %v2886 = vrcp.pop %v2862
      %v2887 = vrcp.pop %v2863
      %v2888 = vmul.f32 %v2872, %v2880
      %v2889 = vmul.f32 %v2873, %v2881
      %v2890 = vmul.f32 %v2874, %v2882
      %v2891 = vmul.f32 %v2875, %v2883
      %v2892 = vmul.f32 %v2876, %v2884
      %v2893 = vmul.f32 %v2877, %v2885
      %v2894 = vmul.f32 %v2878, %v2886
      %v2895 = vmul.f32 %v2879, %v2887
      %2896 = vst.msk [vmem:[%s391] sm:$0xff] %vm1244, %v2888
      %2897 = vst.msk [vmem:[%s391 + $0x8] sm:$0xff] %vm1244, %v2889
      %2898 = vst.msk [vmem:[%s391 + $0x10] sm:$0xff] %vm1244, %v2890
      %2899 = vst.msk [vmem:[%s391 + $0x18] sm:$0xff] %vm1244, %v2891
      %2900 = vst.msk [vmem:[%s391 + $0x20] sm:$0xff] %vm1244, %v2892
      %2901 = vst.msk [vmem:[%s391 + $0x28] sm:$0xff] %vm1244, %v2893
      %2902 = vst.msk [vmem:[%s391 + $0x30] sm:$0xff] %vm1244, %v2894
      %2903 = vst.msk [vmem:[%s391 + $0x38] sm:$0xff] %vm1244, %v2895
      %s2904 = smul.u32 8, %s22
      %p2905 = scmp.lt.s32.totalorder %s2904, 15
      %s2906 = scalar_select %p2905, %s2904, 15
      %s2907 = smul.addr %s2906, 8
      %s2908 = scalar_lea.vmem %s11, %s2907
      // Predicated region
      $region65: #{epoch_encoder_forward.2} parent=63 // pred_check
        %p2909 = pneg %p276
      $region66: #{epoch_encoder_forward.2} parent=63 // pred_check_branch
        %2911 = sbr.rel (%p2909) target = $region68
      $region67: #{epoch_encoder_forward.2} parent=63 // pred_region
        %s2912 = smul.u32 8, %s22
      $region68: #{epoch_encoder_forward.2} parent=63 // pred_fallthru
        _
    $region64: #{epoch_encoder_forward.2} parent=5 // pred_fallthru
      _
    %p2913 = scmp.le.s32.totalorder 2, %s17
    // Predicated region
    $region69: #{epoch_encoder_forward.2} parent=5 // pred_check
      %p2914 = pneg %p2913
    $region70: #{epoch_encoder_forward.2} parent=5 // pred_check_branch
      %2916 = sbr.rel (%p2914) target = $region72
    $region71: #{epoch_encoder_forward.2} parent=5 // pred_region
      %s2917 = ssub.s32 %s17, 2
      // Predicated region
      $region73: #{epoch_encoder_forward.2} parent=71 // pred_check
        %p2918 = pneg %p282
      $region74: #{epoch_encoder_forward.2} parent=71 // pred_check_branch
        %2920 = sbr.rel (%p2918) target = $region76
      $region75: #{epoch_encoder_forward.2} parent=71 // pred_region
        %s2921 = smul.u32 8, %s23
        %p2922 = scmp.lt.s32.totalorder %s2921, 15
        %s2923 = scalar_select %p2922, %s2921, 15
        %s2924 = smul.addr %s2923, 8
        %s2925 = scalar_lea.vmem %s11, %s2924
      $region76: #{epoch_encoder_forward.2} parent=71 // pred_fallthru
        _
    $region72: #{epoch_encoder_forward.2} parent=5 // pred_fallthru
      _
  $region6: #{epoch_encoder_forward.2} parent=0 // loop_footer
    %s21 = sadd.s32 1, %s17
  $region7: #{epoch_encoder_forward.2} parent=0 // loop_footer_branch
    %16 = sbr.rel target = $region3
  $region8: #{epoch_encoder_forward.2} parent=0 // loop_exit
    _

// kernel: epoch_encoder_forward.3
$region0: #{epoch_encoder_forward.3}
  #allocation0 [shape = 'u32[]', space=smem, size = 0x4, offset = 0x4, fixed_abs, tag = 'smem constant byte address 0x4 - core index']
  #allocation1 [shape = 'u32[144,128]{1,0:T(1,128)}', space=vmem, size = 0x12000, scoped, tag = 'internal scratch']
  %s0 = inlined_call_operand.vmem [shape: f32[16,8,64], index: 0, kind: input, shape index: {}]
  %s1 = inlined_call_operand.vmem [shape: f32[8,64], index: 1, kind: input, shape index: {}]
  %s2 = inlined_call_operand.vmem [shape: bf16[64,32], index: 2, kind: input, shape index: {}]
  %s3 = inlined_call_operand.vmem [shape: bf16[64,32], index: 3, kind: input, shape index: {}]
  %s4 = inlined_call_operand.vmem [shape: f32[2,16,8], index: 4, kind: input, shape index: {}]
  %s5 = inlined_call_operand.vmem [shape: bf16[64,8], index: 5, kind: input, shape index: {}]
  %s6 = inlined_call_operand.vmem [shape: f32[1,8], index: 6, kind: input, shape index: {}]
  %s7 = inlined_call_operand.vmem [shape: f32[16,2,64], index: 7, kind: output, shape index: {0}]
  %s8 = inlined_call_operand.vmem [shape: s32[16,2], index: 8, kind: output, shape index: {1}]
  %s9 = inlined_call_operand.vmem [shape: s32[16,2], index: 9, kind: output, shape index: {2}]
  %10 = xla_tuple %s7, %s8, %s9
  %s11 = sld [smem:[#allocation0]]
  $region115: #{epoch_encoder_forward.3} parent=0
    _
  %s13 = ssub.s32 1, %s11
  %s14 = scalar_select 0, %s13, %s11
  $region1: #{epoch_encoder_forward.3} parent=0
    #allocation2 [shape = 'u8[16384]{0}', space=vmem, size = 0x4000, scoped, tag = 'input window, operand 4']
    loop: start=0, step=1, limit=4
    $region2: #{epoch_encoder_forward.3} parent=1 // loop_pre_header
      _
    $region3: #{epoch_encoder_forward.3} parent=1 // loop_header
      %s16 = sphi 0, %s20
      %p17 = scmp.ge.s32.totalorder %s16, 4
      %s26 = sphi 0, %s28
      %s29 = sphi 0, %s26
      %s30 = sphi 0, %s29
      %s46 = sphi 0, %s30
      %s50 = sphi 0, %s50
      %s52 = sphi 0, %s50
      %s53 = sphi 0, %s52
      %s67 = sphi 0, %s53
      %s71 = sphi 0, %s71
      %s73 = sphi 0, %s71
      %s74 = sphi 0, %s73
      %s88 = sphi 0, %s74
      %s92 = sphi 0, %s92
      %s94 = sphi 0, %s92
      %s95 = sphi 0, %s94
      %s109 = sphi 0, %s95
      %s115 = sphi 0, %s117
      %s118 = sphi 0, %s115
      %s119 = sphi 0, %s118
      %s135 = sphi 0, %s119
      %s139 = sphi 0, %s139
      %s141 = sphi 0, %s139
      %s142 = sphi 0, %s141
      %s156 = sphi 0, %s142
      %s160 = sphi 0, %s160
      %s162 = sphi 0, %s160
      %s163 = sphi 0, %s162
      %s177 = sphi 0, %s163
      %s183 = sphi 0, %s185
      %s186 = sphi 0, %s183
      %s187 = sphi 0, %s186
      %s203 = sphi 0, %s187
      %s209 = sphi 0, %s211
      %s212 = sphi 0, %s209
      %s213 = sphi 0, %s212
      %s229 = sphi 0, %s213
      %s235 = sphi 0, %s237
      %s238 = sphi 0, %s235
      %s239 = sphi 0, %s238
      %s255 = sphi 0, %s239
    $region4: #{epoch_encoder_forward.3} parent=1 // loop_header_branch
      %19 = sbr.rel (%p17) target = $region8
    $region5: #{epoch_encoder_forward.3} parent=1 // loop_body
      %s21 = ssub.s32 %s16, 1
      %s22 = ssub.s32 %s16, 2
      %s23 = sadd.s32 %s16, 1
      %s24 = ssub.s32 %s16, %s23
      %p25 = scmp.eq.s32.totalorder %s24, 0
      %s27 = sadd.s32 %s26, 1
      %s28 = scalar_select %p25, %s26, %s27
      %p31 = pneg %p25
      %p32 = scmp.eq.s32.totalorder %s16, 1
      %p33 = por %p31, %p32
      %p34 = scmp.ne.s32.totalorder %s26, %s29
      %p35 = scmp.eq.s32.totalorder %s16, 0
      %p36 = por %p34, %p35
      %p37 = scmp.ne.s32.totalorder %s26, %s29
      %p38 = scmp.eq.s32.totalorder %s21, 1
      %p39 = por %p37, %p38
      %p40 = scmp.ne.s32.totalorder %s29, %s30
      %p41 = scmp.eq.s32.totalorder %s21, 0
      %p42 = por %p40, %p41
      %p43 = scmp.ne.s32.totalorder %s29, %s30
      %p44 = scmp.eq.s32.totalorder %s22, 1
      %p45 = por %p43, %p44
      %p47 = scmp.ne.s32.totalorder %s30, %s46
      %p48 = scmp.eq.s32.totalorder %s22, 0
      %p49 = por %p47, %p48
      %s51 = sadd.s32 %s50, 1
      %p54 = scmp.eq.s32.totalorder %s16, 1
      %p55 = scmp.ne.s32.totalorder %s50, %s52
      %p56 = scmp.eq.s32.totalorder %s16, 0
      %p57 = por %p55, %p56
      %p58 = scmp.ne.s32.totalorder %s50, %s52
      %p59 = scmp.eq.s32.totalorder %s21, 1
      %p60 = por %p58, %p59
      %p61 = scmp.ne.s32.totalorder %s52, %s53
      %p62 = scmp.eq.s32.totalorder %s21, 0
      %p63 = por %p61, %p62
      %p64 = scmp.ne.s32.totalorder %s52, %s53
      %p65 = scmp.eq.s32.totalorder %s22, 1
      %p66 = por %p64, %p65
      %p68 = scmp.ne.s32.totalorder %s53, %s67
      %p69 = scmp.eq.s32.totalorder %s22, 0
      %p70 = por %p68, %p69
      %s72 = sadd.s32 %s71, 1
      %p75 = scmp.eq.s32.totalorder %s16, 1
      %p76 = scmp.ne.s32.totalorder %s71, %s73
      %p77 = scmp.eq.s32.totalorder %s16, 0
      %p78 = por %p76, %p77
      %p79 = scmp.ne.s32.totalorder %s71, %s73
      %p80 = scmp.eq.s32.totalorder %s21, 1
      %p81 = por %p79, %p80
      %p82 = scmp.ne.s32.totalorder %s73, %s74
      %p83 = scmp.eq.s32.totalorder %s21, 0
      %p84 = por %p82, %p83
      %p85 = scmp.ne.s32.totalorder %s73, %s74
      %p86 = scmp.eq.s32.totalorder %s22, 1
      %p87 = por %p85, %p86
      %p89 = scmp.ne.s32.totalorder %s74, %s88
      %p90 = scmp.eq.s32.totalorder %s22, 0
      %p91 = por %p89, %p90
      %s93 = sadd.s32 %s92, 1
      %p96 = scmp.eq.s32.totalorder %s16, 1
      %p97 = scmp.ne.s32.totalorder %s92, %s94
      %p98 = scmp.eq.s32.totalorder %s16, 0
      %p99 = por %p97, %p98
      %p100 = scmp.ne.s32.totalorder %s92, %s94
      %p101 = scmp.eq.s32.totalorder %s21, 1
      %p102 = por %p100, %p101
      %p103 = scmp.ne.s32.totalorder %s94, %s95
      %p104 = scmp.eq.s32.totalorder %s21, 0
      %p105 = por %p103, %p104
      %p106 = scmp.ne.s32.totalorder %s94, %s95
      %p107 = scmp.eq.s32.totalorder %s22, 1
      %p108 = por %p106, %p107
      %p110 = scmp.ne.s32.totalorder %s95, %s109
      %p111 = scmp.eq.s32.totalorder %s22, 0
      %p112 = por %p110, %p111
      %s113 = ssub.s32 %s16, %s23
      %p114 = scmp.eq.s32.totalorder %s113, 0
      %s116 = sadd.s32 %s115, 1
      %s117 = scalar_select %p114, %s115, %s116
      %p120 = pneg %p114
      %p121 = scmp.eq.s32.totalorder %s16, 1
      %p122 = por %p120, %p121
      %p123 = scmp.ne.s32.totalorder %s115, %s118
      %p124 = scmp.eq.s32.totalorder %s16, 0
      %p125 = por %p123, %p124
      %p126 = scmp.ne.s32.totalorder %s115, %s118
      %p127 = scmp.eq.s32.totalorder %s21, 1
      %p128 = por %p126, %p127
      %p129 = scmp.ne.s32.totalorder %s118, %s119
      %p130 = scmp.eq.s32.totalorder %s21, 0
      %p131 = por %p129, %p130
      %p132 = scmp.ne.s32.totalorder %s118, %s119
      %p133 = scmp.eq.s32.totalorder %s22, 1
      %p134 = por %p132, %p133
      %p136 = scmp.ne.s32.totalorder %s119, %s135
      %p137 = scmp.eq.s32.totalorder %s22, 0
      %p138 = por %p136, %p137
      %s140 = sadd.s32 %s139, 1
      %p143 = scmp.eq.s32.totalorder %s16, 1
      %p144 = scmp.ne.s32.totalorder %s139, %s141
      %p145 = scmp.eq.s32.totalorder %s16, 0
      %p146 = por %p144, %p145
      %p147 = scmp.ne.s32.totalorder %s139, %s141
      %p148 = scmp.eq.s32.totalorder %s21, 1
      %p149 = por %p147, %p148
      %p150 = scmp.ne.s32.totalorder %s141, %s142
      %p151 = scmp.eq.s32.totalorder %s21, 0
      %p152 = por %p150, %p151
      %p153 = scmp.ne.s32.totalorder %s141, %s142
      %p154 = scmp.eq.s32.totalorder %s22, 1
      %p155 = por %p153, %p154
      %p157 = scmp.ne.s32.totalorder %s142, %s156
      %p158 = scmp.eq.s32.totalorder %s22, 0
      %p159 = por %p157, %p158
      %s161 = sadd.s32 %s160, 1
      %p164 = scmp.eq.s32.totalorder %s16, 1
      %p165 = scmp.ne.s32.totalorder %s160, %s162
      %p166 = scmp.eq.s32.totalorder %s16, 0
      %p167 = por %p165, %p166
      %p168 = scmp.ne.s32.totalorder %s160, %s162
      %p169 = scmp.eq.s32.totalorder %s21, 1
      %p170 = por %p168, %p169
      %p171 = scmp.ne.s32.totalorder %s162, %s163
      %p172 = scmp.eq.s32.totalorder %s21, 0
      %p173 = por %p171, %p172
      %p174 = scmp.ne.s32.totalorder %s162, %s163
      %p175 = scmp.eq.s32.totalorder %s22, 1
      %p176 = por %p174, %p175
      %p178 = scmp.ne.s32.totalorder %s163, %s177
      %p179 = scmp.eq.s32.totalorder %s22, 0
      %p180 = por %p178, %p179
      %s181 = ssub.s32 %s16, %s23
      %p182 = scmp.eq.s32.totalorder %s181, 0
      %s184 = sadd.s32 %s183, 1
      %s185 = scalar_select %p182, %s183, %s184
      %p188 = pneg %p182
      %p189 = scmp.eq.s32.totalorder %s16, 1
      %p190 = por %p188, %p189
      %p191 = scmp.ne.s32.totalorder %s183, %s186
      %p192 = scmp.eq.s32.totalorder %s16, 0
      %p193 = por %p191, %p192
      %p194 = scmp.ne.s32.totalorder %s183, %s186
      %p195 = scmp.eq.s32.totalorder %s21, 1
      %p196 = por %p194, %p195
      %p197 = scmp.ne.s32.totalorder %s186, %s187
      %p198 = scmp.eq.s32.totalorder %s21, 0
      %p199 = por %p197, %p198
      %p200 = scmp.ne.s32.totalorder %s186, %s187
      %p201 = scmp.eq.s32.totalorder %s22, 1
      %p202 = por %p200, %p201
      %p204 = scmp.ne.s32.totalorder %s187, %s203
      %p205 = scmp.eq.s32.totalorder %s22, 0
      %p206 = por %p204, %p205
      %s207 = ssub.s32 %s16, %s23
      %p208 = scmp.eq.s32.totalorder %s207, 0
      %s210 = sadd.s32 %s209, 1
      %s211 = scalar_select %p208, %s209, %s210
      %p214 = pneg %p208
      %p215 = scmp.eq.s32.totalorder %s16, 1
      %p216 = por %p214, %p215
      %p217 = scmp.ne.s32.totalorder %s209, %s212
      %p218 = scmp.eq.s32.totalorder %s16, 0
      %p219 = por %p217, %p218
      %p220 = scmp.ne.s32.totalorder %s209, %s212
      %p221 = scmp.eq.s32.totalorder %s21, 1
      %p222 = por %p220, %p221
      %p223 = scmp.ne.s32.totalorder %s212, %s213
      %p224 = scmp.eq.s32.totalorder %s21, 0
      %p225 = por %p223, %p224
      %p226 = scmp.ne.s32.totalorder %s212, %s213
      %p227 = scmp.eq.s32.totalorder %s22, 1
      %p228 = por %p226, %p227
      %p230 = scmp.ne.s32.totalorder %s213, %s229
      %p231 = scmp.eq.s32.totalorder %s22, 0
      %p232 = por %p230, %p231
      %s233 = ssub.s32 %s16, %s23
      %p234 = scmp.eq.s32.totalorder %s233, 0
      %s236 = sadd.s32 %s235, 1
      %s237 = scalar_select %p234, %s235, %s236
      %p240 = pneg %p234
      %p241 = scmp.eq.s32.totalorder %s16, 1
      %p242 = por %p240, %p241
      %p243 = scmp.ne.s32.totalorder %s235, %s238
      %p244 = scmp.eq.s32.totalorder %s16, 0
      %p245 = por %p243, %p244
      %p246 = scmp.ne.s32.totalorder %s235, %s238
      %p247 = scmp.eq.s32.totalorder %s21, 1
      %p248 = por %p246, %p247
      %p249 = scmp.ne.s32.totalorder %s238, %s239
      %p250 = scmp.eq.s32.totalorder %s21, 0
      %p251 = por %p249, %p250
      %p252 = scmp.ne.s32.totalorder %s238, %s239
      %p253 = scmp.eq.s32.totalorder %s22, 1
      %p254 = por %p252, %p253
      %p256 = scmp.ne.s32.totalorder %s239, %s255
      %p257 = scmp.eq.s32.totalorder %s22, 0
      %p258 = por %p256, %p257
      %p259 = scmp.le.s32.totalorder 1, %s16
      %p260 = scmp.lt.s32.totalorder %s16, 3
      %p261 = pnand %p259, %p260
      %p262 = pneg %p261
      // Predicated region
      $region9: #{epoch_encoder_forward.3} parent=5 // pred_check
        _
      $region10: #{epoch_encoder_forward.3} parent=5 // pred_check_branch
        %264 = sbr.rel (%p261) target = $region12
      $region11: #{epoch_encoder_forward.3} parent=5 // pred_region
        %s265 = ssub.s32 %s16, 1
        // Predicated region
        $region13: #{epoch_encoder_forward.3} parent=11 // pred_check
          %p266 = pneg %p63
        $region14: #{epoch_encoder_forward.3} parent=11 // pred_check_branch
          %268 = sbr.rel (%p266) target = $region16
        $region15: #{epoch_encoder_forward.3} parent=11 // pred_region
          _
        $region16: #{epoch_encoder_forward.3} parent=11 // pred_fallthru
          _
        // Predicated region
        $region17: #{epoch_encoder_forward.3} parent=11 // pred_check
          %p269 = pneg %p84
        $region18: #{epoch_encoder_forward.3} parent=11 // pred_check_branch
          %271 = sbr.rel (%p269) target = $region20
        $region19: #{epoch_encoder_forward.3} parent=11 // pred_region
          _
        $region20: #{epoch_encoder_forward.3} parent=11 // pred_fallthru
          _
        // Predicated region
        $region21: #{epoch_encoder_forward.3} parent=11 // pred_check
          %p272 = pneg %p105
        $region22: #{epoch_encoder_forward.3} parent=11 // pred_check_branch
          %274 = sbr.rel (%p272) target = $region24
        $region23: #{epoch_encoder_forward.3} parent=11 // pred_region
          _
        $region24: #{epoch_encoder_forward.3} parent=11 // pred_fallthru
          _
        // Predicated region
        $region25: #{epoch_encoder_forward.3} parent=11 // pred_check
          %p275 = pneg %p152
        $region26: #{epoch_encoder_forward.3} parent=11 // pred_check_branch
          %277 = sbr.rel (%p275) target = $region28
        $region27: #{epoch_encoder_forward.3} parent=11 // pred_region
          _
        $region28: #{epoch_encoder_forward.3} parent=11 // pred_fallthru
          _
        // Predicated region
        $region29: #{epoch_encoder_forward.3} parent=11 // pred_check
          %p278 = pneg %p173
        $region30: #{epoch_encoder_forward.3} parent=11 // pred_check_branch
          %280 = sbr.rel (%p278) target = $region32
        $region31: #{epoch_encoder_forward.3} parent=11 // pred_region
          _
        $region32: #{epoch_encoder_forward.3} parent=11 // pred_fallthru
          _
      $region12: #{epoch_encoder_forward.3} parent=5 // pred_fallthru
        _
      %p281 = scmp.lt.s32.totalorder %s16, 2
      // Predicated region
      $region33: #{epoch_encoder_forward.3} parent=5 // pred_check
        %p282 = pneg %p281
      $region34: #{epoch_encoder_forward.3} parent=5 // pred_check_branch
        %284 = sbr.rel (%p282) target = $region36
      $region35: #{epoch_encoder_forward.3} parent=5 // pred_region
        // Predicated region
        $region37: #{epoch_encoder_forward.3} parent=35 // pred_check
          %p285 = pneg %p36
        $region38: #{epoch_encoder_forward.3} parent=35 // pred_check_branch
          %287 = sbr.rel (%p285) target = $region40
        $region39: #{epoch_encoder_forward.3} parent=35 // pred_region
          %s288 = smul.u32 8, %s16
          %p289 = scmp.lt.s32.totalorder %s288, 15
          %s290 = scalar_select %p289, %s288, 15
          %s291 = smul.addr %s290, 8
          %s292 = scalar_lea.vmem %s0, %s291
          %s293 = smul.u32 8, %s16
        $region40: #{epoch_encoder_forward.3} parent=35 // pred_fallthru
          _
        // Predicated region
        $region41: #{epoch_encoder_forward.3} parent=35 // pred_check
          %p294 = pneg %p125
        $region42: #{epoch_encoder_forward.3} parent=35 // pred_check_branch
          %296 = sbr.rel (%p294) target = $region44
        $region43: #{epoch_encoder_forward.3} parent=35 // pred_region
          %s297 = sand.u32 %s115, 1
          %s298 = sand.u32 %s115, 1
          %s299 = smul.addr %s298, 16
          %s300 = scalar_lea.vmem [#allocation2], %s299
          %s301 = smul.addr %s16, 8
          %s302 = scalar_lea.vmem %s4, %s301
          // Predicated region
          $region45: #{epoch_encoder_forward.3} parent=43 // pred_check
            _
          $region46: #{epoch_encoder_forward.3} parent=43 // pred_check_branch
            %304 = sbr.rel (0) target = $region48
          $region47: #{epoch_encoder_forward.3} parent=43 // pred_region
            // Predicated region
            $region49: #{epoch_encoder_forward.3} parent=47 // pred_check
              _
            $region50: #{epoch_encoder_forward.3} parent=47 // pred_check_branch
              %306 = sbr.rel (0) target = $region52
            $region51: #{epoch_encoder_forward.3} parent=47 // pred_region
              // Predicated region
              $region64: #{epoch_encoder_forward.3} parent=51 // pred_check
                _
              $region65: #{epoch_encoder_forward.3} parent=51 // pred_check_branch
                %323 = sbr.rel (0) target = $region67
              $region66: #{epoch_encoder_forward.3} parent=51 // pred_region
                loop: start=0, step=1, limit=1
                $region68: #{epoch_encoder_forward.3} parent=66 // loop_pre_header
                  _
                $region69: #{epoch_encoder_forward.3} parent=66 // loop_header
                  %s325 = sphi 0, %s329
                  %p326 = scmp.ge.s32.totalorder %s325, 1
                  %s330 = sphi %s302, %s302
                  %s331 = sphi %s300, %s300
                $region70: #{epoch_encoder_forward.3} parent=66 // loop_header_branch
                  %328 = sbr.rel (%p326) target = $region74
                $region71: #{epoch_encoder_forward.3} parent=66 // loop_body
                  %v332 = vld [vmem:[%s330] sm:$0xff]
                  %333 = vst [vmem:[%s331] sm:$0xff] %v332
                  %v334 = vld [vmem:[%s330 + $0x10] sm:$0xff]
                  %335 = vst [vmem:[%s331 + $0x8] sm:$0xff] %v334
                $region72: #{epoch_encoder_forward.3} parent=66 // loop_footer
                  %s329 = sadd.s32 1, %s325
                $region73: #{epoch_encoder_forward.3} parent=66 // loop_footer_branch
                  %324 = sbr.rel target = $region69
                $region74: #{epoch_encoder_forward.3} parent=66 // loop_exit
                  _
              $region67: #{epoch_encoder_forward.3} parent=51 // pred_fallthru
                _
              // Predicated region
              $region75: #{epoch_encoder_forward.3} parent=51 // pred_check
                _
              $region76: #{epoch_encoder_forward.3} parent=51 // pred_check_branch
                %337 = sbr.rel target = $region78
              $region77: #{epoch_encoder_forward.3} parent=51 // pred_region
                _
              $region78: #{epoch_encoder_forward.3} parent=51 // pred_fallthru
                _
            $region52: #{epoch_encoder_forward.3} parent=47 // pred_fallthru
              _
            // Predicated region
            $region53: #{epoch_encoder_forward.3} parent=47 // pred_check
              _
            $region54: #{epoch_encoder_forward.3} parent=47 // pred_check_branch
              %308 = sbr.rel target = $region56
            $region55: #{epoch_encoder_forward.3} parent=47 // pred_region
              loop: start=0, step=1, limit=1
              $region57: #{epoch_encoder_forward.3} parent=55 // loop_pre_header
                _
              $region58: #{epoch_encoder_forward.3} parent=55 // loop_header
                %s311 = sphi 0, %s315
                %p312 = scmp.ge.s32.totalorder %s311, 1
                %s316 = sphi %s302, %s302
                %s317 = sphi %s300, %s300
              $region59: #{epoch_encoder_forward.3} parent=55 // loop_header_branch
                %314 = sbr.rel (%p312) target = $region63
              $region60: #{epoch_encoder_forward.3} parent=55 // loop_body
                %v318 = vld [vmem:[%s316] sm:$0xff]
                %319 = vst [vmem:[%s317] sm:$0xff] %v318
                %v320 = vld [vmem:[%s316 + $0x10] sm:$0xff]
                %321 = vst [vmem:[%s317 + $0x8] sm:$0xff] %v320
              $region61: #{epoch_encoder_forward.3} parent=55 // loop_footer
                %s315 = sadd.s32 1, %s311
              $region62: #{epoch_encoder_forward.3} parent=55 // loop_footer_branch
                %310 = sbr.rel target = $region58
              $region63: #{epoch_encoder_forward.3} parent=55 // loop_exit
                _
            $region56: #{epoch_encoder_forward.3} parent=47 // pred_fallthru
              _
          $region48: #{epoch_encoder_forward.3} parent=43 // pred_fallthru
            _
          %338 = vnop
        $region44: #{epoch_encoder_forward.3} parent=35 // pred_fallthru
          _
      $region36: #{epoch_encoder_forward.3} parent=5 // pred_fallthru
        _
      %p339 = scmp.le.s32.totalorder 1, %s16
      %p340 = scmp.lt.s32.totalorder %s16, 3
      %p341 = pnand %p339, %p340
      %p342 = pneg %p341
      // Predicated region
      $region79: #{epoch_encoder_forward.3} parent=5 // pred_check
        _
      $region80: #{epoch_encoder_forward.3} parent=5 // pred_check_branch
        %344 = sbr.rel (%p341) target = $region82
      $region81: #{epoch_encoder_forward.3} parent=5 // pred_region
        %s345 = ssub.s32 %s16, 1
        %s346 = sand.u32 %s118, 1
        %s347 = sand.u32 %s118, 1
        %s348 = smul.addr %s347, 16
        %s349 = scalar_lea.vmem [#allocation2], %s348
        // Predicated region
        $region83: #{epoch_encoder_forward.3} parent=81 // pred_check
          %p350 = pneg %p131
        $region84: #{epoch_encoder_forward.3} parent=81 // pred_check_branch
          %352 = sbr.rel (%p350) target = $region86
        $region85: #{epoch_encoder_forward.3} parent=81 // pred_region
          _
        $region86: #{epoch_encoder_forward.3} parent=81 // pred_fallthru
          _
        %s353 = smul.u32 8, %s21
        %p354 = scmp.lt.s32.totalorder %s353, 15
        %s355 = scalar_select %p354, %s353, 15
        %s356 = smul.addr %s355, 8
        %s357 = scalar_lea.vmem %s0, %s356
        %p358 = pneg %p42
        %p359 = pneg %p39
        %p360 = pneg %p63
        %p361 = pneg %p60
        %p362 = pneg %p84
        %p363 = pneg %p81
        %p364 = pneg %p105
        %p365 = pneg %p102
        %s366 = sand.u32 %s118, 1
        %s367 = sand.u32 %s118, 1
        %s368 = smul.addr %s367, 16
        %s369 = scalar_lea.vmem [#allocation2], %s368
        %p370 = pneg %p131
        %p371 = pneg %p128
        %p372 = pneg %p152
        %p373 = pneg %p149
        %p374 = pneg %p173
        %p375 = pneg %p170
        %p376 = pneg %p199
        %p377 = pneg %p196
        %s378 = smul.u32 8, %s21
        %p379 = scmp.lt.s32.totalorder %s378, 15
        %s380 = scalar_select %p379, %s378, 15
        %s381 = smul.addr %s380, 2
        %s382 = scalar_lea.vmem %s7, %s381
        %p383 = pneg %p225
        %p384 = pneg %p222
        %p385 = scmp.lt.s32.totalorder %s21, 1
        %s386 = scalar_select %p385, %s21, 1
        %s387 = smul.addr %s386, 8
        %s388 = scalar_lea.vmem %s8, %s387
        %p389 = pneg %p251
        %p390 = pneg %p248
        %p391 = scmp.lt.s32.totalorder %s21, 1
        %s392 = scalar_select %p391, %s21, 1
        %s393 = smul.addr %s392, 8
        %s394 = scalar_lea.vmem %s9, %s393
        %s395 = smul.u32 8, %s21
        %p396 = scmp.lt.s32.totalorder %s395, 15
        %s397 = scalar_select %p396, %s395, 15
        %s398 = smul.addr %s397, 8
        %s399 = scalar_lea.vmem %s0, %s398
        %s400 = smul.u32 8, %s21
        %s401 = smul.u32 8, %s21
        %p402 = scmp.lt.s32.totalorder %s401, 15
        %s403 = scalar_select %p402, %s401, 15
        %s404 = smul.addr %s403, 2
        %s405 = scalar_lea.vmem %s7, %s404
        %s406 = smul.u32 8, %s21
        %p407 = scmp.lt.s32.totalorder %s21, 1
        %s408 = scalar_select %p407, %s21, 1
        %s409 = smul.addr %s408, 8
        %s410 = scalar_lea.vmem %s8, %s409
        %p411 = scmp.lt.s32.totalorder %s21, 1
        %s412 = scalar_select %p411, %s21, 1
        %s413 = smul.addr %s412, 8
        %s414 = scalar_lea.vmem %s9, %s413
        %v416 = vld [vmem:[%s399] sm:$0xff]
        %v417 = vld [vmem:[%s399 + $0x8] sm:$0xff]
        %v418 = vld [vmem:[%s399 + $0x10] sm:$0xff]
        %v419 = vld [vmem:[%s399 + $0x18] sm:$0xff]
        %v420 = vld [vmem:[%s399 + $0x20] sm:$0xff]
        %v421 = vld [vmem:[%s399 + $0x28] sm:$0xff]
        %v422 = vld [vmem:[%s399 + $0x30] sm:$0xff]
        %v423 = vld [vmem:[%s399 + $0x38] sm:$0xff]
        %v424 = vld [vmem:[%s1] sm:$0xff]
        %v425 = vadd.f32 %v416, %v424
        %v426 = vadd.f32 %v417, %v424
        %v427 = vadd.f32 %v418, %v424
        %v428 = vadd.f32 %v419, %v424
        %v429 = vadd.f32 %v420, %v424
        %v430 = vadd.f32 %v421, %v424
        %v431 = vadd.f32 %v422, %v424
        %v432 = vadd.f32 %v423, %v424
        %v433 = vpack.c.bf16 %v426, %v425
        %v434 = vpack.c.bf16 %v428, %v427
        %v435 = vpack.c.bf16 %v430, %v429
        %v436 = vpack.c.bf16 %v432, %v431
        %v437 = vld [vmem:[%s2] sm:$0xf]
        %v438 = vld [vmem:[%s2 + $0x4] sm:$0xf]
        %v439 = vld [vmem:[%s2 + $0x8] sm:$0xf]
        %v440 = vld [vmem:[%s2 + $0xc] sm:$0xf]
        %v441 = vld [vmem:[%s2 + $0x10] sm:$0xf]
        %v442 = vld [vmem:[%s2 + $0x14] sm:$0xf]
        %v443 = vld [vmem:[%s2 + $0x18] sm:$0xf]
        %v444 = vld [vmem:[%s2 + $0x1c] sm:$0xf]
        %v453 = vunpack.c.l.b16 %v437
        %v454 = vunpack.c.l.b16 %v438
        %v455 = vunpack.c.l.b16 %v439
        %v456 = vunpack.c.l.b16 %v440
        %v457 = vunpack.c.l.b16 %v441
        %v458 = vunpack.c.l.b16 %v442
        %v459 = vunpack.c.l.b16 %v443
        %v460 = vunpack.c.l.b16 %v444
        %v461 = vpack.c.b16 %v454, %v453
        %v462 = vpack.c.b16 %v456, %v455
        %v463 = vpack.c.b16 %v458, %v457
        %v464 = vpack.c.b16 %v460, %v459
        %vm469 = vcmask 523264
        %v471 = vsel %vm469, %v433, 0
        %v474 = vsel %vm469, %v434, 0
        %v477 = vsel %vm469, %v435, 0
        %v480 = vsel %vm469, %v436, 0
        %482 = vmatprep.subr.bf16.mxu0 0
        %483 = vmatpush1.bf16.msra.mxu0 %v461
        %484 = vmatprep.subr.bf16.mxu0 0
        %485 = vmatpush1.bf16.msra.mxu0 %v462
        %486 = vmatprep.subr.bf16.mxu0 0
        %487 = vmatpush1.bf16.msra.mxu0 %v463
        %488 = vmatprep.subr.bf16.mxu0 0
        %489 = vmatpush1.bf16.msra.mxu0 %v464
        %490 = vmatprep.subr.bf16.mxu0 0
        %491 = vmatpush1.bf16.msra.mxu0 0
        %492 = vmatprep.subr.bf16.mxu0 0
        %493 = vmatpush1.bf16.msra.mxu0 0
        %494 = vmatprep.subr.bf16.mxu0 0
        %495 = vmatpush1.bf16.msra.mxu0 0
        %496 = vmatprep.subr.bf16.mxu0 0
        %497 = vmatpush1.bf16.msra.mxu0 0
        %498 = vmatprep.subr.bf16.mxu0 0
        %499 = vmatpush1.bf16.msra.mxu0 0
        %500 = vmatprep.subr.bf16.mxu0 0
        %501 = vmatpush1.bf16.msra.mxu0 0
        %502 = vmatprep.subr.bf16.mxu0 0
        %503 = vmatpush1.bf16.msra.mxu0 0
        %504 = vmatprep.subr.bf16.mxu0 0
        %505 = vmatpush1.bf16.msra.mxu0 0
        %506 = vmatprep.subr.bf16.mxu0 0
        %507 = vmatpush1.bf16.msra.mxu0 0
        %508 = vmatprep.subr.bf16.mxu0 0
        %509 = vmatpush1.bf16.msra.mxu0 0
        %510 = vmatprep.subr.bf16.mxu0 0
        %511 = vmatpush1.bf16.msra.mxu0 0
        %512 = vmatprep.subr.bf16.mxu0 0
        %513 = vmatpush1.bf16.msra.mxu0 0
        %514 = vmatprep.mubr.bf16.mxu0 0
        %515 = vmatmul.mubr.bf16.gmra.mrb[0].mxu0 %v471
        %v516 = vpop.f32.mrb[0].mxu0
        %v517 = vadd.f32 0.0, %v516
        %v518 = vpop.f32.mrb[0].mxu0
        %v519 = vpop.f32.mrb[0].mxu0
        %v520 = vadd.f32 0.0, %v519
        %v521 = vpop.f32.mrb[0].mxu0
        %522 = vmatprep.mubr.bf16.mxu0 0
        %523 = vmatmul.mubr.bf16.gmra.mrb[0].mxu0 %v474
        %v524 = vpop.f32.mrb[0].mxu0
        %v525 = vadd.f32 0.0, %v524
        %v526 = vpop.f32.mrb[0].mxu0
        %v527 = vpop.f32.mrb[0].mxu0
        %v528 = vadd.f32 0.0, %v527
        %v529 = vpop.f32.mrb[0].mxu0
        %530 = vmatprep.mubr.bf16.mxu0 0
        %531 = vmatmul.mubr.bf16.gmra.mrb[0].mxu0 %v477
        %v532 = vpop.f32.mrb[0].mxu0
        %v533 = vadd.f32 0.0, %v532
        %v534 = vpop.f32.mrb[0].mxu0
        %v535 = vpop.f32.mrb[0].mxu0
        %v536 = vadd.f32 0.0, %v535
        %v537 = vpop.f32.mrb[0].mxu0
        %538 = vmatprep.mubr.bf16.mxu0 0
        %539 = vmatmul.mubr.bf16.gmra.mrb[0].mxu0 %v480
        %v540 = vpop.f32.mrb[0].mxu0
        %v541 = vadd.f32 0.0, %v540
        %v542 = vpop.f32.mrb[0].mxu0
        %v543 = vpop.f32.mrb[0].mxu0
        %v544 = vadd.f32 0.0, %v543
        %v545 = vpop.f32.mrb[0].mxu0
        %546 = vdwg.mxu0
        %v547 = vsel %vm469, %v425, 0.0
        %v548 = vrot.slane %v547, 4
        %v549 = vadd.f32 %v547, %v548
        %v550 = vrot.slane %v549, 2
        %v551 = vadd.f32 %v549, %v550
        %v552 = vrot.slane %v551, 1
        %v553 = vadd.f32 %v551, %v552
        %v554 = vsel %vm469, %v426, 0.0
        %v555 = vrot.slane %v554, 4
        %v556 = vadd.f32 %v554, %v555
        %v557 = vrot.slane %v556, 2
        %v558 = vadd.f32 %v556, %v557
        %v559 = vrot.slane %v558, 1
        %v560 = vadd.f32 %v558, %v559
        %v561 = vsel %vm469, %v427, 0.0
        %v562 = vrot.slane %v561, 4
        %v563 = vadd.f32 %v561, %v562
        %v564 = vrot.slane %v563, 2
        %v565 = vadd.f32 %v563, %v564
        %v566 = vrot.slane %v565, 1
        %v567 = vadd.f32 %v565, %v566
        %v568 = vsel %vm469, %v428, 0.0
        %v569 = vrot.slane %v568, 4
        %v570 = vadd.f32 %v568, %v569
        %v571 = vrot.slane %v570, 2
        %v572 = vadd.f32 %v570, %v571
        %v573 = vrot.slane %v572, 1
        %v574 = vadd.f32 %v572, %v573
        %v575 = vsel %vm469, %v429, 0.0
        %v576 = vrot.slane %v575, 4
        %v577 = vadd.f32 %v575, %v576
        %v578 = vrot.slane %v577, 2
        %v579 = vadd.f32 %v577, %v578
        %v580 = vrot.slane %v579, 1
        %v581 = vadd.f32 %v579, %v580
        %v582 = vsel %vm469, %v430, 0.0
        %v583 = vrot.slane %v582, 4
        %v584 = vadd.f32 %v582, %v583
        %v585 = vrot.slane %v584, 2
        %v586 = vadd.f32 %v584, %v585
        %v587 = vrot.slane %v586, 1
        %v588 = vadd.f32 %v586, %v587
        %v589 = vsel %vm469, %v431, 0.0
        %v590 = vrot.slane %v589, 4
        %v591 = vadd.f32 %v589, %v590
        %v592 = vrot.slane %v591, 2
        %v593 = vadd.f32 %v591, %v592
        %v594 = vrot.slane %v593, 1
        %v595 = vadd.f32 %v593, %v594
        %v596 = vsel %vm469, %v432, 0.0
        %v597 = vrot.slane %v596, 4
        %v598 = vadd.f32 %v596, %v597
        %v599 = vrot.slane %v598, 2
        %v600 = vadd.f32 %v598, %v599
        %v601 = vrot.slane %v600, 1
        %v602 = vadd.f32 %v600, %v601
        %v603 = vpack.c.bf16 %v553, %v553
        %v604 = vpack.c.bf16 %v560, %v560
        %v605 = vpack.c.bf16 %v567, %v567
        %v606 = vpack.c.bf16 %v574, %v574
        %v607 = vpack.c.bf16 %v581, %v581
        %v608 = vpack.c.bf16 %v588, %v588
        %v609 = vpack.c.bf16 %v595, %v595
        %v610 = vpack.c.bf16 %v602, %v602
        %v611 = vld [vmem:[%s3] sm:$0xf]
        %v612 = vld [vmem:[%s3 + $0x4] sm:$0xf]
        %v613 = vld [vmem:[%s3 + $0x8] sm:$0xf]
        %v614 = vld [vmem:[%s3 + $0xc] sm:$0xf]
        %v615 = vld [vmem:[%s3 + $0x10] sm:$0xf]
        %v616 = vld [vmem:[%s3 + $0x14] sm:$0xf]
        %v617 = vld [vmem:[%s3 + $0x18] sm:$0xf]
        %v618 = vld [vmem:[%s3 + $0x1c] sm:$0xf]
        %v627 = vunpack.c.l.b16 %v603
        %v628 = vunpack.c.l.b16 %v604
        %v629 = vunpack.c.l.b16 %v605
        %v630 = vunpack.c.l.b16 %v606
        %v631 = vunpack.c.l.b16 %v607
        %v632 = vunpack.c.l.b16 %v608
        %v633 = vunpack.c.l.b16 %v609
        %v634 = vunpack.c.l.b16 %v610
        %vm635 = vcmask 1041409
        %v636 = vsel %vm635, %v628, %v627
        %vm637 = vcmask 1042434
        %v638 = vsel %vm637, %v629, %v636
        %vm639 = vcmask 1043459
        %v640 = vsel %vm639, %v630, %v638
        %vm641 = vcmask 1044484
        %v642 = vsel %vm641, %v631, %v640
        %vm643 = vcmask 1045509
        %v644 = vsel %vm643, %v632, %v642
        %vm645 = vcmask 1046534
        %v646 = vsel %vm645, %v633, %v644
        %vm647 = vcmask 1047559
        %v648 = vsel %vm647, %v634, %v646
        %v649 = vpack.c.b16 %v648, %v648
        %v658 = vunpack.c.l.b16 %v611
        %v659 = vunpack.c.l.b16 %v612
        %v660 = vunpack.c.l.b16 %v613
        %v661 = vunpack.c.l.b16 %v614
        %v662 = vunpack.c.l.b16 %v615
        %v663 = vunpack.c.l.b16 %v616
        %v664 = vunpack.c.l.b16 %v617
        %v665 = vunpack.c.l.b16 %v618
        %v666 = vpack.c.b16 %v659, %v658
        %v667 = vpack.c.b16 %v661, %v660
        %v668 = vpack.c.b16 %v663, %v662
        %v669 = vpack.c.b16 %v665, %v664
        %v675 = vsel %vm469, %v649, 0
        %677 = vmatprep.subr.bf16.mxu0 0
        %678 = vmatpush1.bf16.msra.mxu0 %v666
        %679 = vmatprep.subr.bf16.mxu0 0
        %680 = vmatpush1.bf16.msra.mxu0 %v667
        %681 = vmatprep.subr.bf16.mxu0 0
        %682 = vmatpush1.bf16.msra.mxu0 %v668
        %683 = vmatprep.subr.bf16.mxu0 0
        %684 = vmatpush1.bf16.msra.mxu0 %v669
        %685 = vmatprep.subr.bf16.mxu0 0
        %686 = vmatpush1.bf16.msra.mxu0 0
        %687 = vmatprep.subr.bf16.mxu0 0
        %688 = vmatpush1.bf16.msra.mxu0 0
        %689 = vmatprep.subr.bf16.mxu0 0
        %690 = vmatpush1.bf16.msra.mxu0 0
        %691 = vmatprep.subr.bf16.mxu0 0
        %692 = vmatpush1.bf16.msra.mxu0 0
        %693 = vmatprep.subr.bf16.mxu0 0
        %694 = vmatpush1.bf16.msra.mxu0 0
        %695 = vmatprep.subr.bf16.mxu0 0
        %696 = vmatpush1.bf16.msra.mxu0 0
        %697 = vmatprep.subr.bf16.mxu0 0
        %698 = vmatpush1.bf16.msra.mxu0 0
        %699 = vmatprep.subr.bf16.mxu0 0
        %700 = vmatpush1.bf16.msra.mxu0 0
        %701 = vmatprep.subr.bf16.mxu0 0
        %702 = vmatpush1.bf16.msra.mxu0 0
        %703 = vmatprep.subr.bf16.mxu0 0
        %704 = vmatpush1.bf16.msra.mxu0 0
        %705 = vmatprep.subr.bf16.mxu0 0
        %706 = vmatpush1.bf16.msra.mxu0 0
        %707 = vmatprep.subr.bf16.mxu0 0
        %708 = vmatpush1.bf16.msra.mxu0 0
        %709 = vmatprep.mubr.bf16.mxu0 0
        %710 = vmatmul.mubr.bf16.gmra.mrb[0].mxu0 %v675
        %v711 = vpop.f32.mrb[0].mxu0
        %v712 = vadd.f32 0.0, %v711
        %v713 = vpop.f32.mrb[0].mxu0
        %v714 = vpop.f32.mrb[0].mxu0
        %v715 = vpop.f32.mrb[0].mxu0
        %716 = vdwg.mxu0
        %v718 = vcombine.high %v712, %v712
        %v720 = vunpack.c.l.s4 1966171168
        %v721 = vunpack.c.0.s8 %v720
        %v722 = vlaneseq
        %v723 = vshrl.u32 %v722, 7
        %v724 = vsub.s32 %v721, %v723
        %v725 = vrot.slane %v712, %v724
        %v727 = vunpack.c.l.s4 1966171168
        %v728 = vunpack.c.0.s8 %v727
        %v729 = vlaneseq
        %v730 = vshrl.u32 %v729, 7
        %v731 = vsub.s32 %v728, %v730
        %v732 = vrot.slane %v718, %v731
        %v733 = vcombine.high %v725, %v725
        %v734 = vcombine.high %v732, %v732
        %v736 = vunpack.c.l.s4 1966171168
        %v737 = vunpack.c.0.s8 %v736
        %v738 = vlaneseq
        %v739 = vshrl.u32 %v738, 7
        %v740 = vsub.s32 %v737, %v739
        %v741 = vrot.slane %v725, %v740
        %v743 = vunpack.c.l.s4 1966171168
        %v744 = vunpack.c.0.s8 %v743
        %v745 = vlaneseq
        %v746 = vshrl.u32 %v745, 7
        %v747 = vsub.s32 %v744, %v746
        %v748 = vrot.slane %v732, %v747
        %v750 = vunpack.c.l.s4 1966171168
        %v751 = vunpack.c.0.s8 %v750
        %v752 = vlaneseq
        %v753 = vshrl.u32 %v752, 7
        %v754 = vsub.s32 %v751, %v753
        %v755 = vrot.slane %v733, %v754
        %v757 = vunpack.c.l.s4 1966171168
        %v758 = vunpack.c.0.s8 %v757
        %v759 = vlaneseq
        %v760 = vshrl.u32 %v759, 7
        %v761 = vsub.s32 %v758, %v760
        %v762 = vrot.slane %v734, %v761
        %v763 = vcombine.high %v741, %v741
        %v764 = vcombine.high %v748, %v748
        %v765 = vcombine.high %v755, %v755
        %v766 = vcombine.high %v762, %v762
        %v767 = vlaneseq
        %v768 = vshrl.u32 %v767, 7
        %v769 = vsub.s32 0, %v768
        %v770 = vrot.slane %v741, %v769
        %v771 = vlaneseq
        %v772 = vshrl.u32 %v771, 7
        %v773 = vsub.s32 0, %v772
        %v774 = vrot.slane %v755, %v773
        %v775 = vlaneseq
        %v776 = vshrl.u32 %v775, 7
        %v777 = vsub.s32 0, %v776
        %v778 = vrot.slane %v763, %v777
        %v779 = vlaneseq
        %v780 = vshrl.u32 %v779, 7
        %v781 = vsub.s32 0, %v780
        %v782 = vrot.slane %v765, %v781
        %v783 = vlaneseq
        %v784 = vshrl.u32 %v783, 7
        %v785 = vsub.s32 0, %v784
        %v786 = vrot.slane %v748, %v785
        %v787 = vlaneseq
        %v788 = vshrl.u32 %v787, 7
        %v789 = vsub.s32 0, %v788
        %v790 = vrot.slane %v762, %v789
        %v791 = vlaneseq
        %v792 = vshrl.u32 %v791, 7
        %v793 = vsub.s32 0, %v792
        %v794 = vrot.slane %v764, %v793
        %v795 = vlaneseq
        %v796 = vshrl.u32 %v795, 7
        %v797 = vsub.s32 0, %v796
        %v798 = vrot.slane %v766, %v797
        %v807 = vmul.f32 %v517, %v770
        %v808 = vmul.f32 %v520, %v774
        %v809 = vmul.f32 %v525, %v778
        %v810 = vmul.f32 %v528, %v782
        %v811 = vmul.f32 %v533, %v786
        %v812 = vmul.f32 %v536, %v790
        %v813 = vmul.f32 %v541, %v794
        %v814 = vmul.f32 %v544, %v798
        %v815 = vlaneseq
        %v816 = vand.u32 %v815, 127
        %vm817 = vcmask 130048
        %v818 = vsel %vm817, %v807, 0.0
        %819 = vadd.xlane.f32.xlu0 %v818
        %v820 = vpop.xlane.xlu0 %819
        %v821 = vsel %vm817, %v808, 0.0
        %822 = vadd.xlane.f32.xlu0 %v821
        %v823 = vpop.xlane.xlu0 %822
        %v824 = vsel %vm817, %v809, 0.0
        %825 = vadd.xlane.f32.xlu0 %v824
        %v826 = vpop.xlane.xlu0 %825
        %v827 = vsel %vm817, %v810, 0.0
        %828 = vadd.xlane.f32.xlu0 %v827
        %v829 = vpop.xlane.xlu0 %828
        %v830 = vsel %vm817, %v811, 0.0
        %831 = vadd.xlane.f32.xlu0 %v830
        %v832 = vpop.xlane.xlu0 %831
        %v833 = vsel %vm817, %v812, 0.0
        %834 = vadd.xlane.f32.xlu0 %v833
        %v835 = vpop.xlane.xlu0 %834
        %v836 = vsel %vm817, %v813, 0.0
        %837 = vadd.xlane.f32.xlu0 %v836
        %v838 = vpop.xlane.xlu0 %837
        %v839 = vsel %vm817, %v814, 0.0
        %840 = vadd.xlane.f32.xlu0 %v839
        %v841 = vpop.xlane.xlu0 %840
        %v842 = vmul.f32 %v820, 0.015625
        %v843 = vmul.f32 %v823, 0.015625
        %v844 = vmul.f32 %v826, 0.015625
        %v845 = vmul.f32 %v829, 0.015625
        %v846 = vmul.f32 %v832, 0.015625
        %v847 = vmul.f32 %v835, 0.015625
        %v848 = vmul.f32 %v838, 0.015625
        %v849 = vmul.f32 %v841, 0.015625
        %v850 = vld [vmem:[%s349] sm:$0xff]
        %v852 = vlaneseq
        %v853 = vshrl.u32 %v852, 7
        %v854 = vsub.s32 0, %v853
        %v855 = vrot.slane %v850, %v854
        %857 = vbcast.lane.b32.xlu0 %v855, 256
        %v858 = vpop.permute.xlu0 %857
        %v859 = vlaneseq
        %v860 = vshrl.u32 %v859, 7
        %v861 = vsub.s32 1, %v860
        %v862 = vrot.slane %v850, %v861
        %864 = vbcast.lane.b32.xlu0 %v862, 256
        %v865 = vpop.permute.xlu0 %864
        %v866 = vlaneseq
        %v867 = vshrl.u32 %v866, 7
        %v868 = vsub.s32 2, %v867
        %v869 = vrot.slane %v850, %v868
        %871 = vbcast.lane.b32.xlu0 %v869, 256
        %v872 = vpop.permute.xlu0 %871
        %v873 = vlaneseq
        %v874 = vshrl.u32 %v873, 7
        %v875 = vsub.s32 3, %v874
        %v876 = vrot.slane %v850, %v875
        %878 = vbcast.lane.b32.xlu0 %v876, 256
        %v879 = vpop.permute.xlu0 %878
        %v880 = vlaneseq
        %v881 = vshrl.u32 %v880, 7
        %v882 = vsub.s32 4, %v881
        %v883 = vrot.slane %v850, %v882
        %885 = vbcast.lane.b32.xlu0 %v883, 256
        %v886 = vpop.permute.xlu0 %885
        %v887 = vlaneseq
        %v888 = vshrl.u32 %v887, 7
        %v889 = vsub.s32 5, %v888
        %v890 = vrot.slane %v850, %v889
        %892 = vbcast.lane.b32.xlu0 %v890, 256
        %v893 = vpop.permute.xlu0 %892
        %v894 = vlaneseq
        %v895 = vshrl.u32 %v894, 7
        %v896 = vsub.s32 6, %v895
        %v897 = vrot.slane %v850, %v896
        %899 = vbcast.lane.b32.xlu0 %v897, 256
        %v900 = vpop.permute.xlu0 %899
        %v901 = vlaneseq
        %v902 = vshrl.u32 %v901, 7
        %v903 = vsub.s32 7, %v902
        %v904 = vrot.slane %v850, %v903
        %906 = vbcast.lane.b32.xlu0 %v904, 256
        %v907 = vpop.permute.xlu0 %906
        %v916 = vadd.f32 %v842, %v858
        %v917 = vadd.f32 %v843, %v865
        %v918 = vadd.f32 %v844, %v872
        %v919 = vadd.f32 %v845, %v879
        %v920 = vadd.f32 %v846, %v886
        %v921 = vadd.f32 %v847, %v893
        %v922 = vadd.f32 %v848, %v900
        %v923 = vadd.f32 %v849, %v907
        %932 = vset.pattern.permute.xlu0 0
        %933 = vperm.xlu0 %932, %v916
        %v934 = vpop.permute.xlu0 %933
        %935 = vset.pattern.permute.xlu0 0
        %936 = vperm.xlu0 %935, %v917
        %v937 = vpop.permute.xlu0 %936
        %938 = vset.pattern.permute.xlu0 0
        %939 = vperm.xlu0 %938, %v918
        %v940 = vpop.permute.xlu0 %939
        %941 = vset.pattern.permute.xlu0 0
        %942 = vperm.xlu0 %941, %v919
        %v943 = vpop.permute.xlu0 %942
        %944 = vset.pattern.permute.xlu0 0
        %945 = vperm.xlu0 %944, %v920
        %v946 = vpop.permute.xlu0 %945
        %947 = vset.pattern.permute.xlu0 0
        %948 = vperm.xlu0 %947, %v921
        %v949 = vpop.permute.xlu0 %948
        %950 = vset.pattern.permute.xlu0 0
        %951 = vperm.xlu0 %950, %v922
        %v952 = vpop.permute.xlu0 %951
        %953 = vset.pattern.permute.xlu0 0
        %954 = vperm.xlu0 %953, %v923
        %v955 = vpop.permute.xlu0 %954
        %v956 = vlaneseq
        %v957 = vshrl.u32 %v956, 7
        %v958 = vsub.s32 %v816, %v957
        %v959 = vrot.slane %v934, %v958
        %v960 = vlaneseq
        %v961 = vshrl.u32 %v960, 7
        %v962 = vsub.s32 %v816, %v961
        %v963 = vrot.slane %v937, %v962
        %v964 = vlaneseq
        %v965 = vshrl.u32 %v964, 7
        %v966 = vsub.s32 %v816, %v965
        %v967 = vrot.slane %v940, %v966
        %v968 = vlaneseq
        %v969 = vshrl.u32 %v968, 7
        %v970 = vsub.s32 %v816, %v969
        %v971 = vrot.slane %v943, %v970
        %v972 = vlaneseq
        %v973 = vshrl.u32 %v972, 7
        %v974 = vsub.s32 %v816, %v973
        %v975 = vrot.slane %v946, %v974
        %v976 = vlaneseq
        %v977 = vshrl.u32 %v976, 7
        %v978 = vsub.s32 %v816, %v977
        %v979 = vrot.slane %v949, %v978
        %v980 = vlaneseq
        %v981 = vshrl.u32 %v980, 7
        %v982 = vsub.s32 %v816, %v981
        %v983 = vrot.slane %v952, %v982
        %v984 = vlaneseq
        %v985 = vshrl.u32 %v984, 7
        %v986 = vsub.s32 %v816, %v985
        %v987 = vrot.slane %v955, %v986
        %v988 = vsel %vm635, %v963, %v959
        %v989 = vsel %vm637, %v967, %v988
        %v990 = vsel %vm639, %v971, %v989
        %v991 = vsel %vm641, %v975, %v990
        %v992 = vsel %vm643, %v979, %v991
        %v993 = vsel %vm645, %v983, %v992
        %v994 = vsel %vm647, %v987, %v993
        %vm996 = vcmask 64512
        %v997 = vsel %vm996, %v994, -inf
        %998 = vmax.xlane.f32.xlu0 %v997
        %v999 = vpop.xlane.xlu0 %998
        %v1001 = vlaneseq
        %v1002 = vshrl.u32 %v1001, 7
        %v1003 = vsub.s32 0, %v1002
        %v1004 = vrot.slane %v999, %v1003
        %v1005 = vlaneseq
        %v1006 = vshrl.u32 %v1005, 7
        %v1007 = vsub.s32 1, %v1006
        %v1008 = vrot.slane %v999, %v1007
        %v1009 = vlaneseq
        %v1010 = vshrl.u32 %v1009, 7
        %v1011 = vsub.s32 2, %v1010
        %v1012 = vrot.slane %v999, %v1011
        %v1013 = vlaneseq
        %v1014 = vshrl.u32 %v1013, 7
        %v1015 = vsub.s32 3, %v1014
        %v1016 = vrot.slane %v999, %v1015
        %v1017 = vlaneseq
        %v1018 = vshrl.u32 %v1017, 7
        %v1019 = vsub.s32 4, %v1018
        %v1020 = vrot.slane %v999, %v1019
        %v1021 = vlaneseq
        %v1022 = vshrl.u32 %v1021, 7
        %v1023 = vsub.s32 5, %v1022
        %v1024 = vrot.slane %v999, %v1023
        %v1025 = vlaneseq
        %v1026 = vshrl.u32 %v1025, 7
        %v1027 = vsub.s32 6, %v1026
        %v1028 = vrot.slane %v999, %v1027
        %v1029 = vlaneseq
        %v1030 = vshrl.u32 %v1029, 7
        %v1031 = vsub.s32 7, %v1030
        %v1032 = vrot.slane %v999, %v1031
        %vm1041 = vcmp.ge.f32.partialorder %v916, %v1004
        %vm1042 = vcmp.ge.f32.partialorder %v917, %v1008
        %vm1043 = vcmp.ge.f32.partialorder %v918, %v1012
        %vm1044 = vcmp.ge.f32.partialorder %v919, %v1016
        %vm1045 = vcmp.ge.f32.partialorder %v920, %v1020
        %vm1046 = vcmp.ge.f32.partialorder %v921, %v1024
        %vm1047 = vcmp.ge.f32.partialorder %v922, %v1028
        %vm1048 = vcmp.ge.f32.partialorder %v923, %v1032
        %1050 = vbcast.lane.b32.xlu0 %v816, 256
        %v1051 = vpop.permute.xlu0 %1050
        %v1052 = vsel %vm1041, %v1051, 8
        %v1053 = vsel %vm1042, %v1051, 8
        %v1054 = vsel %vm1043, %v1051, 8
        %v1055 = vsel %vm1044, %v1051, 8
        %v1056 = vsel %vm1045, %v1051, 8
        %v1057 = vsel %vm1046, %v1051, 8
        %v1058 = vsel %vm1047, %v1051, 8
        %v1059 = vsel %vm1048, %v1051, 8
        %1060 = vset.pattern.permute.xlu0 0
        %1061 = vperm.xlu0 %1060, %v1052
        %v1062 = vpop.permute.xlu0 %1061
        %1063 = vset.pattern.permute.xlu0 0
        %1064 = vperm.xlu0 %1063, %v1053
        %v1065 = vpop.permute.xlu0 %1064
        %1066 = vset.pattern.permute.xlu0 0
        %1067 = vperm.xlu0 %1066, %v1054
        %v1068 = vpop.permute.xlu0 %1067
        %1069 = vset.pattern.permute.xlu0 0
        %1070 = vperm.xlu0 %1069, %v1055
        %v1071 = vpop.permute.xlu0 %1070
        %1072 = vset.pattern.permute.xlu0 0
        %1073 = vperm.xlu0 %1072, %v1056
        %v1074 = vpop.permute.xlu0 %1073
        %1075 = vset.pattern.permute.xlu0 0
        %1076 = vperm.xlu0 %1075, %v1057
        %v1077 = vpop.permute.xlu0 %1076
        %1078 = vset.pattern.permute.xlu0 0
        %1079 = vperm.xlu0 %1078, %v1058
        %v1080 = vpop.permute.xlu0 %1079
        %1081 = vset.pattern.permute.xlu0 0
        %1082 = vperm.xlu0 %1081, %v1059
        %v1083 = vpop.permute.xlu0 %1082
        %v1084 = vlaneseq
        %v1085 = vshrl.u32 %v1084, 7
        %v1086 = vsub.s32 %v816, %v1085
        %v1087 = vrot.slane %v1062, %v1086
        %v1088 = vlaneseq
        %v1089 = vshrl.u32 %v1088, 7
        %v1090 = vsub.s32 %v816, %v1089
        %v1091 = vrot.slane %v1065, %v1090
        %v1092 = vlaneseq
        %v1093 = vshrl.u32 %v1092, 7
        %v1094 = vsub.s32 %v816, %v1093
        %v1095 = vrot.slane %v1068, %v1094
        %v1096 = vlaneseq
        %v1097 = vshrl.u32 %v1096, 7
        %v1098 = vsub.s32 %v816, %v1097
        %v1099 = vrot.slane %v1071, %v1098
        %v1100 = vlaneseq
        %v1101 = vshrl.u32 %v1100, 7
        %v1102 = vsub.s32 %v816, %v1101
        %v1103 = vrot.slane %v1074, %v1102
        %v1104 = vlaneseq
        %v1105 = vshrl.u32 %v1104, 7
        %v1106 = vsub.s32 %v816, %v1105
        %v1107 = vrot.slane %v1077, %v1106
        %v1108 = vlaneseq
        %v1109 = vshrl.u32 %v1108, 7
        %v1110 = vsub.s32 %v816, %v1109
        %v1111 = vrot.slane %v1080, %v1110
        %v1112 = vlaneseq
        %v1113 = vshrl.u32 %v1112, 7
        %v1114 = vsub.s32 %v816, %v1113
        %v1115 = vrot.slane %v1083, %v1114
        %v1116 = vsel %vm635, %v1091, %v1087
        %v1117 = vsel %vm637, %v1095, %v1116
        %v1118 = vsel %vm639, %v1099, %v1117
        %v1119 = vsel %vm641, %v1103, %v1118
        %v1120 = vsel %vm643, %v1107, %v1119
        %v1121 = vsel %vm645, %v1111, %v1120
        %v1122 = vsel %vm647, %v1115, %v1121
        %v1123 = vsel %vm996, %v1122, 2147483647
        %v1124 = vand.u32 %v1123, 65535
        %v1125 = vshra.s32 %v1123, 16
        %v1126 = vcvt.s32.f32 %v1124
        %v1127 = vcvt.s32.f32 %v1125
        %1128 = vmin.xlane.f32.xlu0 %v1127
        %v1129 = vpop.xlane.xlu0 %1128
        %vm1130 = vcmp.eq.f32.partialorder %v1127, %v1129
        %v1131 = vsel %vm1130, %v1126, inf
        %1132 = vmin.xlane.f32.xlu0 %v1131
        %v1133 = vpop.xlane.xlu0 %1132
        %v1134 = vcvt.f32.s32 %v1133
        %v1135 = vcvt.f32.s32 %v1129
        %v1136 = vshll.u32 %v1135, 16
        %v1137 = vadd.s32 %v1136, %v1134
        %vm1138 = vcmp.eq.s32.totalorder %v816, %v1137
        %v1139 = vsel %vm1138, 1, 0
        %v1140 = vcvt.s32.f32 %v1139
        %v1141 = vlaneseq
        %v1142 = vshrl.u32 %v1141, 7
        %v1143 = vsub.s32 0, %v1142
        %v1144 = vrot.slane %v1140, %v1143
        %1146 = vbcast.lane.b32.xlu0 %v1144, 256
        %v1147 = vpop.permute.xlu0 %1146
        %v1148 = vlaneseq
        %v1149 = vshrl.u32 %v1148, 7
        %v1150 = vsub.s32 1, %v1149
        %v1151 = vrot.slane %v1140, %v1150
        %1153 = vbcast.lane.b32.xlu0 %v1151, 256
        %v1154 = vpop.permute.xlu0 %1153
        %v1155 = vlaneseq
        %v1156 = vshrl.u32 %v1155, 7
        %v1157 = vsub.s32 2, %v1156
        %v1158 = vrot.slane %v1140, %v1157
        %1160 = vbcast.lane.b32.xlu0 %v1158, 256
        %v1161 = vpop.permute.xlu0 %1160
        %v1162 = vlaneseq
        %v1163 = vshrl.u32 %v1162, 7
        %v1164 = vsub.s32 3, %v1163
        %v1165 = vrot.slane %v1140, %v1164
        %1167 = vbcast.lane.b32.xlu0 %v1165, 256
        %v1168 = vpop.permute.xlu0 %1167
        %v1169 = vlaneseq
        %v1170 = vshrl.u32 %v1169, 7
        %v1171 = vsub.s32 4, %v1170
        %v1172 = vrot.slane %v1140, %v1171
        %1174 = vbcast.lane.b32.xlu0 %v1172, 256
        %v1175 = vpop.permute.xlu0 %1174
        %v1176 = vlaneseq
        %v1177 = vshrl.u32 %v1176, 7
        %v1178 = vsub.s32 5, %v1177
        %v1179 = vrot.slane %v1140, %v1178
        %1181 = vbcast.lane.b32.xlu0 %v1179, 256
        %v1182 = vpop.permute.xlu0 %1181
        %v1183 = vlaneseq
        %v1184 = vshrl.u32 %v1183, 7
        %v1185 = vsub.s32 6, %v1184
        %v1186 = vrot.slane %v1140, %v1185
        %1188 = vbcast.lane.b32.xlu0 %v1186, 256
        %v1189 = vpop.permute.xlu0 %1188
        %v1190 = vlaneseq
        %v1191 = vshrl.u32 %v1190, 7
        %v1192 = vsub.s32 7, %v1191
        %v1193 = vrot.slane %v1140, %v1192
        %1195 = vbcast.lane.b32.xlu0 %v1193, 256
        %v1196 = vpop.permute.xlu0 %1195
        %v1197 = vmul.f32 %v1147, %v416
        %v1198 = vmul.f32 %v1154, %v417
        %v1199 = vmul.f32 %v1161, %v418
        %v1200 = vmul.f32 %v1168, %v419
        %v1201 = vmul.f32 %v1175, %v420
        %v1202 = vmul.f32 %v1182, %v421
        %v1203 = vmul.f32 %v1189, %v422
        %v1204 = vmul.f32 %v1196, %v423
        %v1205 = vsel %vm469, %v1197, 0.0
        %v1206 = vrot.slane %v1205, 4
        %v1207 = vadd.f32 %v1205, %v1206
        %v1208 = vrot.slane %v1207, 2
        %v1209 = vadd.f32 %v1207, %v1208
        %v1210 = vrot.slane %v1209, 1
        %v1211 = vadd.f32 %v1209, %v1210
        %v1212 = vsel %vm469, %v1198, 0.0
        %v1213 = vrot.slane %v1212, 4
        %v1214 = vadd.f32 %v1212, %v1213
        %v1215 = vrot.slane %v1214, 2
        %v1216 = vadd.f32 %v1214, %v1215
        %v1217 = vrot.slane %v1216, 1
        %v1218 = vadd.f32 %v1216, %v1217
        %v1219 = vsel %vm469, %v1199, 0.0
        %v1220 = vrot.slane %v1219, 4
        %v1221 = vadd.f32 %v1219, %v1220
        %v1222 = vrot.slane %v1221, 2
        %v1223 = vadd.f32 %v1221, %v1222
        %v1224 = vrot.slane %v1223, 1
        %v1225 = vadd.f32 %v1223, %v1224
        %v1226 = vsel %vm469, %v1200, 0.0
        %v1227 = vrot.slane %v1226, 4
        %v1228 = vadd.f32 %v1226, %v1227
        %v1229 = vrot.slane %v1228, 2
        %v1230 = vadd.f32 %v1228, %v1229
        %v1231 = vrot.slane %v1230, 1
        %v1232 = vadd.f32 %v1230, %v1231
        %v1233 = vsel %vm469, %v1201, 0.0
        %v1234 = vrot.slane %v1233, 4
        %v1235 = vadd.f32 %v1233, %v1234
        %v1236 = vrot.slane %v1235, 2
        %v1237 = vadd.f32 %v1235, %v1236
        %v1238 = vrot.slane %v1237, 1
        %v1239 = vadd.f32 %v1237, %v1238
        %v1240 = vsel %vm469, %v1202, 0.0
        %v1241 = vrot.slane %v1240, 4
        %v1242 = vadd.f32 %v1240, %v1241
        %v1243 = vrot.slane %v1242, 2
        %v1244 = vadd.f32 %v1242, %v1243
        %v1245 = vrot.slane %v1244, 1
        %v1246 = vadd.f32 %v1244, %v1245
        %v1247 = vsel %vm469, %v1203, 0.0
        %v1248 = vrot.slane %v1247, 4
        %v1249 = vadd.f32 %v1247, %v1248
        %v1250 = vrot.slane %v1249, 2
        %v1251 = vadd.f32 %v1249, %v1250
        %v1252 = vrot.slane %v1251, 1
        %v1253 = vadd.f32 %v1251, %v1252
        %v1254 = vsel %vm469, %v1204, 0.0
        %v1255 = vrot.slane %v1254, 4
        %v1256 = vadd.f32 %v1254, %v1255
        %v1257 = vrot.slane %v1256, 2
        %v1258 = vadd.f32 %v1256, %v1257
        %v1259 = vrot.slane %v1258, 1
        %v1260 = vadd.f32 %v1258, %v1259
        %v1261 = vld [vmem:[%s6] sm:$0x1]
        %v1262 = vpack.c.bf16 %v1211, %v1211
        %v1263 = vpack.c.bf16 %v1218, %v1218
        %v1264 = vpack.c.bf16 %v1225, %v1225
        %v1265 = vpack.c.bf16 %v1232, %v1232
        %v1266 = vpack.c.bf16 %v1239, %v1239
        %v1267 = vpack.c.bf16 %v1246, %v1246
        %v1268 = vpack.c.bf16 %v1253, %v1253
        %v1269 = vpack.c.bf16 %v1260, %v1260
        %v1270 = vld [vmem:[%s5] sm:$0xf]
        %v1271 = vld [vmem:[%s5 + $0x4] sm:$0xf]
        %v1272 = vld [vmem:[%s5 + $0x8] sm:$0xf]
        %v1273 = vld [vmem:[%s5 + $0xc] sm:$0xf]
        %v1274 = vld [vmem:[%s5 + $0x10] sm:$0xf]
        %v1275 = vld [vmem:[%s5 + $0x14] sm:$0xf]
        %v1276 = vld [vmem:[%s5 + $0x18] sm:$0xf]
        %v1277 = vld [vmem:[%s5 + $0x1c] sm:$0xf]
        %v1286 = vunpack.c.l.b16 %v1262
        %v1287 = vunpack.c.l.b16 %v1263
        %v1288 = vunpack.c.l.b16 %v1264
        %v1289 = vunpack.c.l.b16 %v1265
        %v1290 = vunpack.c.l.b16 %v1266
        %v1291 = vunpack.c.l.b16 %v1267
        %v1292 = vunpack.c.l.b16 %v1268
        %v1293 = vunpack.c.l.b16 %v1269
        %v1294 = vsel %vm635, %v1287, %v1286
        %v1295 = vsel %vm637, %v1288, %v1294
        %v1296 = vsel %vm639, %v1289, %v1295
        %v1297 = vsel %vm641, %v1290, %v1296
        %v1298 = vsel %vm643, %v1291, %v1297
        %v1299 = vsel %vm645, %v1292, %v1298
        %v1300 = vsel %vm647, %v1293, %v1299
        %v1301 = vpack.c.b16 %v1300, %v1300
        %v1310 = vunpack.c.l.b16 %v1270
        %v1311 = vunpack.c.l.b16 %v1271
        %v1312 = vunpack.c.l.b16 %v1272
        %v1313 = vunpack.c.l.b16 %v1273
        %v1314 = vunpack.c.l.b16 %v1274
        %v1315 = vunpack.c.l.b16 %v1275
        %v1316 = vunpack.c.l.b16 %v1276
        %v1317 = vunpack.c.l.b16 %v1277
        %v1318 = vpack.c.b16 %v1311, %v1310
        %v1319 = vpack.c.b16 %v1313, %v1312
        %v1320 = vpack.c.b16 %v1315, %v1314
        %v1321 = vpack.c.b16 %v1317, %v1316
        %v1327 = vsel %vm469, %v1301, 0
        %1329 = vmatprep.subr.bf16.mxu0 0
        %1330 = vmatpush1.bf16.msra.mxu0 %v1318
        %1331 = vmatprep.subr.bf16.mxu0 0
        %1332 = vmatpush1.bf16.msra.mxu0 %v1319
        %1333 = vmatprep.subr.bf16.mxu0 0
        %1334 = vmatpush1.bf16.msra.mxu0 %v1320
        %1335 = vmatprep.subr.bf16.mxu0 0
        %1336 = vmatpush1.bf16.msra.mxu0 %v1321
        %1337 = vmatprep.subr.bf16.mxu0 0
        %1338 = vmatpush1.bf16.msra.mxu0 0
        %1339 = vmatprep.subr.bf16.mxu0 0
        %1340 = vmatpush1.bf16.msra.mxu0 0
        %1341 = vmatprep.subr.bf16.mxu0 0
        %1342 = vmatpush1.bf16.msra.mxu0 0
        %1343 = vmatprep.subr.bf16.mxu0 0
        %1344 = vmatpush1.bf16.msra.mxu0 0
        %1345 = vmatprep.subr.bf16.mxu0 0
        %1346 = vmatpush1.bf16.msra.mxu0 0
        %1347 = vmatprep.subr.bf16.mxu0 0
        %1348 = vmatpush1.bf16.msra.mxu0 0
        %1349 = vmatprep.subr.bf16.mxu0 0
        %1350 = vmatpush1.bf16.msra.mxu0 0
        %1351 = vmatprep.subr.bf16.mxu0 0
        %1352 = vmatpush1.bf16.msra.mxu0 0
        %1353 = vmatprep.subr.bf16.mxu0 0
        %1354 = vmatpush1.bf16.msra.mxu0 0
        %1355 = vmatprep.subr.bf16.mxu0 0
        %1356 = vmatpush1.bf16.msra.mxu0 0
        %1357 = vmatprep.subr.bf16.mxu0 0
        %1358 = vmatpush1.bf16.msra.mxu0 0
        %1359 = vmatprep.subr.bf16.mxu0 0
        %1360 = vmatpush1.bf16.msra.mxu0 0
        %1361 = vmatprep.mubr.bf16.mxu0 0
        %1362 = vmatmul.mubr.bf16.gmra.mrb[0].mxu0 %v1327
        %v1363 = vpop.f32.mrb[0].mxu0
        %v1364 = vadd.f32 0.0, %v1363
        %v1365 = vpop.f32.mrb[0].mxu0
        %v1366 = vpop.f32.mrb[0].mxu0
        %v1367 = vpop.f32.mrb[0].mxu0
        %1368 = vdwg.mxu0
        %v1369 = vmul.f32 %v1364, 2.0
        %v1371 = vlaneseq
        %v1372 = vshrl.u32 %v1371, 7
        %v1373 = vsub.s32 0, %v1372
        %v1374 = vrot.slane %v1261, %v1373
        %v1376 = vsub.f32 %v1374, %v1369
        %v1377 = vsel %vm996, %v1376, inf
        %1378 = vmin.xlane.f32.xlu0 %v1377
        %v1379 = vpop.xlane.xlu0 %1378
        %vm1380 = vcmp.le.f32.partialorder %v1376, %v1379
        %v1381 = vsel %vm1380, %v816, 8
        %v1382 = vsel %vm996, %v1381, 2147483647
        %v1383 = vand.u32 %v1382, 65535
        %v1384 = vshra.s32 %v1382, 16
        %v1385 = vcvt.s32.f32 %v1383
        %v1386 = vcvt.s32.f32 %v1384
        %1387 = vmin.xlane.f32.xlu0 %v1386
        %v1388 = vpop.xlane.xlu0 %1387
        %vm1389 = vcmp.eq.f32.partialorder %v1386, %v1388
        %v1390 = vsel %vm1389, %v1385, inf
        %1391 = vmin.xlane.f32.xlu0 %v1390
        %v1392 = vpop.xlane.xlu0 %1391
        %v1393 = vcvt.f32.s32 %v1392
        %v1394 = vcvt.f32.s32 %v1388
        %v1395 = vshll.u32 %v1394, 16
        %v1396 = vadd.s32 %v1395, %v1393
        %1405 = vrot.lane.b32.xlu0 %v807, 112
        %v1406 = vpop.permute.xlu0 %1405
        %1407 = vrot.lane.b32.xlu0 %v808, 112
        %v1408 = vpop.permute.xlu0 %1407
        %1409 = vrot.lane.b32.xlu0 %v809, 112
        %v1410 = vpop.permute.xlu0 %1409
        %1411 = vrot.lane.b32.xlu0 %v810, 112
        %v1412 = vpop.permute.xlu0 %1411
        %1413 = vrot.lane.b32.xlu0 %v811, 112
        %v1414 = vpop.permute.xlu0 %1413
        %1415 = vrot.lane.b32.xlu0 %v812, 112
        %v1416 = vpop.permute.xlu0 %1415
        %1417 = vrot.lane.b32.xlu0 %v813, 112
        %v1418 = vpop.permute.xlu0 %1417
        %1419 = vrot.lane.b32.xlu0 %v814, 112
        %v1420 = vpop.permute.xlu0 %1419
        %v1429 = vsel %vm817, %v1406, 0.0
        %1430 = vadd.xlane.f32.xlu0 %v1429
        %v1431 = vpop.xlane.xlu0 %1430
        %v1432 = vsel %vm817, %v1408, 0.0
        %1433 = vadd.xlane.f32.xlu0 %v1432
        %v1434 = vpop.xlane.xlu0 %1433
        %v1435 = vsel %vm817, %v1410, 0.0
        %1436 = vadd.xlane.f32.xlu0 %v1435
        %v1437 = vpop.xlane.xlu0 %1436
        %v1438 = vsel %vm817, %v1412, 0.0
        %1439 = vadd.xlane.f32.xlu0 %v1438
        %v1440 = vpop.xlane.xlu0 %1439
        %v1441 = vsel %vm817, %v1414, 0.0
        %1442 = vadd.xlane.f32.xlu0 %v1441
        %v1443 = vpop.xlane.xlu0 %1442
        %v1444 = vsel %vm817, %v1416, 0.0
        %1445 = vadd.xlane.f32.xlu0 %v1444
        %v1446 = vpop.xlane.xlu0 %1445
        %v1447 = vsel %vm817, %v1418, 0.0
        %1448 = vadd.xlane.f32.xlu0 %v1447
        %v1449 = vpop.xlane.xlu0 %1448
        %v1450 = vsel %vm817, %v1420, 0.0
        %1451 = vadd.xlane.f32.xlu0 %v1450
        %v1452 = vpop.xlane.xlu0 %1451
        %v1453 = vmul.f32 %v1431, 0.015625
        %v1454 = vmul.f32 %v1434, 0.015625
        %v1455 = vmul.f32 %v1437, 0.015625
        %v1456 = vmul.f32 %v1440, 0.015625
        %v1457 = vmul.f32 %v1443, 0.015625
        %v1458 = vmul.f32 %v1446, 0.015625
        %v1459 = vmul.f32 %v1449, 0.015625
        %v1460 = vmul.f32 %v1452, 0.015625
        %s1461 = scalar_lea.vmem %s349, 8 [#allocation2]
        %v1462 = vld [vmem:[%s1461] sm:$0xff]
        %v1464 = vlaneseq
        %v1465 = vshrl.u32 %v1464, 7
        %v1466 = vsub.s32 0, %v1465
        %v1467 = vrot.slane %v1462, %v1466
        %1469 = vbcast.lane.b32.xlu0 %v1467, 256
        %v1470 = vpop.permute.xlu0 %1469
        %v1471 = vlaneseq
        %v1472 = vshrl.u32 %v1471, 7
        %v1473 = vsub.s32 1, %v1472
        %v1474 = vrot.slane %v1462, %v1473
        %1476 = vbcast.lane.b32.xlu0 %v1474, 256
        %v1477 = vpop.permute.xlu0 %1476
        %v1478 = vlaneseq
        %v1479 = vshrl.u32 %v1478, 7
        %v1480 = vsub.s32 2, %v1479
        %v1481 = vrot.slane %v1462, %v1480
        %1483 = vbcast.lane.b32.xlu0 %v1481, 256
        %v1484 = vpop.permute.xlu0 %1483
        %v1485 = vlaneseq
        %v1486 = vshrl.u32 %v1485, 7
        %v1487 = vsub.s32 3, %v1486
        %v1488 = vrot.slane %v1462, %v1487
        %1490 = vbcast.lane.b32.xlu0 %v1488, 256
        %v1491 = vpop.permute.xlu0 %1490
        %v1492 = vlaneseq
        %v1493 = vshrl.u32 %v1492, 7
        %v1494 = vsub.s32 4, %v1493
        %v1495 = vrot.slane %v1462, %v1494
        %1497 = vbcast.lane.b32.xlu0 %v1495, 256
        %v1498 = vpop.permute.xlu0 %1497
        %v1499 = vlaneseq
        %v1500 = vshrl.u32 %v1499, 7
        %v1501 = vsub.s32 5, %v1500
        %v1502 = vrot.slane %v1462, %v1501
        %1504 = vbcast.lane.b32.xlu0 %v1502, 256
        %v1505 = vpop.permute.xlu0 %1504
        %v1506 = vlaneseq
        %v1507 = vshrl.u32 %v1506, 7
        %v1508 = vsub.s32 6, %v1507
        %v1509 = vrot.slane %v1462, %v1508
        %1511 = vbcast.lane.b32.xlu0 %v1509, 256
        %v1512 = vpop.permute.xlu0 %1511
        %v1513 = vlaneseq
        %v1514 = vshrl.u32 %v1513, 7
        %v1515 = vsub.s32 7, %v1514
        %v1516 = vrot.slane %v1462, %v1515
        %1518 = vbcast.lane.b32.xlu0 %v1516, 256
        %v1519 = vpop.permute.xlu0 %1518
        %v1528 = vadd.f32 %v1453, %v1470
        %v1529 = vadd.f32 %v1454, %v1477
        %v1530 = vadd.f32 %v1455, %v1484
        %v1531 = vadd.f32 %v1456, %v1491
        %v1532 = vadd.f32 %v1457, %v1498
        %v1533 = vadd.f32 %v1458, %v1505
        %v1534 = vadd.f32 %v1459, %v1512
        %v1535 = vadd.f32 %v1460, %v1519
        %1544 = vset.pattern.permute.xlu0 0
        %1545 = vperm.xlu0 %1544, %v1528
        %v1546 = vpop.permute.xlu0 %1545
        %1547 = vset.pattern.permute.xlu0 0
        %1548 = vperm.xlu0 %1547, %v1529
        %v1549 = vpop.permute.xlu0 %1548
        %1550 = vset.pattern.permute.xlu0 0
        %1551 = vperm.xlu0 %1550, %v1530
        %v1552 = vpop.permute.xlu0 %1551
        %1553 = vset.pattern.permute.xlu0 0
        %1554 = vperm.xlu0 %1553, %v1531
        %v1555 = vpop.permute.xlu0 %1554
        %1556 = vset.pattern.permute.xlu0 0
        %1557 = vperm.xlu0 %1556, %v1532
        %v1558 = vpop.permute.xlu0 %1557
        %1559 = vset.pattern.permute.xlu0 0
        %1560 = vperm.xlu0 %1559, %v1533
        %v1561 = vpop.permute.xlu0 %1560
        %1562 = vset.pattern.permute.xlu0 0
        %1563 = vperm.xlu0 %1562, %v1534
        %v1564 = vpop.permute.xlu0 %1563
        %1565 = vset.pattern.permute.xlu0 0
        %1566 = vperm.xlu0 %1565, %v1535
        %v1567 = vpop.permute.xlu0 %1566
        %v1568 = vlaneseq
        %v1569 = vshrl.u32 %v1568, 7
        %v1570 = vsub.s32 %v816, %v1569
        %v1571 = vrot.slane %v1546, %v1570
        %v1572 = vlaneseq
        %v1573 = vshrl.u32 %v1572, 7
        %v1574 = vsub.s32 %v816, %v1573
        %v1575 = vrot.slane %v1549, %v1574
        %v1576 = vlaneseq
        %v1577 = vshrl.u32 %v1576, 7
        %v1578 = vsub.s32 %v816, %v1577
        %v1579 = vrot.slane %v1552, %v1578
        %v1580 = vlaneseq
        %v1581 = vshrl.u32 %v1580, 7
        %v1582 = vsub.s32 %v816, %v1581
        %v1583 = vrot.slane %v1555, %v1582
        %v1584 = vlaneseq
        %v1585 = vshrl.u32 %v1584, 7
        %v1586 = vsub.s32 %v816, %v1585
        %v1587 = vrot.slane %v1558, %v1586
        %v1588 = vlaneseq
        %v1589 = vshrl.u32 %v1588, 7
        %v1590 = vsub.s32 %v816, %v1589
        %v1591 = vrot.slane %v1561, %v1590
        %v1592 = vlaneseq
        %v1593 = vshrl.u32 %v1592, 7
        %v1594 = vsub.s32 %v816, %v1593
        %v1595 = vrot.slane %v1564, %v1594
        %v1596 = vlaneseq
        %v1597 = vshrl.u32 %v1596, 7
        %v1598 = vsub.s32 %v816, %v1597
        %v1599 = vrot.slane %v1567, %v1598
        %v1600 = vsel %vm635, %v1575, %v1571
        %v1601 = vsel %vm637, %v1579, %v1600
        %v1602 = vsel %vm639, %v1583, %v1601
        %v1603 = vsel %vm641, %v1587, %v1602
        %v1604 = vsel %vm643, %v1591, %v1603
        %v1605 = vsel %vm645, %v1595, %v1604
        %v1606 = vsel %vm647, %v1599, %v1605
        %v1608 = vsel %vm996, %v1606, -inf
        %1609 = vmax.xlane.f32.xlu0 %v1608
        %v1610 = vpop.xlane.xlu0 %1609
        %v1612 = vlaneseq
        %v1613 = vshrl.u32 %v1612, 7
        %v1614 = vsub.s32 0, %v1613
        %v1615 = vrot.slane %v1610, %v1614
        %v1616 = vlaneseq
        %v1617 = vshrl.u32 %v1616, 7
        %v1618 = vsub.s32 1, %v1617
        %v1619 = vrot.slane %v1610, %v1618
        %v1620 = vlaneseq
        %v1621 = vshrl.u32 %v1620, 7
        %v1622 = vsub.s32 2, %v1621
        %v1623 = vrot.slane %v1610, %v1622
        %v1624 = vlaneseq
        %v1625 = vshrl.u32 %v1624, 7
        %v1626 = vsub.s32 3, %v1625
        %v1627 = vrot.slane %v1610, %v1626
        %v1628 = vlaneseq
        %v1629 = vshrl.u32 %v1628, 7
        %v1630 = vsub.s32 4, %v1629
        %v1631 = vrot.slane %v1610, %v1630
        %v1632 = vlaneseq
        %v1633 = vshrl.u32 %v1632, 7
        %v1634 = vsub.s32 5, %v1633
        %v1635 = vrot.slane %v1610, %v1634
        %v1636 = vlaneseq
        %v1637 = vshrl.u32 %v1636, 7
        %v1638 = vsub.s32 6, %v1637
        %v1639 = vrot.slane %v1610, %v1638
        %v1640 = vlaneseq
        %v1641 = vshrl.u32 %v1640, 7
        %v1642 = vsub.s32 7, %v1641
        %v1643 = vrot.slane %v1610, %v1642
        %vm1652 = vcmp.ge.f32.partialorder %v1528, %v1615
        %vm1653 = vcmp.ge.f32.partialorder %v1529, %v1619
        %vm1654 = vcmp.ge.f32.partialorder %v1530, %v1623
        %vm1655 = vcmp.ge.f32.partialorder %v1531, %v1627
        %vm1656 = vcmp.ge.f32.partialorder %v1532, %v1631
        %vm1657 = vcmp.ge.f32.partialorder %v1533, %v1635
        %vm1658 = vcmp.ge.f32.partialorder %v1534, %v1639
        %vm1659 = vcmp.ge.f32.partialorder %v1535, %v1643
        %v1660 = vsel %vm1652, %v1051, 8
        %v1661 = vsel %vm1653, %v1051, 8
        %v1662 = vsel %vm1654, %v1051, 8
        %v1663 = vsel %vm1655, %v1051, 8
        %v1664 = vsel %vm1656, %v1051, 8
        %v1665 = vsel %vm1657, %v1051, 8
        %v1666 = vsel %vm1658, %v1051, 8
        %v1667 = vsel %vm1659, %v1051, 8
        %1668 = vset.pattern.permute.xlu0 0
        %1669 = vperm.xlu0 %1668, %v1660
        %v1670 = vpop.permute.xlu0 %1669
        %1671 = vset.pattern.permute.xlu0 0
        %1672 = vperm.xlu0 %1671, %v1661
        %v1673 = vpop.permute.xlu0 %1672
        %1674 = vset.pattern.permute.xlu0 0
        %1675 = vperm.xlu0 %1674, %v1662
        %v1676 = vpop.permute.xlu0 %1675
        %1677 = vset.pattern.permute.xlu0 0
        %1678 = vperm.xlu0 %1677, %v1663
        %v1679 = vpop.permute.xlu0 %1678
        %1680 = vset.pattern.permute.xlu0 0
        %1681 = vperm.xlu0 %1680, %v1664
        %v1682 = vpop.permute.xlu0 %1681
        %1683 = vset.pattern.permute.xlu0 0
        %1684 = vperm.xlu0 %1683, %v1665
        %v1685 = vpop.permute.xlu0 %1684
        %1686 = vset.pattern.permute.xlu0 0
        %1687 = vperm.xlu0 %1686, %v1666
        %v1688 = vpop.permute.xlu0 %1687
        %1689 = vset.pattern.permute.xlu0 0
        %1690 = vperm.xlu0 %1689, %v1667
        %v1691 = vpop.permute.xlu0 %1690
        %v1692 = vlaneseq
        %v1693 = vshrl.u32 %v1692, 7
        %v1694 = vsub.s32 %v816, %v1693
        %v1695 = vrot.slane %v1670, %v1694
        %v1696 = vlaneseq
        %v1697 = vshrl.u32 %v1696, 7
        %v1698 = vsub.s32 %v816, %v1697
        %v1699 = vrot.slane %v1673, %v1698
        %v1700 = vlaneseq
        %v1701 = vshrl.u32 %v1700, 7
        %v1702 = vsub.s32 %v816, %v1701
        %v1703 = vrot.slane %v1676, %v1702
        %v1704 = vlaneseq
        %v1705 = vshrl.u32 %v1704, 7
        %v1706 = vsub.s32 %v816, %v1705
        %v1707 = vrot.slane %v1679, %v1706
        %v1708 = vlaneseq
        %v1709 = vshrl.u32 %v1708, 7
        %v1710 = vsub.s32 %v816, %v1709
        %v1711 = vrot.slane %v1682, %v1710
        %v1712 = vlaneseq
        %v1713 = vshrl.u32 %v1712, 7
        %v1714 = vsub.s32 %v816, %v1713
        %v1715 = vrot.slane %v1685, %v1714
        %v1716 = vlaneseq
        %v1717 = vshrl.u32 %v1716, 7
        %v1718 = vsub.s32 %v816, %v1717
        %v1719 = vrot.slane %v1688, %v1718
        %v1720 = vlaneseq
        %v1721 = vshrl.u32 %v1720, 7
        %v1722 = vsub.s32 %v816, %v1721
        %v1723 = vrot.slane %v1691, %v1722
        %v1724 = vsel %vm635, %v1699, %v1695
        %v1725 = vsel %vm637, %v1703, %v1724
        %v1726 = vsel %vm639, %v1707, %v1725
        %v1727 = vsel %vm641, %v1711, %v1726
        %v1728 = vsel %vm643, %v1715, %v1727
        %v1729 = vsel %vm645, %v1719, %v1728
        %v1730 = vsel %vm647, %v1723, %v1729
        %v1731 = vsel %vm996, %v1730, 2147483647
        %v1732 = vand.u32 %v1731, 65535
        %v1733 = vshra.s32 %v1731, 16
        %v1734 = vcvt.s32.f32 %v1732
        %v1735 = vcvt.s32.f32 %v1733
        %1736 = vmin.xlane.f32.xlu0 %v1735
        %v1737 = vpop.xlane.xlu0 %1736
        %vm1738 = vcmp.eq.f32.partialorder %v1735, %v1737
        %v1739 = vsel %vm1738, %v1734, inf
        %1740 = vmin.xlane.f32.xlu0 %v1739
        %v1741 = vpop.xlane.xlu0 %1740
        %v1742 = vcvt.f32.s32 %v1741
        %v1743 = vcvt.f32.s32 %v1737
        %v1744 = vshll.u32 %v1743, 16
        %v1745 = vadd.s32 %v1744, %v1742
        %vm1746 = vcmp.eq.s32.totalorder %v816, %v1745
        %v1747 = vsel %vm1746, 1, 0
        %v1748 = vcvt.s32.f32 %v1747
        %v1749 = vlaneseq
        %v1750 = vshrl.u32 %v1749, 7
        %v1751 = vsub.s32 0, %v1750
        %v1752 = vrot.slane %v1748, %v1751
        %1754 = vbcast.lane.b32.xlu0 %v1752, 256
        %v1755 = vpop.permute.xlu0 %1754
        %v1756 = vlaneseq
        %v1757 = vshrl.u32 %v1756, 7
        %v1758 = vsub.s32 1, %v1757
        %v1759 = vrot.slane %v1748, %v1758
        %1761 = vbcast.lane.b32.xlu0 %v1759, 256
        %v1762 = vpop.permute.xlu0 %1761
        %v1763 = vlaneseq
        %v1764 = vshrl.u32 %v1763, 7
        %v1765 = vsub.s32 2, %v1764
        %v1766 = vrot.slane %v1748, %v1765
        %1768 = vbcast.lane.b32.xlu0 %v1766, 256
        %v1769 = vpop.permute.xlu0 %1768
        %v1770 = vlaneseq
        %v1771 = vshrl.u32 %v1770, 7
        %v1772 = vsub.s32 3, %v1771
        %v1773 = vrot.slane %v1748, %v1772
        %1775 = vbcast.lane.b32.xlu0 %v1773, 256
        %v1776 = vpop.permute.xlu0 %1775
        %v1777 = vlaneseq
        %v1778 = vshrl.u32 %v1777, 7
        %v1779 = vsub.s32 4, %v1778
        %v1780 = vrot.slane %v1748, %v1779
        %1782 = vbcast.lane.b32.xlu0 %v1780, 256
        %v1783 = vpop.permute.xlu0 %1782
        %v1784 = vlaneseq
        %v1785 = vshrl.u32 %v1784, 7
        %v1786 = vsub.s32 5, %v1785
        %v1787 = vrot.slane %v1748, %v1786
        %1789 = vbcast.lane.b32.xlu0 %v1787, 256
        %v1790 = vpop.permute.xlu0 %1789
        %v1791 = vlaneseq
        %v1792 = vshrl.u32 %v1791, 7
        %v1793 = vsub.s32 6, %v1792
        %v1794 = vrot.slane %v1748, %v1793
        %1796 = vbcast.lane.b32.xlu0 %v1794, 256
        %v1797 = vpop.permute.xlu0 %1796
        %v1798 = vlaneseq
        %v1799 = vshrl.u32 %v1798, 7
        %v1800 = vsub.s32 7, %v1799
        %v1801 = vrot.slane %v1748, %v1800
        %1803 = vbcast.lane.b32.xlu0 %v1801, 256
        %v1804 = vpop.permute.xlu0 %1803
        %v1805 = vmul.f32 %v1755, %v416
        %v1806 = vmul.f32 %v1762, %v417
        %v1807 = vmul.f32 %v1769, %v418
        %v1808 = vmul.f32 %v1776, %v419
        %v1809 = vmul.f32 %v1783, %v420
        %v1810 = vmul.f32 %v1790, %v421
        %v1811 = vmul.f32 %v1797, %v422
        %v1812 = vmul.f32 %v1804, %v423
        %v1813 = vsel %vm469, %v1805, 0.0
        %v1814 = vrot.slane %v1813, 4
        %v1815 = vadd.f32 %v1813, %v1814
        %v1816 = vrot.slane %v1815, 2
        %v1817 = vadd.f32 %v1815, %v1816
        %v1818 = vrot.slane %v1817, 1
        %v1819 = vadd.f32 %v1817, %v1818
        %v1820 = vsel %vm469, %v1806, 0.0
        %v1821 = vrot.slane %v1820, 4
        %v1822 = vadd.f32 %v1820, %v1821
        %v1823 = vrot.slane %v1822, 2
        %v1824 = vadd.f32 %v1822, %v1823
        %v1825 = vrot.slane %v1824, 1
        %v1826 = vadd.f32 %v1824, %v1825
        %v1827 = vsel %vm469, %v1807, 0.0
        %v1828 = vrot.slane %v1827, 4
        %v1829 = vadd.f32 %v1827, %v1828
        %v1830 = vrot.slane %v1829, 2
        %v1831 = vadd.f32 %v1829, %v1830
        %v1832 = vrot.slane %v1831, 1
        %v1833 = vadd.f32 %v1831, %v1832
        %v1834 = vsel %vm469, %v1808, 0.0
        %v1835 = vrot.slane %v1834, 4
        %v1836 = vadd.f32 %v1834, %v1835
        %v1837 = vrot.slane %v1836, 2
        %v1838 = vadd.f32 %v1836, %v1837
        %v1839 = vrot.slane %v1838, 1
        %v1840 = vadd.f32 %v1838, %v1839
        %v1841 = vsel %vm469, %v1809, 0.0
        %v1842 = vrot.slane %v1841, 4
        %v1843 = vadd.f32 %v1841, %v1842
        %v1844 = vrot.slane %v1843, 2
        %v1845 = vadd.f32 %v1843, %v1844
        %v1846 = vrot.slane %v1845, 1
        %v1847 = vadd.f32 %v1845, %v1846
        %v1848 = vsel %vm469, %v1810, 0.0
        %v1849 = vrot.slane %v1848, 4
        %v1850 = vadd.f32 %v1848, %v1849
        %v1851 = vrot.slane %v1850, 2
        %v1852 = vadd.f32 %v1850, %v1851
        %v1853 = vrot.slane %v1852, 1
        %v1854 = vadd.f32 %v1852, %v1853
        %v1855 = vsel %vm469, %v1811, 0.0
        %v1856 = vrot.slane %v1855, 4
        %v1857 = vadd.f32 %v1855, %v1856
        %v1858 = vrot.slane %v1857, 2
        %v1859 = vadd.f32 %v1857, %v1858
        %v1860 = vrot.slane %v1859, 1
        %v1861 = vadd.f32 %v1859, %v1860
        %v1862 = vsel %vm469, %v1812, 0.0
        %v1863 = vrot.slane %v1862, 4
        %v1864 = vadd.f32 %v1862, %v1863
        %v1865 = vrot.slane %v1864, 2
        %v1866 = vadd.f32 %v1864, %v1865
        %v1867 = vrot.slane %v1866, 1
        %v1868 = vadd.f32 %v1866, %v1867
        %v1869 = vpack.c.bf16 %v1819, %v1819
        %v1870 = vpack.c.bf16 %v1826, %v1826
        %v1871 = vpack.c.bf16 %v1833, %v1833
        %v1872 = vpack.c.bf16 %v1840, %v1840
        %v1873 = vpack.c.bf16 %v1847, %v1847
        %v1874 = vpack.c.bf16 %v1854, %v1854
        %v1875 = vpack.c.bf16 %v1861, %v1861
        %v1876 = vpack.c.bf16 %v1868, %v1868
        %v1885 = vunpack.c.l.b16 %v1869
        %v1886 = vunpack.c.l.b16 %v1870
        %v1887 = vunpack.c.l.b16 %v1871
        %v1888 = vunpack.c.l.b16 %v1872
        %v1889 = vunpack.c.l.b16 %v1873
        %v1890 = vunpack.c.l.b16 %v1874
        %v1891 = vunpack.c.l.b16 %v1875
        %v1892 = vunpack.c.l.b16 %v1876
        %v1893 = vsel %vm635, %v1886, %v1885
        %v1894 = vsel %vm637, %v1887, %v1893
        %v1895 = vsel %vm639, %v1888, %v1894
        %v1896 = vsel %vm641, %v1889, %v1895
        %v1897 = vsel %vm643, %v1890, %v1896
        %v1898 = vsel %vm645, %v1891, %v1897
        %v1899 = vsel %vm647, %v1892, %v1898
        %v1900 = vpack.c.b16 %v1899, %v1899
        %v1902 = vsel %vm469, %v1900, 0
        %1904 = vmatprep.subr.bf16.mxu0 0
        %1905 = vmatpush1.bf16.msra.mxu0 %v1318
        %1906 = vmatprep.subr.bf16.mxu0 0
        %1907 = vmatpush1.bf16.msra.mxu0 %v1319
        %1908 = vmatprep.subr.bf16.mxu0 0
        %1909 = vmatpush1.bf16.msra.mxu0 %v1320
        %1910 = vmatprep.subr.bf16.mxu0 0
        %1911 = vmatpush1.bf16.msra.mxu0 %v1321
        %1912 = vmatprep.subr.bf16.mxu0 0
        %1913 = vmatpush1.bf16.msra.mxu0 0
        %1914 = vmatprep.subr.bf16.mxu0 0
        %1915 = vmatpush1.bf16.msra.mxu0 0
        %1916 = vmatprep.subr.bf16.mxu0 0
        %1917 = vmatpush1.bf16.msra.mxu0 0
        %1918 = vmatprep.subr.bf16.mxu0 0
        %1919 = vmatpush1.bf16.msra.mxu0 0
        %1920 = vmatprep.subr.bf16.mxu0 0
        %1921 = vmatpush1.bf16.msra.mxu0 0
        %1922 = vmatprep.subr.bf16.mxu0 0
        %1923 = vmatpush1.bf16.msra.mxu0 0
        %1924 = vmatprep.subr.bf16.mxu0 0
        %1925 = vmatpush1.bf16.msra.mxu0 0
        %1926 = vmatprep.subr.bf16.mxu0 0
        %1927 = vmatpush1.bf16.msra.mxu0 0
        %1928 = vmatprep.subr.bf16.mxu0 0
        %1929 = vmatpush1.bf16.msra.mxu0 0
        %1930 = vmatprep.subr.bf16.mxu0 0
        %1931 = vmatpush1.bf16.msra.mxu0 0
        %1932 = vmatprep.subr.bf16.mxu0 0
        %1933 = vmatpush1.bf16.msra.mxu0 0
        %1934 = vmatprep.subr.bf16.mxu0 0
        %1935 = vmatpush1.bf16.msra.mxu0 0
        %1936 = vmatprep.mubr.bf16.mxu0 0
        %1937 = vmatmul.mubr.bf16.gmra.mrb[0].mxu0 %v1902
        %v1938 = vpop.f32.mrb[0].mxu0
        %v1939 = vadd.f32 0.0, %v1938
        %v1940 = vpop.f32.mrb[0].mxu0
        %v1941 = vpop.f32.mrb[0].mxu0
        %v1942 = vpop.f32.mrb[0].mxu0
        %1943 = vdwg.mxu0
        %v1944 = vmul.f32 %v1939, 2.0
        %v1945 = vsub.f32 %v1374, %v1944
        %v1946 = vsel %vm996, %v1945, inf
        %1947 = vmin.xlane.f32.xlu0 %v1946
        %v1948 = vpop.xlane.xlu0 %1947
        %vm1949 = vcmp.le.f32.partialorder %v1945, %v1948
        %v1950 = vsel %vm1949, %v816, 8
        %v1951 = vsel %vm996, %v1950, 2147483647
        %v1952 = vand.u32 %v1951, 65535
        %v1953 = vshra.s32 %v1951, 16
        %v1954 = vcvt.s32.f32 %v1952
        %v1955 = vcvt.s32.f32 %v1953
        %1956 = vmin.xlane.f32.xlu0 %v1955
        %v1957 = vpop.xlane.xlu0 %1956
        %vm1958 = vcmp.eq.f32.partialorder %v1955, %v1957
        %v1959 = vsel %vm1958, %v1954, inf
        %1960 = vmin.xlane.f32.xlu0 %v1959
        %v1961 = vpop.xlane.xlu0 %1960
        %v1962 = vcvt.f32.s32 %v1961
        %v1963 = vcvt.f32.s32 %v1957
        %v1964 = vshll.u32 %v1963, 16
        %v1965 = vadd.s32 %v1964, %v1962
        %vm1966 = vcmask 1040384
        %v1967 = vsel %vm1966, %v1211, %v1819
        %v1968 = vsel %vm1966, %v1218, %v1826
        %v1969 = vsel %vm1966, %v1225, %v1833
        %v1970 = vsel %vm1966, %v1232, %v1840
        %v1971 = vsel %vm1966, %v1239, %v1847
        %v1972 = vsel %vm1966, %v1246, %v1854
        %v1973 = vsel %vm1966, %v1253, %v1861
        %v1974 = vsel %vm1966, %v1260, %v1868
        %vm1975 = vcmask 517120
        %1976 = vst.msk [vmem:[%s405] sm:$0x3] %vm1975, %v1967
        %1977 = vst.msk [vmem:[%s405 + $0x2] sm:$0x3] %vm1975, %v1968
        %1978 = vst.msk [vmem:[%s405 + $0x4] sm:$0x3] %vm1975, %v1969
        %1979 = vst.msk [vmem:[%s405 + $0x6] sm:$0x3] %vm1975, %v1970
        %1980 = vst.msk [vmem:[%s405 + $0x8] sm:$0x3] %vm1975, %v1971
        %1981 = vst.msk [vmem:[%s405 + $0xa] sm:$0x3] %vm1975, %v1972
        %1982 = vst.msk [vmem:[%s405 + $0xc] sm:$0x3] %vm1975, %v1973
        %1983 = vst.msk [vmem:[%s405 + $0xe] sm:$0x3] %vm1975, %v1974
        %vm1984 = vcmask 7168
        %v1985 = vsel %vm1984, %v1137, %v1745
        %vm1986 = vcmask 15360
        %1987 = vst.msk [vmem:[%s410] sm:$0xff] %vm1986, %v1985
        %v1988 = vsel %vm1984, %v1396, %v1965
        %1989 = vst.msk [vmem:[%s414] sm:$0xff] %vm1986, %v1988
        %s1990 = smul.u32 8, %s21
        %p1991 = scmp.lt.s32.totalorder %s1990, 15
        %s1992 = scalar_select %p1991, %s1990, 15
        %s1993 = smul.addr %s1992, 2
        %s1994 = scalar_lea.vmem %s7, %s1993
        %p1995 = scmp.lt.s32.totalorder %s21, 1
        %s1996 = scalar_select %p1995, %s21, 1
        %s1997 = smul.addr %s1996, 8
        %s1998 = scalar_lea.vmem %s8, %s1997
        %p1999 = scmp.lt.s32.totalorder %s21, 1
        %s2000 = scalar_select %p1999, %s21, 1
        %s2001 = smul.addr %s2000, 8
        %s2002 = scalar_lea.vmem %s9, %s2001
        // Predicated region
        $region87: #{epoch_encoder_forward.3} parent=81 // pred_check
          %p2003 = pneg %p196
        $region88: #{epoch_encoder_forward.3} parent=81 // pred_check_branch
          %2005 = sbr.rel (%p2003) target = $region90
        $region89: #{epoch_encoder_forward.3} parent=81 // pred_region
          %s2006 = smul.u32 8, %s21
        $region90: #{epoch_encoder_forward.3} parent=81 // pred_fallthru
          _
        // Predicated region
        $region91: #{epoch_encoder_forward.3} parent=81 // pred_check
          %p2007 = pneg %p222
        $region92: #{epoch_encoder_forward.3} parent=81 // pred_check_branch
          %2009 = sbr.rel (%p2007) target = $region94
        $region93: #{epoch_encoder_forward.3} parent=81 // pred_region
          _
        $region94: #{epoch_encoder_forward.3} parent=81 // pred_fallthru
          _
        // Predicated region
        $region95: #{epoch_encoder_forward.3} parent=81 // pred_check
          %p2010 = pneg %p248
        $region96: #{epoch_encoder_forward.3} parent=81 // pred_check_branch
          %2012 = sbr.rel (%p2010) target = $region98
        $region97: #{epoch_encoder_forward.3} parent=81 // pred_region
          _
        $region98: #{epoch_encoder_forward.3} parent=81 // pred_fallthru
          _
      $region82: #{epoch_encoder_forward.3} parent=5 // pred_fallthru
        _
      %p2013 = scmp.le.s32.totalorder 2, %s16
      // Predicated region
      $region99: #{epoch_encoder_forward.3} parent=5 // pred_check
        %p2014 = pneg %p2013
      $region100: #{epoch_encoder_forward.3} parent=5 // pred_check_branch
        %2016 = sbr.rel (%p2014) target = $region102
      $region101: #{epoch_encoder_forward.3} parent=5 // pred_region
        %s2017 = ssub.s32 %s16, 2
        // Predicated region
        $region103: #{epoch_encoder_forward.3} parent=101 // pred_check
          %p2018 = pneg %p202
        $region104: #{epoch_encoder_forward.3} parent=101 // pred_check_branch
          %2020 = sbr.rel (%p2018) target = $region106
        $region105: #{epoch_encoder_forward.3} parent=101 // pred_region
          %s2021 = smul.u32 8, %s22
          %p2022 = scmp.lt.s32.totalorder %s2021, 15
          %s2023 = scalar_select %p2022, %s2021, 15
          %s2024 = smul.addr %s2023, 2
          %s2025 = scalar_lea.vmem %s7, %s2024
        $region106: #{epoch_encoder_forward.3} parent=101 // pred_fallthru
          _
        // Predicated region
        $region107: #{epoch_encoder_forward.3} parent=101 // pred_check
          %p2026 = pneg %p228
        $region108: #{epoch_encoder_forward.3} parent=101 // pred_check_branch
          %2028 = sbr.rel (%p2026) target = $region110
        $region109: #{epoch_encoder_forward.3} parent=101 // pred_region
          %p2029 = scmp.lt.s32.totalorder %s22, 1
          %s2030 = scalar_select %p2029, %s22, 1
          %s2031 = smul.addr %s2030, 8
          %s2032 = scalar_lea.vmem %s8, %s2031
        $region110: #{epoch_encoder_forward.3} parent=101 // pred_fallthru
          _
        // Predicated region
        $region111: #{epoch_encoder_forward.3} parent=101 // pred_check
          %p2033 = pneg %p254
        $region112: #{epoch_encoder_forward.3} parent=101 // pred_check_branch
          %2035 = sbr.rel (%p2033) target = $region114
        $region113: #{epoch_encoder_forward.3} parent=101 // pred_region
          %p2036 = scmp.lt.s32.totalorder %s22, 1
          %s2037 = scalar_select %p2036, %s22, 1
          %s2038 = smul.addr %s2037, 8
          %s2039 = scalar_lea.vmem %s9, %s2038
        $region114: #{epoch_encoder_forward.3} parent=101 // pred_fallthru
          _
      $region102: #{epoch_encoder_forward.3} parent=5 // pred_fallthru
        _
    $region6: #{epoch_encoder_forward.3} parent=1 // loop_footer
      %s20 = sadd.s32 1, %s16
    $region7: #{epoch_encoder_forward.3} parent=1 // loop_footer_branch
      %15 = sbr.rel target = $region3
    $region8: #{epoch_encoder_forward.3} parent=1 // loop_exit
      _

</llo_original>
